<compile_context>
chip_gen: v7x
topology: tpu7x:2x2x1
jax: 0.10.0
libtpu: 0.0.40
codegen_flags: <defaults>
</compile_context>

<pallas_src>
import jax
import jax.numpy as jnp
from jax.experimental import pallas as pl
from jax.experimental.pallas import tpu as pltpu

B, C_IN, H, W = 2, 4, 16, 16
C_OUT, K, STRIDE, PAD = 8, 3, 1, 1
HW = H * W                  # 256
CIK = C_IN * K * K          # 36   (im2col contraction dim)
CIK1 = CIK + 1              # 37   (+1 ones-row for the folded conv bias)
FEAT = C_OUT * HW           # 2048 (flattened conv features, NCHW order)
FC_OUT = 1024


def _crop_resize_kernel(patches_ref, cw_ref, fw_ref, fb_ref, out_ref):
    # patches_ref: (B, CIK1, HW)      im2col patches (last row = ones, for conv bias)
    # cw_ref:      (C_OUT, CIK1)      conv weight flattened over (C_in, ky, kx) + bias col
    # fw_ref:      (FEAT, FC_OUT)     bf16 fc weight (rows in NCHW flatten order)
    # fb_ref:      (1, FC_OUT)        fc bias
    # out_ref:     (B, FC_OUT)
    cw = cw_ref[...]
    # Conv + ReLU per batch (B=2 unrolled; runs exactly once now that grid=(1,)).
    conv = jnp.stack(
        [
            jnp.maximum(
                jnp.dot(cw, patches_ref[b],
                        preferred_element_type=jnp.float32),   # (C_OUT, HW), bias folded
                0.0,
            )
            for b in range(B)
        ],
        axis=0,
    )                                                           # (B, C_OUT, HW)
    feat = conv.reshape(B, FEAT).astype(jnp.bfloat16)           # NCHW flatten: c*HW + hw

    # single M=B, K=FEAT, N=1024 contraction on the MXU (bf16 inputs, f32 accumulation)
    out = jnp.dot(feat, fw_ref[...],
                  preferred_element_type=jnp.float32) + fb_ref[...]   # (B, FC_OUT)
    out_ref[...] = out.astype(out_ref.dtype)


@jax.jit
def crop_resize_branch(x, conv_w, conv_b, fc_w_bf16, fc_b):
    # ---- glue (plain JAX): padding + im2col patch extraction + tiny parameter reshapes
    xpad = jnp.pad(x, ((0, 0), (0, 0), (PAD, PAD), (PAD, PAD)))
    cols = []
    for ci in range(C_IN):
        for ky in range(K):
            for kx in range(K):
                cols.append(xpad[:, ci, ky:ky + H, kx:kx + W].reshape(B, HW))
    cols.append(jnp.ones((B, HW), jnp.float32))            # ones row -> folds conv bias
    patches = jnp.stack(cols, axis=1)                       # (B, CIK1, HW), ~74 KiB

    cw_aug = jnp.concatenate(
        [conv_w.reshape(C_OUT, CIK).astype(jnp.float32),
         conv_b.reshape(C_OUT, 1).astype(jnp.float32)], axis=1)      # (C_OUT, CIK1)
    fb2d = fc_b.reshape(1, FC_OUT).astype(jnp.float32)

    out = pl.pallas_call(
        _crop_resize_kernel,
        out_shape=jax.ShapeDtypeStruct((B, FC_OUT), jnp.float32),
        grid_spec=pltpu.PrefetchScalarGridSpec(
            num_scalar_prefetch=0,
            grid=(1,),                                       # single step: one contiguous
            in_specs=[                                       # 4 MiB weight DMA, no recompute
                pl.BlockSpec((B, CIK1, HW), lambda i: (0, 0, 0)),
                pl.BlockSpec((C_OUT, CIK1), lambda i: (0, 0)),
                pl.BlockSpec((FEAT, FC_OUT), lambda i: (0, 0)),
                pl.BlockSpec((1, FC_OUT), lambda i: (0, 0)),
            ],
            out_specs=pl.BlockSpec((B, FC_OUT), lambda i: (0, 0)),
        ),
        compiler_params=pltpu.CompilerParams(
            dimension_semantics=("arbitrary",),              # size-1 grid axis
            vmem_limit_bytes=32 * 1024 * 1024,               # explicit (v5e default is 16 MiB)
        ),
    )(patches, cw_aug, fc_w_bf16, fb2d)
    return out                                               # (B, FC_OUT)


def _reference(x, conv_w, conv_b, fc_w, fc_b):
    y = jax.lax.conv_general_dilated(
        x, conv_w, window_strides=(STRIDE, STRIDE),
        padding=[(PAD, PAD), (PAD, PAD)],
        dimension_numbers=("NCHW", "OIHW", "NCHW"))
    y = jax.nn.relu(y + conv_b.reshape(1, C_OUT, 1, 1))
    flat = y.reshape(B, -1)
    return flat @ fc_w + fc_b


if __name__ == "__main__":
    key = jax.random.PRNGKey(0)
    kx, kcw, kcb, kfw, kfb = jax.random.split(key, 5)
    # deterministic synthetic parameters (shapes implied by the module __init__)
    x = jax.random.normal(kx, (B, C_IN, H, W), jnp.float32)
    conv_w = jax.random.normal(kcw, (C_OUT, C_IN, K, K), jnp.float32) * 0.1
    conv_b = jax.random.normal(kcb, (C_OUT,), jnp.float32) * 0.1
    fc_w = jax.random.normal(kfw, (FEAT, FC_OUT), jnp.float32) * 0.02   # = fc.weight.T
    fc_b = jax.random.normal(kfb, (FC_OUT,), jnp.float32) * 0.02

    # One-time parameter prep OUTSIDE the jitted hot path: halves the per-call HBM
    # weight stream (bf16) without paying an 8->4 MiB cast every forward.
    fc_w_bf16 = jax.block_until_ready(fc_w.astype(jnp.bfloat16))

    out = crop_resize_branch(x, conv_w, conv_b, fc_w_bf16, fc_b)
    jax.block_until_ready(out)

    ref = _reference(x, conv_w, conv_b, fc_w, fc_b)
    assert out.shape == (B, FC_OUT)
    # Tolerance reflects the bf16 weight/activation stream of the K=2048 FC contraction
    # (f32 accumulation); expected abs error is O(1e-3) here.
    if not jnp.allclose(out, ref, atol=2e-2, rtol=2e-2):
        raise AssertionError("Pallas kernel mismatch vs JAX reference")
    print("KERNEL_OK")
</pallas_src>

<mosaic_0001>
module attributes {stable_mosaic.version = 11 : i64} {
  func.func @_crop_resize_kernel(%arg0: i32, %arg1: memref<2x37x256xf32, #tpu.memory_space<vmem>>, %arg2: memref<8x37xf32, #tpu.memory_space<vmem>>, %arg3: memref<2048x1024xbf16, #tpu.memory_space<vmem>>, %arg4: memref<1x1024xf32, #tpu.memory_space<vmem>>, %arg5: memref<2x1024xf32, #tpu.memory_space<vmem>>) attributes {dimension_semantics = [#tpu.dimension_semantics<arbitrary>], iteration_bounds = array<i64: 1>, scalar_prefetch = 0 : i64, scratch_operands = 0 : i64, tpu.core_type = #tpu.core_type<tc>, window_params = [{pipeline_mode = #tpu.pipeline_mode<synchronous>, transform_indices = @transform_0, window_bounds = array<i64: 2, 37, 256>}, {pipeline_mode = #tpu.pipeline_mode<synchronous>, transform_indices = @transform_1, window_bounds = array<i64: 8, 37>}, {pipeline_mode = #tpu.pipeline_mode<synchronous>, transform_indices = @transform_2, window_bounds = array<i64: 2048, 1024>}, {pipeline_mode = #tpu.pipeline_mode<synchronous>, transform_indices = @transform_3, window_bounds = array<i64: 1, 1024>}, {pipeline_mode = #tpu.pipeline_mode<synchronous>, transform_indices = @transform_4, window_bounds = array<i64: 2, 1024>}]} {
    %c0 = arith.constant 0 : index
    %c0_0 = arith.constant 0 : index
    %0 = vector.load %arg2[%c0, %c0_0] : memref<8x37xf32, #tpu.memory_space<vmem>>, vector<8x37xf32>
    %c0_1 = arith.constant 0 : index
    %c0_2 = arith.constant 0 : index
    %c0_3 = arith.constant 0 : index
    %1 = vector.load %arg1[%c0_1, %c0_2, %c0_3] : memref<2x37x256xf32, #tpu.memory_space<vmem>>, vector<1x37x256xf32>
    %2 = vector.shape_cast %1 : vector<1x37x256xf32> to vector<37x256xf32>
    %cst = arith.constant dense<0.000000e+00> : vector<8x256xf32>
    %3 = tpu.matmul %0, %2, %cst {dimension_numbers = #tpu.dot_dimension_numbers<[1], [0], [0], [1], [0, 0, 1, 1], [], []>} : vector<8x37xf32>, vector<37x256xf32>, vector<8x256xf32> -> vector<8x256xf32>
    %cst_4 = arith.constant 0.000000e+00 : f32
    %4 = vector.broadcast %cst_4 : f32 to vector<8x256xf32>
    %5 = arith.maximumf %3, %4 : vector<8x256xf32>
    %c1 = arith.constant 1 : index
    %c0_5 = arith.constant 0 : index
    %c0_6 = arith.constant 0 : index
    %6 = vector.load %arg1[%c1, %c0_5, %c0_6] : memref<2x37x256xf32, #tpu.memory_space<vmem>>, vector<1x37x256xf32>
    %7 = vector.shape_cast %6 : vector<1x37x256xf32> to vector<37x256xf32>
    %cst_7 = arith.constant dense<0.000000e+00> : vector<8x256xf32>
    %8 = tpu.matmul %0, %7, %cst_7 {dimension_numbers = #tpu.dot_dimension_numbers<[1], [0], [0], [1], [0, 0, 1, 1], [], []>} : vector<8x37xf32>, vector<37x256xf32>, vector<8x256xf32> -> vector<8x256xf32>
    %cst_8 = arith.constant 0.000000e+00 : f32
    %9 = vector.broadcast %cst_8 : f32 to vector<8x256xf32>
    %10 = arith.maximumf %8, %9 : vector<8x256xf32>
    %11 = vector.shape_cast %5 : vector<8x256xf32> to vector<1x8x256xf32>
    %12 = vector.shape_cast %10 : vector<8x256xf32> to vector<1x8x256xf32>
    %13 = tpu.concatenate %11, %12 in 0 : vector<1x8x256xf32>, vector<1x8x256xf32> -> vector<2x8x256xf32>
    %14 = vector.shape_cast %13 : vector<2x8x256xf32> to vector<2x2048xf32>
    %15 = arith.truncf %14 : vector<2x2048xf32> to vector<2x2048xbf16>
    %c0_9 = arith.constant 0 : index
    %c0_10 = arith.constant 0 : index
    %16 = vector.load %arg3[%c0_9, %c0_10] : memref<2048x1024xbf16, #tpu.memory_space<vmem>>, vector<2048x1024xbf16>
    %cst_11 = arith.constant dense<0.000000e+00> : vector<2x1024xf32>
    %17 = tpu.matmul %15, %16, %cst_11 {dimension_numbers = #tpu.dot_dimension_numbers<[1], [0], [0], [1], [0, 0, 1, 1], [], []>} : vector<2x2048xbf16>, vector<2048x1024xbf16>, vector<2x1024xf32> -> vector<2x1024xf32>
    %c0_12 = arith.constant 0 : index
    %c0_13 = arith.constant 0 : index
    %18 = vector.load %arg4[%c0_12, %c0_13] : memref<1x1024xf32, #tpu.memory_space<vmem>>, vector<1x1024xf32>
    %19 = vector.broadcast %18 : vector<1x1024xf32> to vector<2x1024xf32>
    %20 = arith.addf %17, %19 : vector<2x1024xf32>
    %c0_14 = arith.constant 0 : index
    %c0_15 = arith.constant 0 : index
    %21 = vector.load %arg5[%c0_14, %c0_15] : memref<2x1024xf32, #tpu.memory_space<vmem>>, vector<2x1024xf32>
    tpu.vector_store %arg5[%c0_14, %c0_15], %20 {strides = array<i32>} : memref<2x1024xf32, #tpu.memory_space<vmem>>, vector<2x1024xf32>,
    return
  }
  func.func @transform_0(%arg0: i32) -> (i32, i32, i32) {
    %c0_i32 = arith.constant 0 : i32
    %c0_i32_0 = arith.constant 0 : i32
    %c0_i32_1 = arith.constant 0 : i32
    %c0_i32_2 = arith.constant 0 : i32
    return %c0_i32, %c0_i32_0, %c0_i32_1 : i32, i32, i32
  }
  func.func @transform_1(%arg0: i32) -> (i32, i32) {
    %c0_i32 = arith.constant 0 : i32
    %c0_i32_0 = arith.constant 0 : i32
    %c0_i32_1 = arith.constant 0 : i32
    return %c0_i32, %c0_i32_0 : i32, i32
  }
  func.func @transform_2(%arg0: i32) -> (i32, i32) {
    %c0_i32 = arith.constant 0 : i32
    %c0_i32_0 = arith.constant 0 : i32
    %c0_i32_1 = arith.constant 0 : i32
    return %c0_i32, %c0_i32_0 : i32, i32
  }
  func.func @transform_3(%arg0: i32) -> (i32, i32) {
    %c0_i32 = arith.constant 0 : i32
    %c0_i32_0 = arith.constant 0 : i32
    %c0_i32_1 = arith.constant 0 : i32
    return %c0_i32, %c0_i32_0 : i32, i32
  }
  func.func @transform_4(%arg0: i32) -> (i32, i32) {
    %c0_i32 = arith.constant 0 : i32
    %c0_i32_0 = arith.constant 0 : i32
    %c0_i32_1 = arith.constant 0 : i32
    return %c0_i32, %c0_i32_0 : i32, i32
  }
}

</mosaic_0001>

<llo_original>
// kernel: squeeze.37
$region0: #{squeeze.37}
  %s0 = inlined_call_operand.vmem [shape: f32[2,1,16,16], index: 0, kind: input, shape index: {}]
  %s1 = inlined_call_operand.vmem [shape: f32[2,1,256], index: 1, kind: output, shape index: {}]
  $region1: #{squeeze.37} parent=0
    #allocation0 [shape = 'u8[16384]{0}', space=vmem, size = 0x4000, scoped, tag = 'scoped mem for output reshape']
    %v2 = vld [vmem:[%s0] ss:$8 sm:$0xf]
    %vm3 = vcmask 130048
    %4 = vst.msk [vmem:[#allocation0] ss:$8 sm:$0xf] %vm3, %v2
    %s5 = scalar_lea.vmem %s0, 7
    %v6 = vld [vmem:[%s5] ss:$8 sm:$0xf]
    %7 = vrot.lane.b32.xlu0 %v6, 112
    %v8 = vpop.permute.xlu0 %7
    %vm9 = vcmask 1048448
    %10 = vst.msk [vmem:[#allocation0] ss:$8 sm:$0xf] %vm9, %v8
    %s11 = scalar_lea.vmem %s0, 6
    %v12 = vld [vmem:[%s11] ss:$8 sm:$0xf]
    %13 = vrot.lane.b32.xlu0 %v12, 96
    %v14 = vpop.permute.xlu0 %13
    %vm15 = vcmask 917248
    %16 = vst.msk [vmem:[#allocation0] ss:$8 sm:$0xf] %vm15, %v14
    %s17 = scalar_lea.vmem %s0, 5
    %v18 = vld [vmem:[%s17] ss:$8 sm:$0xf]
    %19 = vrot.lane.b32.xlu0 %v18, 80
    %v20 = vpop.permute.xlu0 %19
    %vm21 = vcmask 786048
    %22 = vst.msk [vmem:[#allocation0] ss:$8 sm:$0xf] %vm21, %v20
    %s23 = scalar_lea.vmem %s0, 4
    %v24 = vld [vmem:[%s23] ss:$8 sm:$0xf]
    %25 = vrot.lane.b32.xlu0 %v24, 64
    %v26 = vpop.permute.xlu0 %25
    %vm27 = vcmask 654848
    %28 = vst.msk [vmem:[#allocation0] ss:$8 sm:$0xf] %vm27, %v26
    %s29 = scalar_lea.vmem %s0, 3
    %v30 = vld [vmem:[%s29] ss:$8 sm:$0xf]
    %31 = vrot.lane.b32.xlu0 %v30, 48
    %v32 = vpop.permute.xlu0 %31
    %vm33 = vcmask 523648
    %34 = vst.msk [vmem:[#allocation0] ss:$8 sm:$0xf] %vm33, %v32
    %s35 = scalar_lea.vmem %s0, 2
    %v36 = vld [vmem:[%s35] ss:$8 sm:$0xf]
    %37 = vrot.lane.b32.xlu0 %v36, 32
    %v38 = vpop.permute.xlu0 %37
    %vm39 = vcmask 392448
    %40 = vst.msk [vmem:[#allocation0] ss:$8 sm:$0xf] %vm39, %v38
    %s41 = scalar_lea.vmem %s0, 1
    %v42 = vld [vmem:[%s41] ss:$8 sm:$0xf]
    %43 = vrot.lane.b32.xlu0 %v42, 16
    %v44 = vpop.permute.xlu0 %43
    %vm45 = vcmask 261248
    %46 = vst.msk [vmem:[#allocation0] ss:$8 sm:$0xf] %vm45, %v44
    %s48 = sshllo.u32 0, 1
    %v50 = vld [vmem:[#allocation0] sm:%s48]
    %s51 = sshllo.u32 0, 1
    %52 = vst [vmem:[%s1] sm:%s51] %v50
    %s53 = scalar_lea.vmem [#allocation0], 8
    %v54 = vld [vmem:[%s53] sm:%s48]
    %s55 = sshllo.u32 0, 1
    %s56 = scalar_lea.vmem %s1, 1
    %57 = vst [vmem:[%s56] sm:%s55] %v54
    %s58 = scalar_lea.vmem [#allocation0], 16
    %v59 = vld [vmem:[%s58] sm:%s48]
    %s60 = sshllo.u32 0, 1
    %s61 = smul.addr 1, 2
    %s62 = scalar_lea.vmem %s1, %s61
    %63 = vst [vmem:[%s62] sm:%s60] %v59
    %s64 = scalar_lea.vmem [#allocation0], 24
    %v65 = vld [vmem:[%s64] sm:%s48]
    %s66 = sshllo.u32 0, 1
    %s67 = smul.addr 1, 3
    %s68 = scalar_lea.vmem %s1, %s67
    %69 = vst [vmem:[%s68] sm:%s66] %v65

// kernel: crop_resize_branch.1
$region0: #{crop_resize_branch.1}
  #allocation0 [shape = 'u32[]', space=smem, size = 0x4, offset = 0x4, fixed_abs, tag = 'smem constant byte address 0x4 - core index']
  #allocation1 [shape = 'u32[144,128]{1,0:T(1,128)}', space=vmem, size = 0x12000, scoped, tag = 'internal scratch']
  %s0 = inlined_call_operand.vmem [shape: f32[2,37,256], index: 0, kind: input, shape index: {}]
  %s1 = inlined_call_operand.vmem [shape: f32[8,37], index: 1, kind: input, shape index: {}]
  %s2 = inlined_call_operand.hbm [shape: bf16[2048,1024], index: 2, kind: input, shape index: {}]
  %s3 = inlined_call_operand.hbm [shape: f32[1,1024], index: 3, kind: input, shape index: {}]
  %s4 = inlined_call_operand.hbm [shape: f32[2,1024], index: 4, kind: output, shape index: {}]
  %s5 = sld [smem:[#allocation0]]
  $region34: #{crop_resize_branch.1} parent=0
    _
  %s7 = ssub.s32 1, %s5
  %s8 = scalar_select 0, %s7, %s5
  $region1: #{crop_resize_branch.1} parent=0
    #allocation2 [shape = 'u8[4194304]{0}', space=vmem, size = 0x400000, scoped, tag = 'input window, operand 2, single buffered']
    #allocation3 [shape = 's32[1]{0}', space=sflag, size = 0x4, scoped, tag = 'scoped memory for crop_resize_branch.1']
    #allocation4 [shape = 's32[1]{0}', space=sflag, size = 0x4, scoped, tag = 'scoped memory for crop_resize_branch.1']
    #allocation5 [shape = 'u8[4096]{0}', space=vmem, size = 0x1000, scoped, tag = 'input window, operand 3, single buffered']
    #allocation6 [shape = 's32[1]{0}', space=sflag, size = 0x4, scoped, tag = 'scoped memory for crop_resize_branch.1']
    #allocation7 [shape = 'u8[8192]{0}', space=vmem, size = 0x2000, scoped, tag = 'output window, operand 0, single buffered']
    %9 = vsyncpa [#allocation3], 0
    %10 = vsyncpa [#allocation6], 0
    %11 = vsyncpa [#allocation4], 0
    // Predicated region
    $region2: #{crop_resize_branch.1} parent=1 // pred_check
      _
    $region3: #{crop_resize_branch.1} parent=1 // pred_check_branch
      %13 = sbr.rel (0) target = $region5
    $region4: #{crop_resize_branch.1} parent=1 // pred_region
      _
    $region5: #{crop_resize_branch.1} parent=1 // pred_fallthru
      _
    // Predicated region
    $region6: #{crop_resize_branch.1} parent=1 // pred_check
      _
    $region7: #{crop_resize_branch.1} parent=1 // pred_check_branch
      %15 = sbr.rel (0) target = $region9
    $region8: #{crop_resize_branch.1} parent=1 // pred_region
      _
    $region9: #{crop_resize_branch.1} parent=1 // pred_fallthru
      _
    // Predicated region
    $region10: #{crop_resize_branch.1} parent=1 // pred_check
      _
    $region11: #{crop_resize_branch.1} parent=1 // pred_check_branch
      %17 = sbr.rel (0) target = $region13
    $region12: #{crop_resize_branch.1} parent=1 // pred_region
      %s19 = ssub.s32 131072, 131072
      %20 = vsyncadd [#allocation3], %s19
      %s21 = sshll.u32 [#allocation2], 4
      %s22 = int_to_ptr.vmem [resolvable:$true] %s21
      %27 = dma.hbm_to_vmem [thread:$0]  %s2, 131072, %s22, [#allocation3], 512, 512, 32
    $region13: #{crop_resize_branch.1} parent=1 // pred_fallthru
      _
    // Predicated region
    $region14: #{crop_resize_branch.1} parent=1 // pred_check
      _
    $region15: #{crop_resize_branch.1} parent=1 // pred_check_branch
      %29 = sbr.rel (0) target = $region17
    $region16: #{crop_resize_branch.1} parent=1 // pred_region
      %s31 = ssub.s32 128, 128
      %32 = vsyncadd [#allocation6], %s31
      %s34 = sshll.u32 [#allocation5], 4
      %s35 = int_to_ptr.vmem [resolvable:$true] %s34
      %37 = dma.hbm_to_vmem [thread:$0]  %s3, 128, %s35, [#allocation6]
    $region17: #{crop_resize_branch.1} parent=1 // pred_fallthru
      _
    // Predicated region
    $region18: #{crop_resize_branch.1} parent=1 // pred_check
      _
    $region19: #{crop_resize_branch.1} parent=1 // pred_check_branch
      %39 = sbr.rel (0) target = $region21
    $region20: #{crop_resize_branch.1} parent=1 // pred_region
      %40 = dma.done [#allocation3], 131072
    $region21: #{crop_resize_branch.1} parent=1 // pred_fallthru
      _
    // Predicated region
    $region22: #{crop_resize_branch.1} parent=1 // pred_check
      _
    $region23: #{crop_resize_branch.1} parent=1 // pred_check_branch
      %42 = sbr.rel (0) target = $region25
    $region24: #{crop_resize_branch.1} parent=1 // pred_region
      %43 = dma.done [#allocation6], 128
    $region25: #{crop_resize_branch.1} parent=1 // pred_fallthru
      _
    %v44 = vld [vmem:[%s1] sm:$0xff]
    %v45 = vld [vmem:[%s0] sm:$0xff]
    %v46 = vld [vmem:[%s0 + $0x8] sm:$0xff]
    %v47 = vld [vmem:[%s0 + $0x10] sm:$0xff]
    %v48 = vld [vmem:[%s0 + $0x18] sm:$0xff]
    %v49 = vld [vmem:[%s0 + $0x20] sm:$0xff]
    %v50 = vld [vmem:[%s0 + $0x28] sm:$0xff]
    %v51 = vld [vmem:[%s0 + $0x30] sm:$0xff]
    %v52 = vld [vmem:[%s0 + $0x38] sm:$0xff]
    %v53 = vld [vmem:[%s0 + $0x40] sm:$0x1f]
    %v54 = vld [vmem:[%s0 + $0x48] sm:$0x1f]
    %vm55 = vcmask 302080
    %v57 = vsel %vm55, %v44, 0
    %vm59 = vcmask 1044480
    %v61 = vsel %vm59, %v53, 0
    %v64 = vsel %vm59, %v54, 0
    %66 = vmatprep.subr.mxu0 %v46
    %67 = vmatpush1.msra.mxu0 %v45
    %68 = vmatprep.subr.mxu0 %v48
    %69 = vmatpush1.msra.mxu0 %v47
    %70 = vmatprep.subr.mxu0 %v50
    %71 = vmatpush1.msra.mxu0 %v49
    %72 = vmatprep.subr.mxu0 %v52
    %73 = vmatpush1.msra.mxu0 %v51
    %74 = vmatprep.subr.mxu0 %v64
    %75 = vmatpush1.msra.mxu0 %v61
    %76 = vmatprep.subr.mxu0 0.0
    %77 = vmatpush1.msra.mxu0 0.0
    %78 = vmatprep.subr.mxu0 0.0
    %79 = vmatpush1.msra.mxu0 0.0
    %80 = vmatprep.subr.mxu0 0.0
    %81 = vmatpush1.msra.mxu0 0.0
    %82 = vmatprep.subr.mxu0 0.0
    %83 = vmatpush1.msra.mxu0 0.0
    %84 = vmatprep.subr.mxu0 0.0
    %85 = vmatpush1.msra.mxu0 0.0
    %86 = vmatprep.subr.mxu0 0.0
    %87 = vmatpush1.msra.mxu0 0.0
    %88 = vmatprep.subr.mxu0 0.0
    %89 = vmatpush1.msra.mxu0 0.0
    %90 = vmatprep.subr.mxu0 0.0
    %91 = vmatpush1.msra.mxu0 0.0
    %92 = vmatprep.subr.mxu0 0.0
    %93 = vmatpush1.msra.mxu0 0.0
    %94 = vmatprep.subr.mxu0 0.0
    %95 = vmatpush1.msra.mxu0 0.0
    %96 = vmatprep.subr.mxu0 0.0
    %97 = vmatpush1.msra.mxu0 0.0
    %98 = vmatprep.subr.mxu0 0.0
    %99 = vmatpush1.msra.mxu0 0.0
    %100 = vmatprep.subr.mxu0 0.0
    %101 = vmatpush1.msra.mxu0 0.0
    %102 = vmatprep.subr.mxu0 0.0
    %103 = vmatpush1.msra.mxu0 0.0
    %104 = vmatprep.subr.mxu0 0.0
    %105 = vmatpush1.msra.mxu0 0.0
    %106 = vmatprep.subr.mxu0 0.0
    %107 = vmatpush1.msra.mxu0 0.0
    %108 = vmatprep.subr.mxu0 0.0
    %109 = vmatpush1.msra.mxu0 0.0
    %110 = vmatprep.subr.mxu0 0.0
    %111 = vmatpush1.msra.mxu0 0.0
    %112 = vmatprep.subr.mxu0 0.0
    %113 = vmatpush1.msra.mxu0 0.0
    %114 = vmatprep.subr.mxu0 0.0
    %115 = vmatpush1.msra.mxu0 0.0
    %116 = vmatprep.subr.mxu0 0.0
    %117 = vmatpush1.msra.mxu0 0.0
    %118 = vmatprep.subr.mxu0 0.0
    %119 = vmatpush1.msra.mxu0 0.0
    %120 = vmatprep.subr.mxu0 0.0
    %121 = vmatpush1.msra.mxu0 0.0
    %122 = vmatprep.subr.mxu0 0.0
    %123 = vmatpush1.msra.mxu0 0.0
    %124 = vmatprep.subr.mxu0 0.0
    %125 = vmatpush1.msra.mxu0 0.0
    %126 = vmatprep.subr.mxu0 0.0
    %127 = vmatpush1.msra.mxu0 0.0
    %128 = vmatprep.subr.mxu0 0.0
    %129 = vmatpush1.msra.mxu0 0.0
    %130 = vmatprep.mubr.f32.mxu0 0.0
    %131 = vmatmul.mubr.f32.gmra.mrb[0].mxu0 %v57
    %v132 = vpop.f32.mrb[0].mxu0
    %v133 = vadd.f32 0.0, %v132
    %v134 = vpop.f32.mrb[0].mxu0
    %v135 = vadd.f32 0.0, %v134
    %136 = vdwg.mxu0
    %v137 = vmax.f32 %v133, 0.0
    %v138 = vmax.f32 %v135, 0.0
    %s139 = scalar_lea.vmem %s0, 80
    %v140 = vld [vmem:[%s139] sm:$0xff]
    %v141 = vld [vmem:[%s139 + $0x8] sm:$0xff]
    %v142 = vld [vmem:[%s139 + $0x10] sm:$0xff]
    %v143 = vld [vmem:[%s139 + $0x18] sm:$0xff]
    %v144 = vld [vmem:[%s139 + $0x20] sm:$0xff]
    %v145 = vld [vmem:[%s139 + $0x28] sm:$0xff]
    %v146 = vld [vmem:[%s139 + $0x30] sm:$0xff]
    %v147 = vld [vmem:[%s139 + $0x38] sm:$0xff]
    %v148 = vld [vmem:[%s139 + $0x40] sm:$0x1f]
    %v149 = vld [vmem:[%s139 + $0x48] sm:$0x1f]
    %v151 = vsel %vm59, %v148, 0
    %v154 = vsel %vm59, %v149, 0
    %156 = vmatprep.subr.mxu0 %v141
    %157 = vmatpush1.msra.mxu0 %v140
    %158 = vmatprep.subr.mxu0 %v143
    %159 = vmatpush1.msra.mxu0 %v142
    %160 = vmatprep.subr.mxu0 %v145
    %161 = vmatpush1.msra.mxu0 %v144
    %162 = vmatprep.subr.mxu0 %v147
    %163 = vmatpush1.msra.mxu0 %v146
    %164 = vmatprep.subr.mxu0 %v154
    %165 = vmatpush1.msra.mxu0 %v151
    %166 = vmatprep.subr.mxu0 0.0
    %167 = vmatpush1.msra.mxu0 0.0
    %168 = vmatprep.subr.mxu0 0.0
    %169 = vmatpush1.msra.mxu0 0.0
    %170 = vmatprep.subr.mxu0 0.0
    %171 = vmatpush1.msra.mxu0 0.0
    %172 = vmatprep.subr.mxu0 0.0
    %173 = vmatpush1.msra.mxu0 0.0
    %174 = vmatprep.subr.mxu0 0.0
    %175 = vmatpush1.msra.mxu0 0.0
    %176 = vmatprep.subr.mxu0 0.0
    %177 = vmatpush1.msra.mxu0 0.0
    %178 = vmatprep.subr.mxu0 0.0
    %179 = vmatpush1.msra.mxu0 0.0
    %180 = vmatprep.subr.mxu0 0.0
    %181 = vmatpush1.msra.mxu0 0.0
    %182 = vmatprep.subr.mxu0 0.0
    %183 = vmatpush1.msra.mxu0 0.0
    %184 = vmatprep.subr.mxu0 0.0
    %185 = vmatpush1.msra.mxu0 0.0
    %186 = vmatprep.subr.mxu0 0.0
    %187 = vmatpush1.msra.mxu0 0.0
    %188 = vmatprep.subr.mxu0 0.0
    %189 = vmatpush1.msra.mxu0 0.0
    %190 = vmatprep.subr.mxu0 0.0
    %191 = vmatpush1.msra.mxu0 0.0
    %192 = vmatprep.subr.mxu0 0.0
    %193 = vmatpush1.msra.mxu0 0.0
    %194 = vmatprep.subr.mxu0 0.0
    %195 = vmatpush1.msra.mxu0 0.0
    %196 = vmatprep.subr.mxu0 0.0
    %197 = vmatpush1.msra.mxu0 0.0
    %198 = vmatprep.subr.mxu0 0.0
    %199 = vmatpush1.msra.mxu0 0.0
    %200 = vmatprep.subr.mxu0 0.0
    %201 = vmatpush1.msra.mxu0 0.0
    %202 = vmatprep.subr.mxu0 0.0
    %203 = vmatpush1.msra.mxu0 0.0
    %204 = vmatprep.subr.mxu0 0.0
    %205 = vmatpush1.msra.mxu0 0.0
    %206 = vmatprep.subr.mxu0 0.0
    %207 = vmatpush1.msra.mxu0 0.0
    %208 = vmatprep.subr.mxu0 0.0
    %209 = vmatpush1.msra.mxu0 0.0
    %210 = vmatprep.subr.mxu0 0.0
    %211 = vmatpush1.msra.mxu0 0.0
    %212 = vmatprep.subr.mxu0 0.0
    %213 = vmatpush1.msra.mxu0 0.0
    %214 = vmatprep.subr.mxu0 0.0
    %215 = vmatpush1.msra.mxu0 0.0
    %216 = vmatprep.subr.mxu0 0.0
    %217 = vmatpush1.msra.mxu0 0.0
    %218 = vmatprep.subr.mxu0 0.0
    %219 = vmatpush1.msra.mxu0 0.0
    %220 = vmatprep.mubr.f32.mxu0 0.0
    %221 = vmatmul.mubr.f32.gmra.mrb[0].mxu0 %v57
    %v222 = vpop.f32.mrb[0].mxu0
    %v223 = vadd.f32 0.0, %v222
    %v224 = vpop.f32.mrb[0].mxu0
    %v225 = vadd.f32 0.0, %v224
    %226 = vdwg.mxu0
    %v227 = vmax.f32 %v223, 0.0
    %v228 = vmax.f32 %v225, 0.0
    %v229 = vcombine.high %v137, 0.0
    %v231 = vunpack.c.l.s4 1983009808
    %v232 = vunpack.c.0.s8 %v231
    %v233 = vlaneseq
    %v234 = vshrl.u32 %v233, 7
    %v235 = vsub.s32 %v232, %v234
    %v236 = vrot.slane %v137, %v235
    %v238 = vunpack.c.l.s4 1983009808
    %v239 = vunpack.c.0.s8 %v238
    %v240 = vlaneseq
    %v241 = vshrl.u32 %v240, 7
    %v242 = vsub.s32 %v239, %v241
    %v243 = vrot.slane %v229, %v242
    %v244 = vcombine.high %v227, 0.0
    %v246 = vunpack.c.l.s4 1983009808
    %v247 = vunpack.c.0.s8 %v246
    %v248 = vlaneseq
    %v249 = vshrl.u32 %v248, 7
    %v250 = vsub.s32 %v247, %v249
    %v251 = vrot.slane %v227, %v250
    %v253 = vunpack.c.l.s4 1983009808
    %v254 = vunpack.c.0.s8 %v253
    %v255 = vlaneseq
    %v256 = vshrl.u32 %v255, 7
    %v257 = vsub.s32 %v254, %v256
    %v258 = vrot.slane %v244, %v257
    %v259 = vcombine.low %v236, %v251
    %v260 = vcombine.high %v236, %v251
    %v262 = vunpack.c.l.s4 1934713408
    %v263 = vunpack.c.0.s8 %v262
    %v264 = vlaneseq
    %v265 = vshrl.u32 %v264, 7
    %v266 = vsub.s32 %v263, %v265
    %v267 = vrot.slane %v259, %v266
    %v269 = vunpack.c.l.s4 1934713408
    %v270 = vunpack.c.0.s8 %v269
    %v271 = vlaneseq
    %v272 = vshrl.u32 %v271, 7
    %v273 = vsub.s32 %v270, %v272
    %v274 = vrot.slane %v260, %v273
    %v275 = vcombine.low %v243, %v258
    %v276 = vcombine.high %v243, %v258
    %v278 = vunpack.c.l.s4 1934713408
    %v279 = vunpack.c.0.s8 %v278
    %v280 = vlaneseq
    %v281 = vshrl.u32 %v280, 7
    %v282 = vsub.s32 %v279, %v281
    %v283 = vrot.slane %v275, %v282
    %v285 = vunpack.c.l.s4 1934713408
    %v286 = vunpack.c.0.s8 %v285
    %v287 = vlaneseq
    %v288 = vshrl.u32 %v287, 7
    %v289 = vsub.s32 %v286, %v288
    %v290 = vrot.slane %v276, %v289
    %v291 = vcombine.high %v267, 0.0
    %v292 = vcombine.high %v274, 0.0
    %v293 = vcombine.high %v283, 0.0
    %v294 = vcombine.high %v290, 0.0
    %v295 = vcombine.high %v138, 0.0
    %v297 = vunpack.c.l.s4 1983009808
    %v298 = vunpack.c.0.s8 %v297
    %v299 = vlaneseq
    %v300 = vshrl.u32 %v299, 7
    %v301 = vsub.s32 %v298, %v300
    %v302 = vrot.slane %v138, %v301
    %v304 = vunpack.c.l.s4 1983009808
    %v305 = vunpack.c.0.s8 %v304
    %v306 = vlaneseq
    %v307 = vshrl.u32 %v306, 7
    %v308 = vsub.s32 %v305, %v307
    %v309 = vrot.slane %v295, %v308
    %v310 = vcombine.high %v228, 0.0
    %v312 = vunpack.c.l.s4 1983009808
    %v313 = vunpack.c.0.s8 %v312
    %v314 = vlaneseq
    %v315 = vshrl.u32 %v314, 7
    %v316 = vsub.s32 %v313, %v315
    %v317 = vrot.slane %v228, %v316
    %v319 = vunpack.c.l.s4 1983009808
    %v320 = vunpack.c.0.s8 %v319
    %v321 = vlaneseq
    %v322 = vshrl.u32 %v321, 7
    %v323 = vsub.s32 %v320, %v322
    %v324 = vrot.slane %v310, %v323
    %v325 = vcombine.low %v302, %v317
    %v326 = vcombine.high %v302, %v317
    %v328 = vunpack.c.l.s4 1934713408
    %v329 = vunpack.c.0.s8 %v328
    %v330 = vlaneseq
    %v331 = vshrl.u32 %v330, 7
    %v332 = vsub.s32 %v329, %v331
    %v333 = vrot.slane %v325, %v332
    %v335 = vunpack.c.l.s4 1934713408
    %v336 = vunpack.c.0.s8 %v335
    %v337 = vlaneseq
    %v338 = vshrl.u32 %v337, 7
    %v339 = vsub.s32 %v336, %v338
    %v340 = vrot.slane %v326, %v339
    %v341 = vcombine.low %v309, %v324
    %v342 = vcombine.high %v309, %v324
    %v344 = vunpack.c.l.s4 1934713408
    %v345 = vunpack.c.0.s8 %v344
    %v346 = vlaneseq
    %v347 = vshrl.u32 %v346, 7
    %v348 = vsub.s32 %v345, %v347
    %v349 = vrot.slane %v341, %v348
    %v351 = vunpack.c.l.s4 1934713408
    %v352 = vunpack.c.0.s8 %v351
    %v353 = vlaneseq
    %v354 = vshrl.u32 %v353, 7
    %v355 = vsub.s32 %v352, %v354
    %v356 = vrot.slane %v342, %v355
    %v357 = vcombine.high %v333, 0.0
    %v358 = vcombine.high %v340, 0.0
    %v359 = vcombine.high %v349, 0.0
    %v360 = vcombine.high %v356, 0.0
    %v361 = vpack.c.bf16 %v267, %v267
    %v362 = vpack.c.bf16 %v333, %v333
    %v363 = vpack.c.bf16 %v291, %v291
    %v364 = vpack.c.bf16 %v357, %v357
    %v365 = vpack.c.bf16 %v274, %v274
    %v366 = vpack.c.bf16 %v340, %v340
    %v367 = vpack.c.bf16 %v292, %v292
    %v368 = vpack.c.bf16 %v358, %v358
    %v369 = vpack.c.bf16 %v283, %v283
    %v370 = vpack.c.bf16 %v349, %v349
    %v371 = vpack.c.bf16 %v293, %v293
    %v372 = vpack.c.bf16 %v359, %v359
    %v373 = vpack.c.bf16 %v290, %v290
    %v374 = vpack.c.bf16 %v356, %v356
    %v375 = vpack.c.bf16 %v294, %v294
    %v376 = vpack.c.bf16 %v360, %v360
    %v377 = vld [vmem:[#allocation2] sm:$0xff]
    %v378 = vld [vmem:[#allocation2 + $0x8] sm:$0xff]
    %v379 = vld [vmem:[#allocation2 + $0x10] sm:$0xff]
    %v380 = vld [vmem:[#allocation2 + $0x18] sm:$0xff]
    %v381 = vld [vmem:[#allocation2 + $0x20] sm:$0xff]
    %v382 = vld [vmem:[#allocation2 + $0x28] sm:$0xff]
    %v383 = vld [vmem:[#allocation2 + $0x30] sm:$0xff]
    %v384 = vld [vmem:[#allocation2 + $0x38] sm:$0xff]
    %v385 = vld [vmem:[#allocation2 + $0x40] sm:$0xff]
    %v386 = vld [vmem:[#allocation2 + $0x48] sm:$0xff]
    %v387 = vld [vmem:[#allocation2 + $0x50] sm:$0xff]
    %v388 = vld [vmem:[#allocation2 + $0x58] sm:$0xff]
    %v389 = vld [vmem:[#allocation2 + $0x60] sm:$0xff]
    %v390 = vld [vmem:[#allocation2 + $0x68] sm:$0xff]
    %v391 = vld [vmem:[#allocation2 + $0x70] sm:$0xff]
    %v392 = vld [vmem:[#allocation2 + $0x78] sm:$0xff]
    %v393 = vld [vmem:[#allocation2 + $0x80] sm:$0xff]
    %v394 = vld [vmem:[#allocation2 + $0x88] sm:$0xff]
    %v395 = vld [vmem:[#allocation2 + $0x90] sm:$0xff]
    %v396 = vld [vmem:[#allocation2 + $0x98] sm:$0xff]
    %v397 = vld [vmem:[#allocation2 + $0xa0] sm:$0xff]
    %v398 = vld [vmem:[#allocation2 + $0xa8] sm:$0xff]
    %v399 = vld [vmem:[#allocation2 + $0xb0] sm:$0xff]
    %v400 = vld [vmem:[#allocation2 + $0xb8] sm:$0xff]
    %v401 = vld [vmem:[#allocation2 + $0xc0] sm:$0xff]
    %v402 = vld [vmem:[#allocation2 + $0xc8] sm:$0xff]
    %v403 = vld [vmem:[#allocation2 + $0xd0] sm:$0xff]
    %v404 = vld [vmem:[#allocation2 + $0xd8] sm:$0xff]
    %v405 = vld [vmem:[#allocation2 + $0xe0] sm:$0xff]
    %v406 = vld [vmem:[#allocation2 + $0xe8] sm:$0xff]
    %v407 = vld [vmem:[#allocation2 + $0xf0] sm:$0xff]
    %v408 = vld [vmem:[#allocation2 + $0xf8] sm:$0xff]
    %v409 = vld [vmem:[#allocation2 + $0x100] sm:$0xff]
    %v410 = vld [vmem:[#allocation2 + $0x108] sm:$0xff]
    %v411 = vld [vmem:[#allocation2 + $0x110] sm:$0xff]
    %v412 = vld [vmem:[#allocation2 + $0x118] sm:$0xff]
    %v413 = vld [vmem:[#allocation2 + $0x120] sm:$0xff]
    %v414 = vld [vmem:[#allocation2 + $0x128] sm:$0xff]
    %v415 = vld [vmem:[#allocation2 + $0x130] sm:$0xff]
    %v416 = vld [vmem:[#allocation2 + $0x138] sm:$0xff]
    %v417 = vld [vmem:[#allocation2 + $0x140] sm:$0xff]
    %v418 = vld [vmem:[#allocation2 + $0x148] sm:$0xff]
    %v419 = vld [vmem:[#allocation2 + $0x150] sm:$0xff]
    %v420 = vld [vmem:[#allocation2 + $0x158] sm:$0xff]
    %v421 = vld [vmem:[#allocation2 + $0x160] sm:$0xff]
    %v422 = vld [vmem:[#allocation2 + $0x168] sm:$0xff]
    %v423 = vld [vmem:[#allocation2 + $0x170] sm:$0xff]
    %v424 = vld [vmem:[#allocation2 + $0x178] sm:$0xff]
    %v425 = vld [vmem:[#allocation2 + $0x180] sm:$0xff]
    %v426 = vld [vmem:[#allocation2 + $0x188] sm:$0xff]
    %v427 = vld [vmem:[#allocation2 + $0x190] sm:$0xff]
    %v428 = vld [vmem:[#allocation2 + $0x198] sm:$0xff]
    %v429 = vld [vmem:[#allocation2 + $0x1a0] sm:$0xff]
    %v430 = vld [vmem:[#allocation2 + $0x1a8] sm:$0xff]
    %v431 = vld [vmem:[#allocation2 + $0x1b0] sm:$0xff]
    %v432 = vld [vmem:[#allocation2 + $0x1b8] sm:$0xff]
    %v433 = vld [vmem:[#allocation2 + $0x1c0] sm:$0xff]
    %v434 = vld [vmem:[#allocation2 + $0x1c8] sm:$0xff]
    %v435 = vld [vmem:[#allocation2 + $0x1d0] sm:$0xff]
    %v436 = vld [vmem:[#allocation2 + $0x1d8] sm:$0xff]
    %v437 = vld [vmem:[#allocation2 + $0x1e0] sm:$0xff]
    %v438 = vld [vmem:[#allocation2 + $0x1e8] sm:$0xff]
    %v439 = vld [vmem:[#allocation2 + $0x1f0] sm:$0xff]
    %v440 = vld [vmem:[#allocation2 + $0x1f8] sm:$0xff]
    %v441 = vld [vmem:[#allocation2 + $0x200] sm:$0xff]
    %v442 = vld [vmem:[#allocation2 + $0x208] sm:$0xff]
    %v443 = vld [vmem:[#allocation2 + $0x210] sm:$0xff]
    %v444 = vld [vmem:[#allocation2 + $0x218] sm:$0xff]
    %v445 = vld [vmem:[#allocation2 + $0x220] sm:$0xff]
    %v446 = vld [vmem:[#allocation2 + $0x228] sm:$0xff]
    %v447 = vld [vmem:[#allocation2 + $0x230] sm:$0xff]
    %v448 = vld [vmem:[#allocation2 + $0x238] sm:$0xff]
    %v449 = vld [vmem:[#allocation2 + $0x240] sm:$0xff]
    %v450 = vld [vmem:[#allocation2 + $0x248] sm:$0xff]
    %v451 = vld [vmem:[#allocation2 + $0x250] sm:$0xff]
    %v452 = vld [vmem:[#allocation2 + $0x258] sm:$0xff]
    %v453 = vld [vmem:[#allocation2 + $0x260] sm:$0xff]
    %v454 = vld [vmem:[#allocation2 + $0x268] sm:$0xff]
    %v455 = vld [vmem:[#allocation2 + $0x270] sm:$0xff]
    %v456 = vld [vmem:[#allocation2 + $0x278] sm:$0xff]
    %v457 = vld [vmem:[#allocation2 + $0x280] sm:$0xff]
    %v458 = vld [vmem:[#allocation2 + $0x288] sm:$0xff]
    %v459 = vld [vmem:[#allocation2 + $0x290] sm:$0xff]
    %v460 = vld [vmem:[#allocation2 + $0x298] sm:$0xff]
    %v461 = vld [vmem:[#allocation2 + $0x2a0] sm:$0xff]
    %v462 = vld [vmem:[#allocation2 + $0x2a8] sm:$0xff]
    %v463 = vld [vmem:[#allocation2 + $0x2b0] sm:$0xff]
    %v464 = vld [vmem:[#allocation2 + $0x2b8] sm:$0xff]
    %v465 = vld [vmem:[#allocation2 + $0x2c0] sm:$0xff]
    %v466 = vld [vmem:[#allocation2 + $0x2c8] sm:$0xff]
    %v467 = vld [vmem:[#allocation2 + $0x2d0] sm:$0xff]
    %v468 = vld [vmem:[#allocation2 + $0x2d8] sm:$0xff]
    %v469 = vld [vmem:[#allocation2 + $0x2e0] sm:$0xff]
    %v470 = vld [vmem:[#allocation2 + $0x2e8] sm:$0xff]
    %v471 = vld [vmem:[#allocation2 + $0x2f0] sm:$0xff]
    %v472 = vld [vmem:[#allocation2 + $0x2f8] sm:$0xff]
    %v473 = vld [vmem:[#allocation2 + $0x300] sm:$0xff]
    %v474 = vld [vmem:[#allocation2 + $0x308] sm:$0xff]
    %v475 = vld [vmem:[#allocation2 + $0x310] sm:$0xff]
    %v476 = vld [vmem:[#allocation2 + $0x318] sm:$0xff]
    %v477 = vld [vmem:[#allocation2 + $0x320] sm:$0xff]
    %v478 = vld [vmem:[#allocation2 + $0x328] sm:$0xff]
    %v479 = vld [vmem:[#allocation2 + $0x330] sm:$0xff]
    %v480 = vld [vmem:[#allocation2 + $0x338] sm:$0xff]
    %v481 = vld [vmem:[#allocation2 + $0x340] sm:$0xff]
    %v482 = vld [vmem:[#allocation2 + $0x348] sm:$0xff]
    %v483 = vld [vmem:[#allocation2 + $0x350] sm:$0xff]
    %v484 = vld [vmem:[#allocation2 + $0x358] sm:$0xff]
    %v485 = vld [vmem:[#allocation2 + $0x360] sm:$0xff]
    %v486 = vld [vmem:[#allocation2 + $0x368] sm:$0xff]
    %v487 = vld [vmem:[#allocation2 + $0x370] sm:$0xff]
    %v488 = vld [vmem:[#allocation2 + $0x378] sm:$0xff]
    %v489 = vld [vmem:[#allocation2 + $0x380] sm:$0xff]
    %v490 = vld [vmem:[#allocation2 + $0x388] sm:$0xff]
    %v491 = vld [vmem:[#allocation2 + $0x390] sm:$0xff]
    %v492 = vld [vmem:[#allocation2 + $0x398] sm:$0xff]
    %v493 = vld [vmem:[#allocation2 + $0x3a0] sm:$0xff]
    %v494 = vld [vmem:[#allocation2 + $0x3a8] sm:$0xff]
    %v495 = vld [vmem:[#allocation2 + $0x3b0] sm:$0xff]
    %v496 = vld [vmem:[#allocation2 + $0x3b8] sm:$0xff]
    %v497 = vld [vmem:[#allocation2 + $0x3c0] sm:$0xff]
    %v498 = vld [vmem:[#allocation2 + $0x3c8] sm:$0xff]
    %v499 = vld [vmem:[#allocation2 + $0x3d0] sm:$0xff]
    %v500 = vld [vmem:[#allocation2 + $0x3d8] sm:$0xff]
    %v501 = vld [vmem:[#allocation2 + $0x3e0] sm:$0xff]
    %v502 = vld [vmem:[#allocation2 + $0x3e8] sm:$0xff]
    %v503 = vld [vmem:[#allocation2 + $0x3f0] sm:$0xff]
    %v504 = vld [vmem:[#allocation2 + $0x3f8] sm:$0xff]
    %v505 = vld [vmem:[#allocation2 + $0x400] sm:$0xff]
    %v506 = vld [vmem:[#allocation2 + $0x408] sm:$0xff]
    %v507 = vld [vmem:[#allocation2 + $0x410] sm:$0xff]
    %v508 = vld [vmem:[#allocation2 + $0x418] sm:$0xff]
    %v509 = vld [vmem:[#allocation2 + $0x420] sm:$0xff]
    %v510 = vld [vmem:[#allocation2 + $0x428] sm:$0xff]
    %v511 = vld [vmem:[#allocation2 + $0x430] sm:$0xff]
    %v512 = vld [vmem:[#allocation2 + $0x438] sm:$0xff]
    %v513 = vld [vmem:[#allocation2 + $0x440] sm:$0xff]
    %v514 = vld [vmem:[#allocation2 + $0x448] sm:$0xff]
    %v515 = vld [vmem:[#allocation2 + $0x450] sm:$0xff]
    %v516 = vld [vmem:[#allocation2 + $0x458] sm:$0xff]
    %v517 = vld [vmem:[#allocation2 + $0x460] sm:$0xff]
    %v518 = vld [vmem:[#allocation2 + $0x468] sm:$0xff]
    %v519 = vld [vmem:[#allocation2 + $0x470] sm:$0xff]
    %v520 = vld [vmem:[#allocation2 + $0x478] sm:$0xff]
    %v521 = vld [vmem:[#allocation2 + $0x480] sm:$0xff]
    %v522 = vld [vmem:[#allocation2 + $0x488] sm:$0xff]
    %v523 = vld [vmem:[#allocation2 + $0x490] sm:$0xff]
    %v524 = vld [vmem:[#allocation2 + $0x498] sm:$0xff]
    %v525 = vld [vmem:[#allocation2 + $0x4a0] sm:$0xff]
    %v526 = vld [vmem:[#allocation2 + $0x4a8] sm:$0xff]
    %v527 = vld [vmem:[#allocation2 + $0x4b0] sm:$0xff]
    %v528 = vld [vmem:[#allocation2 + $0x4b8] sm:$0xff]
    %v529 = vld [vmem:[#allocation2 + $0x4c0] sm:$0xff]
    %v530 = vld [vmem:[#allocation2 + $0x4c8] sm:$0xff]
    %v531 = vld [vmem:[#allocation2 + $0x4d0] sm:$0xff]
    %v532 = vld [vmem:[#allocation2 + $0x4d8] sm:$0xff]
    %v533 = vld [vmem:[#allocation2 + $0x4e0] sm:$0xff]
    %v534 = vld [vmem:[#allocation2 + $0x4e8] sm:$0xff]
    %v535 = vld [vmem:[#allocation2 + $0x4f0] sm:$0xff]
    %v536 = vld [vmem:[#allocation2 + $0x4f8] sm:$0xff]
    %v537 = vld [vmem:[#allocation2 + $0x500] sm:$0xff]
    %v538 = vld [vmem:[#allocation2 + $0x508] sm:$0xff]
    %v539 = vld [vmem:[#allocation2 + $0x510] sm:$0xff]
    %v540 = vld [vmem:[#allocation2 + $0x518] sm:$0xff]
    %v541 = vld [vmem:[#allocation2 + $0x520] sm:$0xff]
    %v542 = vld [vmem:[#allocation2 + $0x528] sm:$0xff]
    %v543 = vld [vmem:[#allocation2 + $0x530] sm:$0xff]
    %v544 = vld [vmem:[#allocation2 + $0x538] sm:$0xff]
    %v545 = vld [vmem:[#allocation2 + $0x540] sm:$0xff]
    %v546 = vld [vmem:[#allocation2 + $0x548] sm:$0xff]
    %v547 = vld [vmem:[#allocation2 + $0x550] sm:$0xff]
    %v548 = vld [vmem:[#allocation2 + $0x558] sm:$0xff]
    %v549 = vld [vmem:[#allocation2 + $0x560] sm:$0xff]
    %v550 = vld [vmem:[#allocation2 + $0x568] sm:$0xff]
    %v551 = vld [vmem:[#allocation2 + $0x570] sm:$0xff]
    %v552 = vld [vmem:[#allocation2 + $0x578] sm:$0xff]
    %v553 = vld [vmem:[#allocation2 + $0x580] sm:$0xff]
    %v554 = vld [vmem:[#allocation2 + $0x588] sm:$0xff]
    %v555 = vld [vmem:[#allocation2 + $0x590] sm:$0xff]
    %v556 = vld [vmem:[#allocation2 + $0x598] sm:$0xff]
    %v557 = vld [vmem:[#allocation2 + $0x5a0] sm:$0xff]
    %v558 = vld [vmem:[#allocation2 + $0x5a8] sm:$0xff]
    %v559 = vld [vmem:[#allocation2 + $0x5b0] sm:$0xff]
    %v560 = vld [vmem:[#allocation2 + $0x5b8] sm:$0xff]
    %v561 = vld [vmem:[#allocation2 + $0x5c0] sm:$0xff]
    %v562 = vld [vmem:[#allocation2 + $0x5c8] sm:$0xff]
    %v563 = vld [vmem:[#allocation2 + $0x5d0] sm:$0xff]
    %v564 = vld [vmem:[#allocation2 + $0x5d8] sm:$0xff]
    %v565 = vld [vmem:[#allocation2 + $0x5e0] sm:$0xff]
    %v566 = vld [vmem:[#allocation2 + $0x5e8] sm:$0xff]
    %v567 = vld [vmem:[#allocation2 + $0x5f0] sm:$0xff]
    %v568 = vld [vmem:[#allocation2 + $0x5f8] sm:$0xff]
    %v569 = vld [vmem:[#allocation2 + $0x600] sm:$0xff]
    %v570 = vld [vmem:[#allocation2 + $0x608] sm:$0xff]
    %v571 = vld [vmem:[#allocation2 + $0x610] sm:$0xff]
    %v572 = vld [vmem:[#allocation2 + $0x618] sm:$0xff]
    %v573 = vld [vmem:[#allocation2 + $0x620] sm:$0xff]
    %v574 = vld [vmem:[#allocation2 + $0x628] sm:$0xff]
    %v575 = vld [vmem:[#allocation2 + $0x630] sm:$0xff]
    %v576 = vld [vmem:[#allocation2 + $0x638] sm:$0xff]
    %v577 = vld [vmem:[#allocation2 + $0x640] sm:$0xff]
    %v578 = vld [vmem:[#allocation2 + $0x648] sm:$0xff]
    %v579 = vld [vmem:[#allocation2 + $0x650] sm:$0xff]
    %v580 = vld [vmem:[#allocation2 + $0x658] sm:$0xff]
    %v581 = vld [vmem:[#allocation2 + $0x660] sm:$0xff]
    %v582 = vld [vmem:[#allocation2 + $0x668] sm:$0xff]
    %v583 = vld [vmem:[#allocation2 + $0x670] sm:$0xff]
    %v584 = vld [vmem:[#allocation2 + $0x678] sm:$0xff]
    %v585 = vld [vmem:[#allocation2 + $0x680] sm:$0xff]
    %v586 = vld [vmem:[#allocation2 + $0x688] sm:$0xff]
    %v587 = vld [vmem:[#allocation2 + $0x690] sm:$0xff]
    %v588 = vld [vmem:[#allocation2 + $0x698] sm:$0xff]
    %v589 = vld [vmem:[#allocation2 + $0x6a0] sm:$0xff]
    %v590 = vld [vmem:[#allocation2 + $0x6a8] sm:$0xff]
    %v591 = vld [vmem:[#allocation2 + $0x6b0] sm:$0xff]
    %v592 = vld [vmem:[#allocation2 + $0x6b8] sm:$0xff]
    %v593 = vld [vmem:[#allocation2 + $0x6c0] sm:$0xff]
    %v594 = vld [vmem:[#allocation2 + $0x6c8] sm:$0xff]
    %v595 = vld [vmem:[#allocation2 + $0x6d0] sm:$0xff]
    %v596 = vld [vmem:[#allocation2 + $0x6d8] sm:$0xff]
    %v597 = vld [vmem:[#allocation2 + $0x6e0] sm:$0xff]
    %v598 = vld [vmem:[#allocation2 + $0x6e8] sm:$0xff]
    %v599 = vld [vmem:[#allocation2 + $0x6f0] sm:$0xff]
    %v600 = vld [vmem:[#allocation2 + $0x6f8] sm:$0xff]
    %v601 = vld [vmem:[#allocation2 + $0x700] sm:$0xff]
    %v602 = vld [vmem:[#allocation2 + $0x708] sm:$0xff]
    %v603 = vld [vmem:[#allocation2 + $0x710] sm:$0xff]
    %v604 = vld [vmem:[#allocation2 + $0x718] sm:$0xff]
    %v605 = vld [vmem:[#allocation2 + $0x720] sm:$0xff]
    %v606 = vld [vmem:[#allocation2 + $0x728] sm:$0xff]
    %v607 = vld [vmem:[#allocation2 + $0x730] sm:$0xff]
    %v608 = vld [vmem:[#allocation2 + $0x738] sm:$0xff]
    %v609 = vld [vmem:[#allocation2 + $0x740] sm:$0xff]
    %v610 = vld [vmem:[#allocation2 + $0x748] sm:$0xff]
    %v611 = vld [vmem:[#allocation2 + $0x750] sm:$0xff]
    %v612 = vld [vmem:[#allocation2 + $0x758] sm:$0xff]
    %v613 = vld [vmem:[#allocation2 + $0x760] sm:$0xff]
    %v614 = vld [vmem:[#allocation2 + $0x768] sm:$0xff]
    %v615 = vld [vmem:[#allocation2 + $0x770] sm:$0xff]
    %v616 = vld [vmem:[#allocation2 + $0x778] sm:$0xff]
    %v617 = vld [vmem:[#allocation2 + $0x780] sm:$0xff]
    %v618 = vld [vmem:[#allocation2 + $0x788] sm:$0xff]
    %v619 = vld [vmem:[#allocation2 + $0x790] sm:$0xff]
    %v620 = vld [vmem:[#allocation2 + $0x798] sm:$0xff]
    %v621 = vld [vmem:[#allocation2 + $0x7a0] sm:$0xff]
    %v622 = vld [vmem:[#allocation2 + $0x7a8] sm:$0xff]
    %v623 = vld [vmem:[#allocation2 + $0x7b0] sm:$0xff]
    %v624 = vld [vmem:[#allocation2 + $0x7b8] sm:$0xff]
    %v625 = vld [vmem:[#allocation2 + $0x7c0] sm:$0xff]
    %v626 = vld [vmem:[#allocation2 + $0x7c8] sm:$0xff]
    %v627 = vld [vmem:[#allocation2 + $0x7d0] sm:$0xff]
    %v628 = vld [vmem:[#allocation2 + $0x7d8] sm:$0xff]
    %v629 = vld [vmem:[#allocation2 + $0x7e0] sm:$0xff]
    %v630 = vld [vmem:[#allocation2 + $0x7e8] sm:$0xff]
    %v631 = vld [vmem:[#allocation2 + $0x7f0] sm:$0xff]
    %v632 = vld [vmem:[#allocation2 + $0x7f8] sm:$0xff]
    %v633 = vld [vmem:[#allocation2 + $0x800] sm:$0xff]
    %v634 = vld [vmem:[#allocation2 + $0x808] sm:$0xff]
    %v635 = vld [vmem:[#allocation2 + $0x810] sm:$0xff]
    %v636 = vld [vmem:[#allocation2 + $0x818] sm:$0xff]
    %v637 = vld [vmem:[#allocation2 + $0x820] sm:$0xff]
    %v638 = vld [vmem:[#allocation2 + $0x828] sm:$0xff]
    %v639 = vld [vmem:[#allocation2 + $0x830] sm:$0xff]
    %v640 = vld [vmem:[#allocation2 + $0x838] sm:$0xff]
    %v641 = vld [vmem:[#allocation2 + $0x840] sm:$0xff]
    %v642 = vld [vmem:[#allocation2 + $0x848] sm:$0xff]
    %v643 = vld [vmem:[#allocation2 + $0x850] sm:$0xff]
    %v644 = vld [vmem:[#allocation2 + $0x858] sm:$0xff]
    %v645 = vld [vmem:[#allocation2 + $0x860] sm:$0xff]
    %v646 = vld [vmem:[#allocation2 + $0x868] sm:$0xff]
    %v647 = vld [vmem:[#allocation2 + $0x870] sm:$0xff]
    %v648 = vld [vmem:[#allocation2 + $0x878] sm:$0xff]
    %v649 = vld [vmem:[#allocation2 + $0x880] sm:$0xff]
    %v650 = vld [vmem:[#allocation2 + $0x888] sm:$0xff]
    %v651 = vld [vmem:[#allocation2 + $0x890] sm:$0xff]
    %v652 = vld [vmem:[#allocation2 + $0x898] sm:$0xff]
    %v653 = vld [vmem:[#allocation2 + $0x8a0] sm:$0xff]
    %v654 = vld [vmem:[#allocation2 + $0x8a8] sm:$0xff]
    %v655 = vld [vmem:[#allocation2 + $0x8b0] sm:$0xff]
    %v656 = vld [vmem:[#allocation2 + $0x8b8] sm:$0xff]
    %v657 = vld [vmem:[#allocation2 + $0x8c0] sm:$0xff]
    %v658 = vld [vmem:[#allocation2 + $0x8c8] sm:$0xff]
    %v659 = vld [vmem:[#allocation2 + $0x8d0] sm:$0xff]
    %v660 = vld [vmem:[#allocation2 + $0x8d8] sm:$0xff]
    %v661 = vld [vmem:[#allocation2 + $0x8e0] sm:$0xff]
    %v662 = vld [vmem:[#allocation2 + $0x8e8] sm:$0xff]
    %v663 = vld [vmem:[#allocation2 + $0x8f0] sm:$0xff]
    %v664 = vld [vmem:[#allocation2 + $0x8f8] sm:$0xff]
    %v665 = vld [vmem:[#allocation2 + $0x900] sm:$0xff]
    %v666 = vld [vmem:[#allocation2 + $0x908] sm:$0xff]
    %v667 = vld [vmem:[#allocation2 + $0x910] sm:$0xff]
    %v668 = vld [vmem:[#allocation2 + $0x918] sm:$0xff]
    %v669 = vld [vmem:[#allocation2 + $0x920] sm:$0xff]
    %v670 = vld [vmem:[#allocation2 + $0x928] sm:$0xff]
    %v671 = vld [vmem:[#allocation2 + $0x930] sm:$0xff]
    %v672 = vld [vmem:[#allocation2 + $0x938] sm:$0xff]
    %v673 = vld [vmem:[#allocation2 + $0x940] sm:$0xff]
    %v674 = vld [vmem:[#allocation2 + $0x948] sm:$0xff]
    %v675 = vld [vmem:[#allocation2 + $0x950] sm:$0xff]
    %v676 = vld [vmem:[#allocation2 + $0x958] sm:$0xff]
    %v677 = vld [vmem:[#allocation2 + $0x960] sm:$0xff]
    %v678 = vld [vmem:[#allocation2 + $0x968] sm:$0xff]
    %v679 = vld [vmem:[#allocation2 + $0x970] sm:$0xff]
    %v680 = vld [vmem:[#allocation2 + $0x978] sm:$0xff]
    %v681 = vld [vmem:[#allocation2 + $0x980] sm:$0xff]
    %v682 = vld [vmem:[#allocation2 + $0x988] sm:$0xff]
    %v683 = vld [vmem:[#allocation2 + $0x990] sm:$0xff]
    %v684 = vld [vmem:[#allocation2 + $0x998] sm:$0xff]
    %v685 = vld [vmem:[#allocation2 + $0x9a0] sm:$0xff]
    %v686 = vld [vmem:[#allocation2 + $0x9a8] sm:$0xff]
    %v687 = vld [vmem:[#allocation2 + $0x9b0] sm:$0xff]
    %v688 = vld [vmem:[#allocation2 + $0x9b8] sm:$0xff]
    %v689 = vld [vmem:[#allocation2 + $0x9c0] sm:$0xff]
    %v690 = vld [vmem:[#allocation2 + $0x9c8] sm:$0xff]
    %v691 = vld [vmem:[#allocation2 + $0x9d0] sm:$0xff]
    %v692 = vld [vmem:[#allocation2 + $0x9d8] sm:$0xff]
    %v693 = vld [vmem:[#allocation2 + $0x9e0] sm:$0xff]
    %v694 = vld [vmem:[#allocation2 + $0x9e8] sm:$0xff]
    %v695 = vld [vmem:[#allocation2 + $0x9f0] sm:$0xff]
    %v696 = vld [vmem:[#allocation2 + $0x9f8] sm:$0xff]
    %v697 = vld [vmem:[#allocation2 + $0xa00] sm:$0xff]
    %v698 = vld [vmem:[#allocation2 + $0xa08] sm:$0xff]
    %v699 = vld [vmem:[#allocation2 + $0xa10] sm:$0xff]
    %v700 = vld [vmem:[#allocation2 + $0xa18] sm:$0xff]
    %v701 = vld [vmem:[#allocation2 + $0xa20] sm:$0xff]
    %v702 = vld [vmem:[#allocation2 + $0xa28] sm:$0xff]
    %v703 = vld [vmem:[#allocation2 + $0xa30] sm:$0xff]
    %v704 = vld [vmem:[#allocation2 + $0xa38] sm:$0xff]
    %v705 = vld [vmem:[#allocation2 + $0xa40] sm:$0xff]
    %v706 = vld [vmem:[#allocation2 + $0xa48] sm:$0xff]
    %v707 = vld [vmem:[#allocation2 + $0xa50] sm:$0xff]
    %v708 = vld [vmem:[#allocation2 + $0xa58] sm:$0xff]
    %v709 = vld [vmem:[#allocation2 + $0xa60] sm:$0xff]
    %v710 = vld [vmem:[#allocation2 + $0xa68] sm:$0xff]
    %v711 = vld [vmem:[#allocation2 + $0xa70] sm:$0xff]
    %v712 = vld [vmem:[#allocation2 + $0xa78] sm:$0xff]
    %v713 = vld [vmem:[#allocation2 + $0xa80] sm:$0xff]
    %v714 = vld [vmem:[#allocation2 + $0xa88] sm:$0xff]
    %v715 = vld [vmem:[#allocation2 + $0xa90] sm:$0xff]
    %v716 = vld [vmem:[#allocation2 + $0xa98] sm:$0xff]
    %v717 = vld [vmem:[#allocation2 + $0xaa0] sm:$0xff]
    %v718 = vld [vmem:[#allocation2 + $0xaa8] sm:$0xff]
    %v719 = vld [vmem:[#allocation2 + $0xab0] sm:$0xff]
    %v720 = vld [vmem:[#allocation2 + $0xab8] sm:$0xff]
    %v721 = vld [vmem:[#allocation2 + $0xac0] sm:$0xff]
    %v722 = vld [vmem:[#allocation2 + $0xac8] sm:$0xff]
    %v723 = vld [vmem:[#allocation2 + $0xad0] sm:$0xff]
    %v724 = vld [vmem:[#allocation2 + $0xad8] sm:$0xff]
    %v725 = vld [vmem:[#allocation2 + $0xae0] sm:$0xff]
    %v726 = vld [vmem:[#allocation2 + $0xae8] sm:$0xff]
    %v727 = vld [vmem:[#allocation2 + $0xaf0] sm:$0xff]
    %v728 = vld [vmem:[#allocation2 + $0xaf8] sm:$0xff]
    %v729 = vld [vmem:[#allocation2 + $0xb00] sm:$0xff]
    %v730 = vld [vmem:[#allocation2 + $0xb08] sm:$0xff]
    %v731 = vld [vmem:[#allocation2 + $0xb10] sm:$0xff]
    %v732 = vld [vmem:[#allocation2 + $0xb18] sm:$0xff]
    %v733 = vld [vmem:[#allocation2 + $0xb20] sm:$0xff]
    %v734 = vld [vmem:[#allocation2 + $0xb28] sm:$0xff]
    %v735 = vld [vmem:[#allocation2 + $0xb30] sm:$0xff]
    %v736 = vld [vmem:[#allocation2 + $0xb38] sm:$0xff]
    %v737 = vld [vmem:[#allocation2 + $0xb40] sm:$0xff]
    %v738 = vld [vmem:[#allocation2 + $0xb48] sm:$0xff]
    %v739 = vld [vmem:[#allocation2 + $0xb50] sm:$0xff]
    %v740 = vld [vmem:[#allocation2 + $0xb58] sm:$0xff]
    %v741 = vld [vmem:[#allocation2 + $0xb60] sm:$0xff]
    %v742 = vld [vmem:[#allocation2 + $0xb68] sm:$0xff]
    %v743 = vld [vmem:[#allocation2 + $0xb70] sm:$0xff]
    %v744 = vld [vmem:[#allocation2 + $0xb78] sm:$0xff]
    %v745 = vld [vmem:[#allocation2 + $0xb80] sm:$0xff]
    %v746 = vld [vmem:[#allocation2 + $0xb88] sm:$0xff]
    %v747 = vld [vmem:[#allocation2 + $0xb90] sm:$0xff]
    %v748 = vld [vmem:[#allocation2 + $0xb98] sm:$0xff]
    %v749 = vld [vmem:[#allocation2 + $0xba0] sm:$0xff]
    %v750 = vld [vmem:[#allocation2 + $0xba8] sm:$0xff]
    %v751 = vld [vmem:[#allocation2 + $0xbb0] sm:$0xff]
    %v752 = vld [vmem:[#allocation2 + $0xbb8] sm:$0xff]
    %v753 = vld [vmem:[#allocation2 + $0xbc0] sm:$0xff]
    %v754 = vld [vmem:[#allocation2 + $0xbc8] sm:$0xff]
    %v755 = vld [vmem:[#allocation2 + $0xbd0] sm:$0xff]
    %v756 = vld [vmem:[#allocation2 + $0xbd8] sm:$0xff]
    %v757 = vld [vmem:[#allocation2 + $0xbe0] sm:$0xff]
    %v758 = vld [vmem:[#allocation2 + $0xbe8] sm:$0xff]
    %v759 = vld [vmem:[#allocation2 + $0xbf0] sm:$0xff]
    %v760 = vld [vmem:[#allocation2 + $0xbf8] sm:$0xff]
    %v761 = vld [vmem:[#allocation2 + $0xc00] sm:$0xff]
    %v762 = vld [vmem:[#allocation2 + $0xc08] sm:$0xff]
    %v763 = vld [vmem:[#allocation2 + $0xc10] sm:$0xff]
    %v764 = vld [vmem:[#allocation2 + $0xc18] sm:$0xff]
    %v765 = vld [vmem:[#allocation2 + $0xc20] sm:$0xff]
    %v766 = vld [vmem:[#allocation2 + $0xc28] sm:$0xff]
    %v767 = vld [vmem:[#allocation2 + $0xc30] sm:$0xff]
    %v768 = vld [vmem:[#allocation2 + $0xc38] sm:$0xff]
    %v769 = vld [vmem:[#allocation2 + $0xc40] sm:$0xff]
    %v770 = vld [vmem:[#allocation2 + $0xc48] sm:$0xff]
    %v771 = vld [vmem:[#allocation2 + $0xc50] sm:$0xff]
    %v772 = vld [vmem:[#allocation2 + $0xc58] sm:$0xff]
    %v773 = vld [vmem:[#allocation2 + $0xc60] sm:$0xff]
    %v774 = vld [vmem:[#allocation2 + $0xc68] sm:$0xff]
    %v775 = vld [vmem:[#allocation2 + $0xc70] sm:$0xff]
    %v776 = vld [vmem:[#allocation2 + $0xc78] sm:$0xff]
    %v777 = vld [vmem:[#allocation2 + $0xc80] sm:$0xff]
    %v778 = vld [vmem:[#allocation2 + $0xc88] sm:$0xff]
    %v779 = vld [vmem:[#allocation2 + $0xc90] sm:$0xff]
    %v780 = vld [vmem:[#allocation2 + $0xc98] sm:$0xff]
    %v781 = vld [vmem:[#allocation2 + $0xca0] sm:$0xff]
    %v782 = vld [vmem:[#allocation2 + $0xca8] sm:$0xff]
    %v783 = vld [vmem:[#allocation2 + $0xcb0] sm:$0xff]
    %v784 = vld [vmem:[#allocation2 + $0xcb8] sm:$0xff]
    %v785 = vld [vmem:[#allocation2 + $0xcc0] sm:$0xff]
    %v786 = vld [vmem:[#allocation2 + $0xcc8] sm:$0xff]
    %v787 = vld [vmem:[#allocation2 + $0xcd0] sm:$0xff]
    %v788 = vld [vmem:[#allocation2 + $0xcd8] sm:$0xff]
    %v789 = vld [vmem:[#allocation2 + $0xce0] sm:$0xff]
    %v790 = vld [vmem:[#allocation2 + $0xce8] sm:$0xff]
    %v791 = vld [vmem:[#allocation2 + $0xcf0] sm:$0xff]
    %v792 = vld [vmem:[#allocation2 + $0xcf8] sm:$0xff]
    %v793 = vld [vmem:[#allocation2 + $0xd00] sm:$0xff]
    %v794 = vld [vmem:[#allocation2 + $0xd08] sm:$0xff]
    %v795 = vld [vmem:[#allocation2 + $0xd10] sm:$0xff]
    %v796 = vld [vmem:[#allocation2 + $0xd18] sm:$0xff]
    %v797 = vld [vmem:[#allocation2 + $0xd20] sm:$0xff]
    %v798 = vld [vmem:[#allocation2 + $0xd28] sm:$0xff]
    %v799 = vld [vmem:[#allocation2 + $0xd30] sm:$0xff]
    %v800 = vld [vmem:[#allocation2 + $0xd38] sm:$0xff]
    %v801 = vld [vmem:[#allocation2 + $0xd40] sm:$0xff]
    %v802 = vld [vmem:[#allocation2 + $0xd48] sm:$0xff]
    %v803 = vld [vmem:[#allocation2 + $0xd50] sm:$0xff]
    %v804 = vld [vmem:[#allocation2 + $0xd58] sm:$0xff]
    %v805 = vld [vmem:[#allocation2 + $0xd60] sm:$0xff]
    %v806 = vld [vmem:[#allocation2 + $0xd68] sm:$0xff]
    %v807 = vld [vmem:[#allocation2 + $0xd70] sm:$0xff]
    %v808 = vld [vmem:[#allocation2 + $0xd78] sm:$0xff]
    %v809 = vld [vmem:[#allocation2 + $0xd80] sm:$0xff]
    %v810 = vld [vmem:[#allocation2 + $0xd88] sm:$0xff]
    %v811 = vld [vmem:[#allocation2 + $0xd90] sm:$0xff]
    %v812 = vld [vmem:[#allocation2 + $0xd98] sm:$0xff]
    %v813 = vld [vmem:[#allocation2 + $0xda0] sm:$0xff]
    %v814 = vld [vmem:[#allocation2 + $0xda8] sm:$0xff]
    %v815 = vld [vmem:[#allocation2 + $0xdb0] sm:$0xff]
    %v816 = vld [vmem:[#allocation2 + $0xdb8] sm:$0xff]
    %v817 = vld [vmem:[#allocation2 + $0xdc0] sm:$0xff]
    %v818 = vld [vmem:[#allocation2 + $0xdc8] sm:$0xff]
    %v819 = vld [vmem:[#allocation2 + $0xdd0] sm:$0xff]
    %v820 = vld [vmem:[#allocation2 + $0xdd8] sm:$0xff]
    %v821 = vld [vmem:[#allocation2 + $0xde0] sm:$0xff]
    %v822 = vld [vmem:[#allocation2 + $0xde8] sm:$0xff]
    %v823 = vld [vmem:[#allocation2 + $0xdf0] sm:$0xff]
    %v824 = vld [vmem:[#allocation2 + $0xdf8] sm:$0xff]
    %v825 = vld [vmem:[#allocation2 + $0xe00] sm:$0xff]
    %v826 = vld [vmem:[#allocation2 + $0xe08] sm:$0xff]
    %v827 = vld [vmem:[#allocation2 + $0xe10] sm:$0xff]
    %v828 = vld [vmem:[#allocation2 + $0xe18] sm:$0xff]
    %v829 = vld [vmem:[#allocation2 + $0xe20] sm:$0xff]
    %v830 = vld [vmem:[#allocation2 + $0xe28] sm:$0xff]
    %v831 = vld [vmem:[#allocation2 + $0xe30] sm:$0xff]
    %v832 = vld [vmem:[#allocation2 + $0xe38] sm:$0xff]
    %v833 = vld [vmem:[#allocation2 + $0xe40] sm:$0xff]
    %v834 = vld [vmem:[#allocation2 + $0xe48] sm:$0xff]
    %v835 = vld [vmem:[#allocation2 + $0xe50] sm:$0xff]
    %v836 = vld [vmem:[#allocation2 + $0xe58] sm:$0xff]
    %v837 = vld [vmem:[#allocation2 + $0xe60] sm:$0xff]
    %v838 = vld [vmem:[#allocation2 + $0xe68] sm:$0xff]
    %v839 = vld [vmem:[#allocation2 + $0xe70] sm:$0xff]
    %v840 = vld [vmem:[#allocation2 + $0xe78] sm:$0xff]
    %v841 = vld [vmem:[#allocation2 + $0xe80] sm:$0xff]
    %v842 = vld [vmem:[#allocation2 + $0xe88] sm:$0xff]
    %v843 = vld [vmem:[#allocation2 + $0xe90] sm:$0xff]
    %v844 = vld [vmem:[#allocation2 + $0xe98] sm:$0xff]
    %v845 = vld [vmem:[#allocation2 + $0xea0] sm:$0xff]
    %v846 = vld [vmem:[#allocation2 + $0xea8] sm:$0xff]
    %v847 = vld [vmem:[#allocation2 + $0xeb0] sm:$0xff]
    %v848 = vld [vmem:[#allocation2 + $0xeb8] sm:$0xff]
    %v849 = vld [vmem:[#allocation2 + $0xec0] sm:$0xff]
    %v850 = vld [vmem:[#allocation2 + $0xec8] sm:$0xff]
    %v851 = vld [vmem:[#allocation2 + $0xed0] sm:$0xff]
    %v852 = vld [vmem:[#allocation2 + $0xed8] sm:$0xff]
    %v853 = vld [vmem:[#allocation2 + $0xee0] sm:$0xff]
    %v854 = vld [vmem:[#allocation2 + $0xee8] sm:$0xff]
    %v855 = vld [vmem:[#allocation2 + $0xef0] sm:$0xff]
    %v856 = vld [vmem:[#allocation2 + $0xef8] sm:$0xff]
    %v857 = vld [vmem:[#allocation2 + $0xf00] sm:$0xff]
    %v858 = vld [vmem:[#allocation2 + $0xf08] sm:$0xff]
    %v859 = vld [vmem:[#allocation2 + $0xf10] sm:$0xff]
    %v860 = vld [vmem:[#allocation2 + $0xf18] sm:$0xff]
    %v861 = vld [vmem:[#allocation2 + $0xf20] sm:$0xff]
    %v862 = vld [vmem:[#allocation2 + $0xf28] sm:$0xff]
    %v863 = vld [vmem:[#allocation2 + $0xf30] sm:$0xff]
    %v864 = vld [vmem:[#allocation2 + $0xf38] sm:$0xff]
    %v865 = vld [vmem:[#allocation2 + $0xf40] sm:$0xff]
    %v866 = vld [vmem:[#allocation2 + $0xf48] sm:$0xff]
    %v867 = vld [vmem:[#allocation2 + $0xf50] sm:$0xff]
    %v868 = vld [vmem:[#allocation2 + $0xf58] sm:$0xff]
    %v869 = vld [vmem:[#allocation2 + $0xf60] sm:$0xff]
    %v870 = vld [vmem:[#allocation2 + $0xf68] sm:$0xff]
    %v871 = vld [vmem:[#allocation2 + $0xf70] sm:$0xff]
    %v872 = vld [vmem:[#allocation2 + $0xf78] sm:$0xff]
    %v873 = vld [vmem:[#allocation2 + $0xf80] sm:$0xff]
    %v874 = vld [vmem:[#allocation2 + $0xf88] sm:$0xff]
    %v875 = vld [vmem:[#allocation2 + $0xf90] sm:$0xff]
    %v876 = vld [vmem:[#allocation2 + $0xf98] sm:$0xff]
    %v877 = vld [vmem:[#allocation2 + $0xfa0] sm:$0xff]
    %v878 = vld [vmem:[#allocation2 + $0xfa8] sm:$0xff]
    %v879 = vld [vmem:[#allocation2 + $0xfb0] sm:$0xff]
    %v880 = vld [vmem:[#allocation2 + $0xfb8] sm:$0xff]
    %v881 = vld [vmem:[#allocation2 + $0xfc0] sm:$0xff]
    %v882 = vld [vmem:[#allocation2 + $0xfc8] sm:$0xff]
    %v883 = vld [vmem:[#allocation2 + $0xfd0] sm:$0xff]
    %v884 = vld [vmem:[#allocation2 + $0xfd8] sm:$0xff]
    %v885 = vld [vmem:[#allocation2 + $0xfe0] sm:$0xff]
    %v886 = vld [vmem:[#allocation2 + $0xfe8] sm:$0xff]
    %v887 = vld [vmem:[#allocation2 + $0xff0] sm:$0xff]
    %v888 = vld [vmem:[#allocation2 + $0xff8] sm:$0xff]
    %v889 = vld [vmem:[#allocation2 + $0x1000] sm:$0xff]
    %v890 = vld [vmem:[#allocation2 + $0x1008] sm:$0xff]
    %v891 = vld [vmem:[#allocation2 + $0x1010] sm:$0xff]
    %v892 = vld [vmem:[#allocation2 + $0x1018] sm:$0xff]
    %v893 = vld [vmem:[#allocation2 + $0x1020] sm:$0xff]
    %v894 = vld [vmem:[#allocation2 + $0x1028] sm:$0xff]
    %v895 = vld [vmem:[#allocation2 + $0x1030] sm:$0xff]
    %v896 = vld [vmem:[#allocation2 + $0x1038] sm:$0xff]
    %v897 = vld [vmem:[#allocation2 + $0x1040] sm:$0xff]
    %v898 = vld [vmem:[#allocation2 + $0x1048] sm:$0xff]
    %v899 = vld [vmem:[#allocation2 + $0x1050] sm:$0xff]
    %v900 = vld [vmem:[#allocation2 + $0x1058] sm:$0xff]
    %v901 = vld [vmem:[#allocation2 + $0x1060] sm:$0xff]
    %v902 = vld [vmem:[#allocation2 + $0x1068] sm:$0xff]
    %v903 = vld [vmem:[#allocation2 + $0x1070] sm:$0xff]
    %v904 = vld [vmem:[#allocation2 + $0x1078] sm:$0xff]
    %v905 = vld [vmem:[#allocation2 + $0x1080] sm:$0xff]
    %v906 = vld [vmem:[#allocation2 + $0x1088] sm:$0xff]
    %v907 = vld [vmem:[#allocation2 + $0x1090] sm:$0xff]
    %v908 = vld [vmem:[#allocation2 + $0x1098] sm:$0xff]
    %v909 = vld [vmem:[#allocation2 + $0x10a0] sm:$0xff]
    %v910 = vld [vmem:[#allocation2 + $0x10a8] sm:$0xff]
    %v911 = vld [vmem:[#allocation2 + $0x10b0] sm:$0xff]
    %v912 = vld [vmem:[#allocation2 + $0x10b8] sm:$0xff]
    %v913 = vld [vmem:[#allocation2 + $0x10c0] sm:$0xff]
    %v914 = vld [vmem:[#allocation2 + $0x10c8] sm:$0xff]
    %v915 = vld [vmem:[#allocation2 + $0x10d0] sm:$0xff]
    %v916 = vld [vmem:[#allocation2 + $0x10d8] sm:$0xff]
    %v917 = vld [vmem:[#allocation2 + $0x10e0] sm:$0xff]
    %v918 = vld [vmem:[#allocation2 + $0x10e8] sm:$0xff]
    %v919 = vld [vmem:[#allocation2 + $0x10f0] sm:$0xff]
    %v920 = vld [vmem:[#allocation2 + $0x10f8] sm:$0xff]
    %v921 = vld [vmem:[#allocation2 + $0x1100] sm:$0xff]
    %v922 = vld [vmem:[#allocation2 + $0x1108] sm:$0xff]
    %v923 = vld [vmem:[#allocation2 + $0x1110] sm:$0xff]
    %v924 = vld [vmem:[#allocation2 + $0x1118] sm:$0xff]
    %v925 = vld [vmem:[#allocation2 + $0x1120] sm:$0xff]
    %v926 = vld [vmem:[#allocation2 + $0x1128] sm:$0xff]
    %v927 = vld [vmem:[#allocation2 + $0x1130] sm:$0xff]
    %v928 = vld [vmem:[#allocation2 + $0x1138] sm:$0xff]
    %v929 = vld [vmem:[#allocation2 + $0x1140] sm:$0xff]
    %v930 = vld [vmem:[#allocation2 + $0x1148] sm:$0xff]
    %v931 = vld [vmem:[#allocation2 + $0x1150] sm:$0xff]
    %v932 = vld [vmem:[#allocation2 + $0x1158] sm:$0xff]
    %v933 = vld [vmem:[#allocation2 + $0x1160] sm:$0xff]
    %v934 = vld [vmem:[#allocation2 + $0x1168] sm:$0xff]
    %v935 = vld [vmem:[#allocation2 + $0x1170] sm:$0xff]
    %v936 = vld [vmem:[#allocation2 + $0x1178] sm:$0xff]
    %v937 = vld [vmem:[#allocation2 + $0x1180] sm:$0xff]
    %v938 = vld [vmem:[#allocation2 + $0x1188] sm:$0xff]
    %v939 = vld [vmem:[#allocation2 + $0x1190] sm:$0xff]
    %v940 = vld [vmem:[#allocation2 + $0x1198] sm:$0xff]
    %v941 = vld [vmem:[#allocation2 + $0x11a0] sm:$0xff]
    %v942 = vld [vmem:[#allocation2 + $0x11a8] sm:$0xff]
    %v943 = vld [vmem:[#allocation2 + $0x11b0] sm:$0xff]
    %v944 = vld [vmem:[#allocation2 + $0x11b8] sm:$0xff]
    %v945 = vld [vmem:[#allocation2 + $0x11c0] sm:$0xff]
    %v946 = vld [vmem:[#allocation2 + $0x11c8] sm:$0xff]
    %v947 = vld [vmem:[#allocation2 + $0x11d0] sm:$0xff]
    %v948 = vld [vmem:[#allocation2 + $0x11d8] sm:$0xff]
    %v949 = vld [vmem:[#allocation2 + $0x11e0] sm:$0xff]
    %v950 = vld [vmem:[#allocation2 + $0x11e8] sm:$0xff]
    %v951 = vld [vmem:[#allocation2 + $0x11f0] sm:$0xff]
    %v952 = vld [vmem:[#allocation2 + $0x11f8] sm:$0xff]
    %v953 = vld [vmem:[#allocation2 + $0x1200] sm:$0xff]
    %v954 = vld [vmem:[#allocation2 + $0x1208] sm:$0xff]
    %v955 = vld [vmem:[#allocation2 + $0x1210] sm:$0xff]
    %v956 = vld [vmem:[#allocation2 + $0x1218] sm:$0xff]
    %v957 = vld [vmem:[#allocation2 + $0x1220] sm:$0xff]
    %v958 = vld [vmem:[#allocation2 + $0x1228] sm:$0xff]
    %v959 = vld [vmem:[#allocation2 + $0x1230] sm:$0xff]
    %v960 = vld [vmem:[#allocation2 + $0x1238] sm:$0xff]
    %v961 = vld [vmem:[#allocation2 + $0x1240] sm:$0xff]
    %v962 = vld [vmem:[#allocation2 + $0x1248] sm:$0xff]
    %v963 = vld [vmem:[#allocation2 + $0x1250] sm:$0xff]
    %v964 = vld [vmem:[#allocation2 + $0x1258] sm:$0xff]
    %v965 = vld [vmem:[#allocation2 + $0x1260] sm:$0xff]
    %v966 = vld [vmem:[#allocation2 + $0x1268] sm:$0xff]
    %v967 = vld [vmem:[#allocation2 + $0x1270] sm:$0xff]
    %v968 = vld [vmem:[#allocation2 + $0x1278] sm:$0xff]
    %v969 = vld [vmem:[#allocation2 + $0x1280] sm:$0xff]
    %v970 = vld [vmem:[#allocation2 + $0x1288] sm:$0xff]
    %v971 = vld [vmem:[#allocation2 + $0x1290] sm:$0xff]
    %v972 = vld [vmem:[#allocation2 + $0x1298] sm:$0xff]
    %v973 = vld [vmem:[#allocation2 + $0x12a0] sm:$0xff]
    %v974 = vld [vmem:[#allocation2 + $0x12a8] sm:$0xff]
    %v975 = vld [vmem:[#allocation2 + $0x12b0] sm:$0xff]
    %v976 = vld [vmem:[#allocation2 + $0x12b8] sm:$0xff]
    %v977 = vld [vmem:[#allocation2 + $0x12c0] sm:$0xff]
    %v978 = vld [vmem:[#allocation2 + $0x12c8] sm:$0xff]
    %v979 = vld [vmem:[#allocation2 + $0x12d0] sm:$0xff]
    %v980 = vld [vmem:[#allocation2 + $0x12d8] sm:$0xff]
    %v981 = vld [vmem:[#allocation2 + $0x12e0] sm:$0xff]
    %v982 = vld [vmem:[#allocation2 + $0x12e8] sm:$0xff]
    %v983 = vld [vmem:[#allocation2 + $0x12f0] sm:$0xff]
    %v984 = vld [vmem:[#allocation2 + $0x12f8] sm:$0xff]
    %v985 = vld [vmem:[#allocation2 + $0x1300] sm:$0xff]
    %v986 = vld [vmem:[#allocation2 + $0x1308] sm:$0xff]
    %v987 = vld [vmem:[#allocation2 + $0x1310] sm:$0xff]
    %v988 = vld [vmem:[#allocation2 + $0x1318] sm:$0xff]
    %v989 = vld [vmem:[#allocation2 + $0x1320] sm:$0xff]
    %v990 = vld [vmem:[#allocation2 + $0x1328] sm:$0xff]
    %v991 = vld [vmem:[#allocation2 + $0x1330] sm:$0xff]
    %v992 = vld [vmem:[#allocation2 + $0x1338] sm:$0xff]
    %v993 = vld [vmem:[#allocation2 + $0x1340] sm:$0xff]
    %v994 = vld [vmem:[#allocation2 + $0x1348] sm:$0xff]
    %v995 = vld [vmem:[#allocation2 + $0x1350] sm:$0xff]
    %v996 = vld [vmem:[#allocation2 + $0x1358] sm:$0xff]
    %v997 = vld [vmem:[#allocation2 + $0x1360] sm:$0xff]
    %v998 = vld [vmem:[#allocation2 + $0x1368] sm:$0xff]
    %v999 = vld [vmem:[#allocation2 + $0x1370] sm:$0xff]
    %v1000 = vld [vmem:[#allocation2 + $0x1378] sm:$0xff]
    %v1001 = vld [vmem:[#allocation2 + $0x1380] sm:$0xff]
    %v1002 = vld [vmem:[#allocation2 + $0x1388] sm:$0xff]
    %v1003 = vld [vmem:[#allocation2 + $0x1390] sm:$0xff]
    %v1004 = vld [vmem:[#allocation2 + $0x1398] sm:$0xff]
    %v1005 = vld [vmem:[#allocation2 + $0x13a0] sm:$0xff]
    %v1006 = vld [vmem:[#allocation2 + $0x13a8] sm:$0xff]
    %v1007 = vld [vmem:[#allocation2 + $0x13b0] sm:$0xff]
    %v1008 = vld [vmem:[#allocation2 + $0x13b8] sm:$0xff]
    %v1009 = vld [vmem:[#allocation2 + $0x13c0] sm:$0xff]
    %v1010 = vld [vmem:[#allocation2 + $0x13c8] sm:$0xff]
    %v1011 = vld [vmem:[#allocation2 + $0x13d0] sm:$0xff]
    %v1012 = vld [vmem:[#allocation2 + $0x13d8] sm:$0xff]
    %v1013 = vld [vmem:[#allocation2 + $0x13e0] sm:$0xff]
    %v1014 = vld [vmem:[#allocation2 + $0x13e8] sm:$0xff]
    %v1015 = vld [vmem:[#allocation2 + $0x13f0] sm:$0xff]
    %v1016 = vld [vmem:[#allocation2 + $0x13f8] sm:$0xff]
    %v1017 = vld [vmem:[#allocation2 + $0x1400] sm:$0xff]
    %v1018 = vld [vmem:[#allocation2 + $0x1408] sm:$0xff]
    %v1019 = vld [vmem:[#allocation2 + $0x1410] sm:$0xff]
    %v1020 = vld [vmem:[#allocation2 + $0x1418] sm:$0xff]
    %v1021 = vld [vmem:[#allocation2 + $0x1420] sm:$0xff]
    %v1022 = vld [vmem:[#allocation2 + $0x1428] sm:$0xff]
    %v1023 = vld [vmem:[#allocation2 + $0x1430] sm:$0xff]
    %v1024 = vld [vmem:[#allocation2 + $0x1438] sm:$0xff]
    %v1025 = vld [vmem:[#allocation2 + $0x1440] sm:$0xff]
    %v1026 = vld [vmem:[#allocation2 + $0x1448] sm:$0xff]
    %v1027 = vld [vmem:[#allocation2 + $0x1450] sm:$0xff]
    %v1028 = vld [vmem:[#allocation2 + $0x1458] sm:$0xff]
    %v1029 = vld [vmem:[#allocation2 + $0x1460] sm:$0xff]
    %v1030 = vld [vmem:[#allocation2 + $0x1468] sm:$0xff]
    %v1031 = vld [vmem:[#allocation2 + $0x1470] sm:$0xff]
    %v1032 = vld [vmem:[#allocation2 + $0x1478] sm:$0xff]
    %v1033 = vld [vmem:[#allocation2 + $0x1480] sm:$0xff]
    %v1034 = vld [vmem:[#allocation2 + $0x1488] sm:$0xff]
    %v1035 = vld [vmem:[#allocation2 + $0x1490] sm:$0xff]
    %v1036 = vld [vmem:[#allocation2 + $0x1498] sm:$0xff]
    %v1037 = vld [vmem:[#allocation2 + $0x14a0] sm:$0xff]
    %v1038 = vld [vmem:[#allocation2 + $0x14a8] sm:$0xff]
    %v1039 = vld [vmem:[#allocation2 + $0x14b0] sm:$0xff]
    %v1040 = vld [vmem:[#allocation2 + $0x14b8] sm:$0xff]
    %v1041 = vld [vmem:[#allocation2 + $0x14c0] sm:$0xff]
    %v1042 = vld [vmem:[#allocation2 + $0x14c8] sm:$0xff]
    %v1043 = vld [vmem:[#allocation2 + $0x14d0] sm:$0xff]
    %v1044 = vld [vmem:[#allocation2 + $0x14d8] sm:$0xff]
    %v1045 = vld [vmem:[#allocation2 + $0x14e0] sm:$0xff]
    %v1046 = vld [vmem:[#allocation2 + $0x14e8] sm:$0xff]
    %v1047 = vld [vmem:[#allocation2 + $0x14f0] sm:$0xff]
    %v1048 = vld [vmem:[#allocation2 + $0x14f8] sm:$0xff]
    %v1049 = vld [vmem:[#allocation2 + $0x1500] sm:$0xff]
    %v1050 = vld [vmem:[#allocation2 + $0x1508] sm:$0xff]
    %v1051 = vld [vmem:[#allocation2 + $0x1510] sm:$0xff]
    %v1052 = vld [vmem:[#allocation2 + $0x1518] sm:$0xff]
    %v1053 = vld [vmem:[#allocation2 + $0x1520] sm:$0xff]
    %v1054 = vld [vmem:[#allocation2 + $0x1528] sm:$0xff]
    %v1055 = vld [vmem:[#allocation2 + $0x1530] sm:$0xff]
    %v1056 = vld [vmem:[#allocation2 + $0x1538] sm:$0xff]
    %v1057 = vld [vmem:[#allocation2 + $0x1540] sm:$0xff]
    %v1058 = vld [vmem:[#allocation2 + $0x1548] sm:$0xff]
    %v1059 = vld [vmem:[#allocation2 + $0x1550] sm:$0xff]
    %v1060 = vld [vmem:[#allocation2 + $0x1558] sm:$0xff]
    %v1061 = vld [vmem:[#allocation2 + $0x1560] sm:$0xff]
    %v1062 = vld [vmem:[#allocation2 + $0x1568] sm:$0xff]
    %v1063 = vld [vmem:[#allocation2 + $0x1570] sm:$0xff]
    %v1064 = vld [vmem:[#allocation2 + $0x1578] sm:$0xff]
    %v1065 = vld [vmem:[#allocation2 + $0x1580] sm:$0xff]
    %v1066 = vld [vmem:[#allocation2 + $0x1588] sm:$0xff]
    %v1067 = vld [vmem:[#allocation2 + $0x1590] sm:$0xff]
    %v1068 = vld [vmem:[#allocation2 + $0x1598] sm:$0xff]
    %v1069 = vld [vmem:[#allocation2 + $0x15a0] sm:$0xff]
    %v1070 = vld [vmem:[#allocation2 + $0x15a8] sm:$0xff]
    %v1071 = vld [vmem:[#allocation2 + $0x15b0] sm:$0xff]
    %v1072 = vld [vmem:[#allocation2 + $0x15b8] sm:$0xff]
    %v1073 = vld [vmem:[#allocation2 + $0x15c0] sm:$0xff]
    %v1074 = vld [vmem:[#allocation2 + $0x15c8] sm:$0xff]
    %v1075 = vld [vmem:[#allocation2 + $0x15d0] sm:$0xff]
    %v1076 = vld [vmem:[#allocation2 + $0x15d8] sm:$0xff]
    %v1077 = vld [vmem:[#allocation2 + $0x15e0] sm:$0xff]
    %v1078 = vld [vmem:[#allocation2 + $0x15e8] sm:$0xff]
    %v1079 = vld [vmem:[#allocation2 + $0x15f0] sm:$0xff]
    %v1080 = vld [vmem:[#allocation2 + $0x15f8] sm:$0xff]
    %v1081 = vld [vmem:[#allocation2 + $0x1600] sm:$0xff]
    %v1082 = vld [vmem:[#allocation2 + $0x1608] sm:$0xff]
    %v1083 = vld [vmem:[#allocation2 + $0x1610] sm:$0xff]
    %v1084 = vld [vmem:[#allocation2 + $0x1618] sm:$0xff]
    %v1085 = vld [vmem:[#allocation2 + $0x1620] sm:$0xff]
    %v1086 = vld [vmem:[#allocation2 + $0x1628] sm:$0xff]
    %v1087 = vld [vmem:[#allocation2 + $0x1630] sm:$0xff]
    %v1088 = vld [vmem:[#allocation2 + $0x1638] sm:$0xff]
    %v1089 = vld [vmem:[#allocation2 + $0x1640] sm:$0xff]
    %v1090 = vld [vmem:[#allocation2 + $0x1648] sm:$0xff]
    %v1091 = vld [vmem:[#allocation2 + $0x1650] sm:$0xff]
    %v1092 = vld [vmem:[#allocation2 + $0x1658] sm:$0xff]
    %v1093 = vld [vmem:[#allocation2 + $0x1660] sm:$0xff]
    %v1094 = vld [vmem:[#allocation2 + $0x1668] sm:$0xff]
    %v1095 = vld [vmem:[#allocation2 + $0x1670] sm:$0xff]
    %v1096 = vld [vmem:[#allocation2 + $0x1678] sm:$0xff]
    %v1097 = vld [vmem:[#allocation2 + $0x1680] sm:$0xff]
    %v1098 = vld [vmem:[#allocation2 + $0x1688] sm:$0xff]
    %v1099 = vld [vmem:[#allocation2 + $0x1690] sm:$0xff]
    %v1100 = vld [vmem:[#allocation2 + $0x1698] sm:$0xff]
    %v1101 = vld [vmem:[#allocation2 + $0x16a0] sm:$0xff]
    %v1102 = vld [vmem:[#allocation2 + $0x16a8] sm:$0xff]
    %v1103 = vld [vmem:[#allocation2 + $0x16b0] sm:$0xff]
    %v1104 = vld [vmem:[#allocation2 + $0x16b8] sm:$0xff]
    %v1105 = vld [vmem:[#allocation2 + $0x16c0] sm:$0xff]
    %v1106 = vld [vmem:[#allocation2 + $0x16c8] sm:$0xff]
    %v1107 = vld [vmem:[#allocation2 + $0x16d0] sm:$0xff]
    %v1108 = vld [vmem:[#allocation2 + $0x16d8] sm:$0xff]
    %v1109 = vld [vmem:[#allocation2 + $0x16e0] sm:$0xff]
    %v1110 = vld [vmem:[#allocation2 + $0x16e8] sm:$0xff]
    %v1111 = vld [vmem:[#allocation2 + $0x16f0] sm:$0xff]
    %v1112 = vld [vmem:[#allocation2 + $0x16f8] sm:$0xff]
    %v1113 = vld [vmem:[#allocation2 + $0x1700] sm:$0xff]
    %v1114 = vld [vmem:[#allocation2 + $0x1708] sm:$0xff]
    %v1115 = vld [vmem:[#allocation2 + $0x1710] sm:$0xff]
    %v1116 = vld [vmem:[#allocation2 + $0x1718] sm:$0xff]
    %v1117 = vld [vmem:[#allocation2 + $0x1720] sm:$0xff]
    %v1118 = vld [vmem:[#allocation2 + $0x1728] sm:$0xff]
    %v1119 = vld [vmem:[#allocation2 + $0x1730] sm:$0xff]
    %v1120 = vld [vmem:[#allocation2 + $0x1738] sm:$0xff]
    %v1121 = vld [vmem:[#allocation2 + $0x1740] sm:$0xff]
    %v1122 = vld [vmem:[#allocation2 + $0x1748] sm:$0xff]
    %v1123 = vld [vmem:[#allocation2 + $0x1750] sm:$0xff]
    %v1124 = vld [vmem:[#allocation2 + $0x1758] sm:$0xff]
    %v1125 = vld [vmem:[#allocation2 + $0x1760] sm:$0xff]
    %v1126 = vld [vmem:[#allocation2 + $0x1768] sm:$0xff]
    %v1127 = vld [vmem:[#allocation2 + $0x1770] sm:$0xff]
    %v1128 = vld [vmem:[#allocation2 + $0x1778] sm:$0xff]
    %v1129 = vld [vmem:[#allocation2 + $0x1780] sm:$0xff]
    %v1130 = vld [vmem:[#allocation2 + $0x1788] sm:$0xff]
    %v1131 = vld [vmem:[#allocation2 + $0x1790] sm:$0xff]
    %v1132 = vld [vmem:[#allocation2 + $0x1798] sm:$0xff]
    %v1133 = vld [vmem:[#allocation2 + $0x17a0] sm:$0xff]
    %v1134 = vld [vmem:[#allocation2 + $0x17a8] sm:$0xff]
    %v1135 = vld [vmem:[#allocation2 + $0x17b0] sm:$0xff]
    %v1136 = vld [vmem:[#allocation2 + $0x17b8] sm:$0xff]
    %v1137 = vld [vmem:[#allocation2 + $0x17c0] sm:$0xff]
    %v1138 = vld [vmem:[#allocation2 + $0x17c8] sm:$0xff]
    %v1139 = vld [vmem:[#allocation2 + $0x17d0] sm:$0xff]
    %v1140 = vld [vmem:[#allocation2 + $0x17d8] sm:$0xff]
    %v1141 = vld [vmem:[#allocation2 + $0x17e0] sm:$0xff]
    %v1142 = vld [vmem:[#allocation2 + $0x17e8] sm:$0xff]
    %v1143 = vld [vmem:[#allocation2 + $0x17f0] sm:$0xff]
    %v1144 = vld [vmem:[#allocation2 + $0x17f8] sm:$0xff]
    %v1145 = vld [vmem:[#allocation2 + $0x1800] sm:$0xff]
    %v1146 = vld [vmem:[#allocation2 + $0x1808] sm:$0xff]
    %v1147 = vld [vmem:[#allocation2 + $0x1810] sm:$0xff]
    %v1148 = vld [vmem:[#allocation2 + $0x1818] sm:$0xff]
    %v1149 = vld [vmem:[#allocation2 + $0x1820] sm:$0xff]
    %v1150 = vld [vmem:[#allocation2 + $0x1828] sm:$0xff]
    %v1151 = vld [vmem:[#allocation2 + $0x1830] sm:$0xff]
    %v1152 = vld [vmem:[#allocation2 + $0x1838] sm:$0xff]
    %v1153 = vld [vmem:[#allocation2 + $0x1840] sm:$0xff]
    %v1154 = vld [vmem:[#allocation2 + $0x1848] sm:$0xff]
    %v1155 = vld [vmem:[#allocation2 + $0x1850] sm:$0xff]
    %v1156 = vld [vmem:[#allocation2 + $0x1858] sm:$0xff]
    %v1157 = vld [vmem:[#allocation2 + $0x1860] sm:$0xff]
    %v1158 = vld [vmem:[#allocation2 + $0x1868] sm:$0xff]
    %v1159 = vld [vmem:[#allocation2 + $0x1870] sm:$0xff]
    %v1160 = vld [vmem:[#allocation2 + $0x1878] sm:$0xff]
    %v1161 = vld [vmem:[#allocation2 + $0x1880] sm:$0xff]
    %v1162 = vld [vmem:[#allocation2 + $0x1888] sm:$0xff]
    %v1163 = vld [vmem:[#allocation2 + $0x1890] sm:$0xff]
    %v1164 = vld [vmem:[#allocation2 + $0x1898] sm:$0xff]
    %v1165 = vld [vmem:[#allocation2 + $0x18a0] sm:$0xff]
    %v1166 = vld [vmem:[#allocation2 + $0x18a8] sm:$0xff]
    %v1167 = vld [vmem:[#allocation2 + $0x18b0] sm:$0xff]
    %v1168 = vld [vmem:[#allocation2 + $0x18b8] sm:$0xff]
    %v1169 = vld [vmem:[#allocation2 + $0x18c0] sm:$0xff]
    %v1170 = vld [vmem:[#allocation2 + $0x18c8] sm:$0xff]
    %v1171 = vld [vmem:[#allocation2 + $0x18d0] sm:$0xff]
    %v1172 = vld [vmem:[#allocation2 + $0x18d8] sm:$0xff]
    %v1173 = vld [vmem:[#allocation2 + $0x18e0] sm:$0xff]
    %v1174 = vld [vmem:[#allocation2 + $0x18e8] sm:$0xff]
    %v1175 = vld [vmem:[#allocation2 + $0x18f0] sm:$0xff]
    %v1176 = vld [vmem:[#allocation2 + $0x18f8] sm:$0xff]
    %v1177 = vld [vmem:[#allocation2 + $0x1900] sm:$0xff]
    %v1178 = vld [vmem:[#allocation2 + $0x1908] sm:$0xff]
    %v1179 = vld [vmem:[#allocation2 + $0x1910] sm:$0xff]
    %v1180 = vld [vmem:[#allocation2 + $0x1918] sm:$0xff]
    %v1181 = vld [vmem:[#allocation2 + $0x1920] sm:$0xff]
    %v1182 = vld [vmem:[#allocation2 + $0x1928] sm:$0xff]
    %v1183 = vld [vmem:[#allocation2 + $0x1930] sm:$0xff]
    %v1184 = vld [vmem:[#allocation2 + $0x1938] sm:$0xff]
    %v1185 = vld [vmem:[#allocation2 + $0x1940] sm:$0xff]
    %v1186 = vld [vmem:[#allocation2 + $0x1948] sm:$0xff]
    %v1187 = vld [vmem:[#allocation2 + $0x1950] sm:$0xff]
    %v1188 = vld [vmem:[#allocation2 + $0x1958] sm:$0xff]
    %v1189 = vld [vmem:[#allocation2 + $0x1960] sm:$0xff]
    %v1190 = vld [vmem:[#allocation2 + $0x1968] sm:$0xff]
    %v1191 = vld [vmem:[#allocation2 + $0x1970] sm:$0xff]
    %v1192 = vld [vmem:[#allocation2 + $0x1978] sm:$0xff]
    %v1193 = vld [vmem:[#allocation2 + $0x1980] sm:$0xff]
    %v1194 = vld [vmem:[#allocation2 + $0x1988] sm:$0xff]
    %v1195 = vld [vmem:[#allocation2 + $0x1990] sm:$0xff]
    %v1196 = vld [vmem:[#allocation2 + $0x1998] sm:$0xff]
    %v1197 = vld [vmem:[#allocation2 + $0x19a0] sm:$0xff]
    %v1198 = vld [vmem:[#allocation2 + $0x19a8] sm:$0xff]
    %v1199 = vld [vmem:[#allocation2 + $0x19b0] sm:$0xff]
    %v1200 = vld [vmem:[#allocation2 + $0x19b8] sm:$0xff]
    %v1201 = vld [vmem:[#allocation2 + $0x19c0] sm:$0xff]
    %v1202 = vld [vmem:[#allocation2 + $0x19c8] sm:$0xff]
    %v1203 = vld [vmem:[#allocation2 + $0x19d0] sm:$0xff]
    %v1204 = vld [vmem:[#allocation2 + $0x19d8] sm:$0xff]
    %v1205 = vld [vmem:[#allocation2 + $0x19e0] sm:$0xff]
    %v1206 = vld [vmem:[#allocation2 + $0x19e8] sm:$0xff]
    %v1207 = vld [vmem:[#allocation2 + $0x19f0] sm:$0xff]
    %v1208 = vld [vmem:[#allocation2 + $0x19f8] sm:$0xff]
    %v1209 = vld [vmem:[#allocation2 + $0x1a00] sm:$0xff]
    %v1210 = vld [vmem:[#allocation2 + $0x1a08] sm:$0xff]
    %v1211 = vld [vmem:[#allocation2 + $0x1a10] sm:$0xff]
    %v1212 = vld [vmem:[#allocation2 + $0x1a18] sm:$0xff]
    %v1213 = vld [vmem:[#allocation2 + $0x1a20] sm:$0xff]
    %v1214 = vld [vmem:[#allocation2 + $0x1a28] sm:$0xff]
    %v1215 = vld [vmem:[#allocation2 + $0x1a30] sm:$0xff]
    %v1216 = vld [vmem:[#allocation2 + $0x1a38] sm:$0xff]
    %v1217 = vld [vmem:[#allocation2 + $0x1a40] sm:$0xff]
    %v1218 = vld [vmem:[#allocation2 + $0x1a48] sm:$0xff]
    %v1219 = vld [vmem:[#allocation2 + $0x1a50] sm:$0xff]
    %v1220 = vld [vmem:[#allocation2 + $0x1a58] sm:$0xff]
    %v1221 = vld [vmem:[#allocation2 + $0x1a60] sm:$0xff]
    %v1222 = vld [vmem:[#allocation2 + $0x1a68] sm:$0xff]
    %v1223 = vld [vmem:[#allocation2 + $0x1a70] sm:$0xff]
    %v1224 = vld [vmem:[#allocation2 + $0x1a78] sm:$0xff]
    %v1225 = vld [vmem:[#allocation2 + $0x1a80] sm:$0xff]
    %v1226 = vld [vmem:[#allocation2 + $0x1a88] sm:$0xff]
    %v1227 = vld [vmem:[#allocation2 + $0x1a90] sm:$0xff]
    %v1228 = vld [vmem:[#allocation2 + $0x1a98] sm:$0xff]
    %v1229 = vld [vmem:[#allocation2 + $0x1aa0] sm:$0xff]
    %v1230 = vld [vmem:[#allocation2 + $0x1aa8] sm:$0xff]
    %v1231 = vld [vmem:[#allocation2 + $0x1ab0] sm:$0xff]
    %v1232 = vld [vmem:[#allocation2 + $0x1ab8] sm:$0xff]
    %v1233 = vld [vmem:[#allocation2 + $0x1ac0] sm:$0xff]
    %v1234 = vld [vmem:[#allocation2 + $0x1ac8] sm:$0xff]
    %v1235 = vld [vmem:[#allocation2 + $0x1ad0] sm:$0xff]
    %v1236 = vld [vmem:[#allocation2 + $0x1ad8] sm:$0xff]
    %v1237 = vld [vmem:[#allocation2 + $0x1ae0] sm:$0xff]
    %v1238 = vld [vmem:[#allocation2 + $0x1ae8] sm:$0xff]
    %v1239 = vld [vmem:[#allocation2 + $0x1af0] sm:$0xff]
    %v1240 = vld [vmem:[#allocation2 + $0x1af8] sm:$0xff]
    %v1241 = vld [vmem:[#allocation2 + $0x1b00] sm:$0xff]
    %v1242 = vld [vmem:[#allocation2 + $0x1b08] sm:$0xff]
    %v1243 = vld [vmem:[#allocation2 + $0x1b10] sm:$0xff]
    %v1244 = vld [vmem:[#allocation2 + $0x1b18] sm:$0xff]
    %v1245 = vld [vmem:[#allocation2 + $0x1b20] sm:$0xff]
    %v1246 = vld [vmem:[#allocation2 + $0x1b28] sm:$0xff]
    %v1247 = vld [vmem:[#allocation2 + $0x1b30] sm:$0xff]
    %v1248 = vld [vmem:[#allocation2 + $0x1b38] sm:$0xff]
    %v1249 = vld [vmem:[#allocation2 + $0x1b40] sm:$0xff]
    %v1250 = vld [vmem:[#allocation2 + $0x1b48] sm:$0xff]
    %v1251 = vld [vmem:[#allocation2 + $0x1b50] sm:$0xff]
    %v1252 = vld [vmem:[#allocation2 + $0x1b58] sm:$0xff]
    %v1253 = vld [vmem:[#allocation2 + $0x1b60] sm:$0xff]
    %v1254 = vld [vmem:[#allocation2 + $0x1b68] sm:$0xff]
    %v1255 = vld [vmem:[#allocation2 + $0x1b70] sm:$0xff]
    %v1256 = vld [vmem:[#allocation2 + $0x1b78] sm:$0xff]
    %v1257 = vld [vmem:[#allocation2 + $0x1b80] sm:$0xff]
    %v1258 = vld [vmem:[#allocation2 + $0x1b88] sm:$0xff]
    %v1259 = vld [vmem:[#allocation2 + $0x1b90] sm:$0xff]
    %v1260 = vld [vmem:[#allocation2 + $0x1b98] sm:$0xff]
    %v1261 = vld [vmem:[#allocation2 + $0x1ba0] sm:$0xff]
    %v1262 = vld [vmem:[#allocation2 + $0x1ba8] sm:$0xff]
    %v1263 = vld [vmem:[#allocation2 + $0x1bb0] sm:$0xff]
    %v1264 = vld [vmem:[#allocation2 + $0x1bb8] sm:$0xff]
    %v1265 = vld [vmem:[#allocation2 + $0x1bc0] sm:$0xff]
    %v1266 = vld [vmem:[#allocation2 + $0x1bc8] sm:$0xff]
    %v1267 = vld [vmem:[#allocation2 + $0x1bd0] sm:$0xff]
    %v1268 = vld [vmem:[#allocation2 + $0x1bd8] sm:$0xff]
    %v1269 = vld [vmem:[#allocation2 + $0x1be0] sm:$0xff]
    %v1270 = vld [vmem:[#allocation2 + $0x1be8] sm:$0xff]
    %v1271 = vld [vmem:[#allocation2 + $0x1bf0] sm:$0xff]
    %v1272 = vld [vmem:[#allocation2 + $0x1bf8] sm:$0xff]
    %v1273 = vld [vmem:[#allocation2 + $0x1c00] sm:$0xff]
    %v1274 = vld [vmem:[#allocation2 + $0x1c08] sm:$0xff]
    %v1275 = vld [vmem:[#allocation2 + $0x1c10] sm:$0xff]
    %v1276 = vld [vmem:[#allocation2 + $0x1c18] sm:$0xff]
    %v1277 = vld [vmem:[#allocation2 + $0x1c20] sm:$0xff]
    %v1278 = vld [vmem:[#allocation2 + $0x1c28] sm:$0xff]
    %v1279 = vld [vmem:[#allocation2 + $0x1c30] sm:$0xff]
    %v1280 = vld [vmem:[#allocation2 + $0x1c38] sm:$0xff]
    %v1281 = vld [vmem:[#allocation2 + $0x1c40] sm:$0xff]
    %v1282 = vld [vmem:[#allocation2 + $0x1c48] sm:$0xff]
    %v1283 = vld [vmem:[#allocation2 + $0x1c50] sm:$0xff]
    %v1284 = vld [vmem:[#allocation2 + $0x1c58] sm:$0xff]
    %v1285 = vld [vmem:[#allocation2 + $0x1c60] sm:$0xff]
    %v1286 = vld [vmem:[#allocation2 + $0x1c68] sm:$0xff]
    %v1287 = vld [vmem:[#allocation2 + $0x1c70] sm:$0xff]
    %v1288 = vld [vmem:[#allocation2 + $0x1c78] sm:$0xff]
    %v1289 = vld [vmem:[#allocation2 + $0x1c80] sm:$0xff]
    %v1290 = vld [vmem:[#allocation2 + $0x1c88] sm:$0xff]
    %v1291 = vld [vmem:[#allocation2 + $0x1c90] sm:$0xff]
    %v1292 = vld [vmem:[#allocation2 + $0x1c98] sm:$0xff]
    %v1293 = vld [vmem:[#allocation2 + $0x1ca0] sm:$0xff]
    %v1294 = vld [vmem:[#allocation2 + $0x1ca8] sm:$0xff]
    %v1295 = vld [vmem:[#allocation2 + $0x1cb0] sm:$0xff]
    %v1296 = vld [vmem:[#allocation2 + $0x1cb8] sm:$0xff]
    %v1297 = vld [vmem:[#allocation2 + $0x1cc0] sm:$0xff]
    %v1298 = vld [vmem:[#allocation2 + $0x1cc8] sm:$0xff]
    %v1299 = vld [vmem:[#allocation2 + $0x1cd0] sm:$0xff]
    %v1300 = vld [vmem:[#allocation2 + $0x1cd8] sm:$0xff]
    %v1301 = vld [vmem:[#allocation2 + $0x1ce0] sm:$0xff]
    %v1302 = vld [vmem:[#allocation2 + $0x1ce8] sm:$0xff]
    %v1303 = vld [vmem:[#allocation2 + $0x1cf0] sm:$0xff]
    %v1304 = vld [vmem:[#allocation2 + $0x1cf8] sm:$0xff]
    %v1305 = vld [vmem:[#allocation2 + $0x1d00] sm:$0xff]
    %v1306 = vld [vmem:[#allocation2 + $0x1d08] sm:$0xff]
    %v1307 = vld [vmem:[#allocation2 + $0x1d10] sm:$0xff]
    %v1308 = vld [vmem:[#allocation2 + $0x1d18] sm:$0xff]
    %v1309 = vld [vmem:[#allocation2 + $0x1d20] sm:$0xff]
    %v1310 = vld [vmem:[#allocation2 + $0x1d28] sm:$0xff]
    %v1311 = vld [vmem:[#allocation2 + $0x1d30] sm:$0xff]
    %v1312 = vld [vmem:[#allocation2 + $0x1d38] sm:$0xff]
    %v1313 = vld [vmem:[#allocation2 + $0x1d40] sm:$0xff]
    %v1314 = vld [vmem:[#allocation2 + $0x1d48] sm:$0xff]
    %v1315 = vld [vmem:[#allocation2 + $0x1d50] sm:$0xff]
    %v1316 = vld [vmem:[#allocation2 + $0x1d58] sm:$0xff]
    %v1317 = vld [vmem:[#allocation2 + $0x1d60] sm:$0xff]
    %v1318 = vld [vmem:[#allocation2 + $0x1d68] sm:$0xff]
    %v1319 = vld [vmem:[#allocation2 + $0x1d70] sm:$0xff]
    %v1320 = vld [vmem:[#allocation2 + $0x1d78] sm:$0xff]
    %v1321 = vld [vmem:[#allocation2 + $0x1d80] sm:$0xff]
    %v1322 = vld [vmem:[#allocation2 + $0x1d88] sm:$0xff]
    %v1323 = vld [vmem:[#allocation2 + $0x1d90] sm:$0xff]
    %v1324 = vld [vmem:[#allocation2 + $0x1d98] sm:$0xff]
    %v1325 = vld [vmem:[#allocation2 + $0x1da0] sm:$0xff]
    %v1326 = vld [vmem:[#allocation2 + $0x1da8] sm:$0xff]
    %v1327 = vld [vmem:[#allocation2 + $0x1db0] sm:$0xff]
    %v1328 = vld [vmem:[#allocation2 + $0x1db8] sm:$0xff]
    %v1329 = vld [vmem:[#allocation2 + $0x1dc0] sm:$0xff]
    %v1330 = vld [vmem:[#allocation2 + $0x1dc8] sm:$0xff]
    %v1331 = vld [vmem:[#allocation2 + $0x1dd0] sm:$0xff]
    %v1332 = vld [vmem:[#allocation2 + $0x1dd8] sm:$0xff]
    %v1333 = vld [vmem:[#allocation2 + $0x1de0] sm:$0xff]
    %v1334 = vld [vmem:[#allocation2 + $0x1de8] sm:$0xff]
    %v1335 = vld [vmem:[#allocation2 + $0x1df0] sm:$0xff]
    %v1336 = vld [vmem:[#allocation2 + $0x1df8] sm:$0xff]
    %v1337 = vld [vmem:[#allocation2 + $0x1e00] sm:$0xff]
    %v1338 = vld [vmem:[#allocation2 + $0x1e08] sm:$0xff]
    %v1339 = vld [vmem:[#allocation2 + $0x1e10] sm:$0xff]
    %v1340 = vld [vmem:[#allocation2 + $0x1e18] sm:$0xff]
    %v1341 = vld [vmem:[#allocation2 + $0x1e20] sm:$0xff]
    %v1342 = vld [vmem:[#allocation2 + $0x1e28] sm:$0xff]
    %v1343 = vld [vmem:[#allocation2 + $0x1e30] sm:$0xff]
    %v1344 = vld [vmem:[#allocation2 + $0x1e38] sm:$0xff]
    %v1345 = vld [vmem:[#allocation2 + $0x1e40] sm:$0xff]
    %v1346 = vld [vmem:[#allocation2 + $0x1e48] sm:$0xff]
    %v1347 = vld [vmem:[#allocation2 + $0x1e50] sm:$0xff]
    %v1348 = vld [vmem:[#allocation2 + $0x1e58] sm:$0xff]
    %v1349 = vld [vmem:[#allocation2 + $0x1e60] sm:$0xff]
    %v1350 = vld [vmem:[#allocation2 + $0x1e68] sm:$0xff]
    %v1351 = vld [vmem:[#allocation2 + $0x1e70] sm:$0xff]
    %v1352 = vld [vmem:[#allocation2 + $0x1e78] sm:$0xff]
    %v1353 = vld [vmem:[#allocation2 + $0x1e80] sm:$0xff]
    %v1354 = vld [vmem:[#allocation2 + $0x1e88] sm:$0xff]
    %v1355 = vld [vmem:[#allocation2 + $0x1e90] sm:$0xff]
    %v1356 = vld [vmem:[#allocation2 + $0x1e98] sm:$0xff]
    %v1357 = vld [vmem:[#allocation2 + $0x1ea0] sm:$0xff]
    %v1358 = vld [vmem:[#allocation2 + $0x1ea8] sm:$0xff]
    %v1359 = vld [vmem:[#allocation2 + $0x1eb0] sm:$0xff]
    %v1360 = vld [vmem:[#allocation2 + $0x1eb8] sm:$0xff]
    %v1361 = vld [vmem:[#allocation2 + $0x1ec0] sm:$0xff]
    %v1362 = vld [vmem:[#allocation2 + $0x1ec8] sm:$0xff]
    %v1363 = vld [vmem:[#allocation2 + $0x1ed0] sm:$0xff]
    %v1364 = vld [vmem:[#allocation2 + $0x1ed8] sm:$0xff]
    %v1365 = vld [vmem:[#allocation2 + $0x1ee0] sm:$0xff]
    %v1366 = vld [vmem:[#allocation2 + $0x1ee8] sm:$0xff]
    %v1367 = vld [vmem:[#allocation2 + $0x1ef0] sm:$0xff]
    %v1368 = vld [vmem:[#allocation2 + $0x1ef8] sm:$0xff]
    %v1369 = vld [vmem:[#allocation2 + $0x1f00] sm:$0xff]
    %v1370 = vld [vmem:[#allocation2 + $0x1f08] sm:$0xff]
    %v1371 = vld [vmem:[#allocation2 + $0x1f10] sm:$0xff]
    %v1372 = vld [vmem:[#allocation2 + $0x1f18] sm:$0xff]
    %v1373 = vld [vmem:[#allocation2 + $0x1f20] sm:$0xff]
    %v1374 = vld [vmem:[#allocation2 + $0x1f28] sm:$0xff]
    %v1375 = vld [vmem:[#allocation2 + $0x1f30] sm:$0xff]
    %v1376 = vld [vmem:[#allocation2 + $0x1f38] sm:$0xff]
    %v1377 = vld [vmem:[#allocation2 + $0x1f40] sm:$0xff]
    %v1378 = vld [vmem:[#allocation2 + $0x1f48] sm:$0xff]
    %v1379 = vld [vmem:[#allocation2 + $0x1f50] sm:$0xff]
    %v1380 = vld [vmem:[#allocation2 + $0x1f58] sm:$0xff]
    %v1381 = vld [vmem:[#allocation2 + $0x1f60] sm:$0xff]
    %v1382 = vld [vmem:[#allocation2 + $0x1f68] sm:$0xff]
    %v1383 = vld [vmem:[#allocation2 + $0x1f70] sm:$0xff]
    %v1384 = vld [vmem:[#allocation2 + $0x1f78] sm:$0xff]
    %v1385 = vld [vmem:[#allocation2 + $0x1f80] sm:$0xff]
    %v1386 = vld [vmem:[#allocation2 + $0x1f88] sm:$0xff]
    %v1387 = vld [vmem:[#allocation2 + $0x1f90] sm:$0xff]
    %v1388 = vld [vmem:[#allocation2 + $0x1f98] sm:$0xff]
    %v1389 = vld [vmem:[#allocation2 + $0x1fa0] sm:$0xff]
    %v1390 = vld [vmem:[#allocation2 + $0x1fa8] sm:$0xff]
    %v1391 = vld [vmem:[#allocation2 + $0x1fb0] sm:$0xff]
    %v1392 = vld [vmem:[#allocation2 + $0x1fb8] sm:$0xff]
    %v1393 = vld [vmem:[#allocation2 + $0x1fc0] sm:$0xff]
    %v1394 = vld [vmem:[#allocation2 + $0x1fc8] sm:$0xff]
    %v1395 = vld [vmem:[#allocation2 + $0x1fd0] sm:$0xff]
    %v1396 = vld [vmem:[#allocation2 + $0x1fd8] sm:$0xff]
    %v1397 = vld [vmem:[#allocation2 + $0x1fe0] sm:$0xff]
    %v1398 = vld [vmem:[#allocation2 + $0x1fe8] sm:$0xff]
    %v1399 = vld [vmem:[#allocation2 + $0x1ff0] sm:$0xff]
    %v1400 = vld [vmem:[#allocation2 + $0x1ff8] sm:$0xff]
    %v1401 = vld [vmem:[#allocation5] sm:$0xff]
    %v1403 = vlaneseq
    %v1404 = vshrl.u32 %v1403, 7
    %v1405 = vsub.s32 0, %v1404
    %v1406 = vrot.slane %v1401, %v1405
    %v1407 = vlaneseq
    %v1408 = vshrl.u32 %v1407, 7
    %v1409 = vsub.s32 1, %v1408
    %v1410 = vrot.slane %v1401, %v1409
    %v1411 = vlaneseq
    %v1412 = vshrl.u32 %v1411, 7
    %v1413 = vsub.s32 2, %v1412
    %v1414 = vrot.slane %v1401, %v1413
    %v1415 = vlaneseq
    %v1416 = vshrl.u32 %v1415, 7
    %v1417 = vsub.s32 3, %v1416
    %v1418 = vrot.slane %v1401, %v1417
    %v1419 = vlaneseq
    %v1420 = vshrl.u32 %v1419, 7
    %v1421 = vsub.s32 4, %v1420
    %v1422 = vrot.slane %v1401, %v1421
    %v1423 = vlaneseq
    %v1424 = vshrl.u32 %v1423, 7
    %v1425 = vsub.s32 5, %v1424
    %v1426 = vrot.slane %v1401, %v1425
    %v1427 = vlaneseq
    %v1428 = vshrl.u32 %v1427, 7
    %v1429 = vsub.s32 6, %v1428
    %v1430 = vrot.slane %v1401, %v1429
    %v1431 = vlaneseq
    %v1432 = vshrl.u32 %v1431, 7
    %v1433 = vsub.s32 7, %v1432
    %v1434 = vrot.slane %v1401, %v1433
    %v2467 = vunpack.c.l.b16 %v377
    %v2468 = vunpack.c.h.b16 %v377
    %v2469 = vunpack.c.l.b16 %v378
    %v2470 = vunpack.c.h.b16 %v378
    %v2471 = vunpack.c.l.b16 %v379
    %v2472 = vunpack.c.h.b16 %v379
    %v2473 = vunpack.c.l.b16 %v380
    %v2474 = vunpack.c.h.b16 %v380
    %v2475 = vunpack.c.l.b16 %v381
    %v2476 = vunpack.c.h.b16 %v381
    %v2477 = vunpack.c.l.b16 %v382
    %v2478 = vunpack.c.h.b16 %v382
    %v2479 = vunpack.c.l.b16 %v383
    %v2480 = vunpack.c.h.b16 %v383
    %v2481 = vunpack.c.l.b16 %v384
    %v2482 = vunpack.c.h.b16 %v384
    %v2483 = vunpack.c.l.b16 %v385
    %v2484 = vunpack.c.h.b16 %v385
    %v2485 = vunpack.c.l.b16 %v386
    %v2486 = vunpack.c.h.b16 %v386
    %v2487 = vunpack.c.l.b16 %v387
    %v2488 = vunpack.c.h.b16 %v387
    %v2489 = vunpack.c.l.b16 %v388
    %v2490 = vunpack.c.h.b16 %v388
    %v2491 = vunpack.c.l.b16 %v389
    %v2492 = vunpack.c.h.b16 %v389
    %v2493 = vunpack.c.l.b16 %v390
    %v2494 = vunpack.c.h.b16 %v390
    %v2495 = vunpack.c.l.b16 %v391
    %v2496 = vunpack.c.h.b16 %v391
    %v2497 = vunpack.c.l.b16 %v392
    %v2498 = vunpack.c.h.b16 %v392
    %v2499 = vunpack.c.l.b16 %v393
    %v2500 = vunpack.c.h.b16 %v393
    %v2501 = vunpack.c.l.b16 %v394
    %v2502 = vunpack.c.h.b16 %v394
    %v2503 = vunpack.c.l.b16 %v395
    %v2504 = vunpack.c.h.b16 %v395
    %v2505 = vunpack.c.l.b16 %v396
    %v2506 = vunpack.c.h.b16 %v396
    %v2507 = vunpack.c.l.b16 %v397
    %v2508 = vunpack.c.h.b16 %v397
    %v2509 = vunpack.c.l.b16 %v398
    %v2510 = vunpack.c.h.b16 %v398
    %v2511 = vunpack.c.l.b16 %v399
    %v2512 = vunpack.c.h.b16 %v399
    %v2513 = vunpack.c.l.b16 %v400
    %v2514 = vunpack.c.h.b16 %v400
    %v2515 = vunpack.c.l.b16 %v401
    %v2516 = vunpack.c.h.b16 %v401
    %v2517 = vunpack.c.l.b16 %v402
    %v2518 = vunpack.c.h.b16 %v402
    %v2519 = vunpack.c.l.b16 %v403
    %v2520 = vunpack.c.h.b16 %v403
    %v2521 = vunpack.c.l.b16 %v404
    %v2522 = vunpack.c.h.b16 %v404
    %v2523 = vunpack.c.l.b16 %v405
    %v2524 = vunpack.c.h.b16 %v405
    %v2525 = vunpack.c.l.b16 %v406
    %v2526 = vunpack.c.h.b16 %v406
    %v2527 = vunpack.c.l.b16 %v407
    %v2528 = vunpack.c.h.b16 %v407
    %v2529 = vunpack.c.l.b16 %v408
    %v2530 = vunpack.c.h.b16 %v408
    %v2531 = vunpack.c.l.b16 %v409
    %v2532 = vunpack.c.h.b16 %v409
    %v2533 = vunpack.c.l.b16 %v410
    %v2534 = vunpack.c.h.b16 %v410
    %v2535 = vunpack.c.l.b16 %v411
    %v2536 = vunpack.c.h.b16 %v411
    %v2537 = vunpack.c.l.b16 %v412
    %v2538 = vunpack.c.h.b16 %v412
    %v2539 = vunpack.c.l.b16 %v413
    %v2540 = vunpack.c.h.b16 %v413
    %v2541 = vunpack.c.l.b16 %v414
    %v2542 = vunpack.c.h.b16 %v414
    %v2543 = vunpack.c.l.b16 %v415
    %v2544 = vunpack.c.h.b16 %v415
    %v2545 = vunpack.c.l.b16 %v416
    %v2546 = vunpack.c.h.b16 %v416
    %v2547 = vunpack.c.l.b16 %v417
    %v2548 = vunpack.c.h.b16 %v417
    %v2549 = vunpack.c.l.b16 %v418
    %v2550 = vunpack.c.h.b16 %v418
    %v2551 = vunpack.c.l.b16 %v419
    %v2552 = vunpack.c.h.b16 %v419
    %v2553 = vunpack.c.l.b16 %v420
    %v2554 = vunpack.c.h.b16 %v420
    %v2555 = vunpack.c.l.b16 %v421
    %v2556 = vunpack.c.h.b16 %v421
    %v2557 = vunpack.c.l.b16 %v422
    %v2558 = vunpack.c.h.b16 %v422
    %v2559 = vunpack.c.l.b16 %v423
    %v2560 = vunpack.c.h.b16 %v423
    %v2561 = vunpack.c.l.b16 %v424
    %v2562 = vunpack.c.h.b16 %v424
    %v2563 = vunpack.c.l.b16 %v425
    %v2564 = vunpack.c.h.b16 %v425
    %v2565 = vunpack.c.l.b16 %v426
    %v2566 = vunpack.c.h.b16 %v426
    %v2567 = vunpack.c.l.b16 %v427
    %v2568 = vunpack.c.h.b16 %v427
    %v2569 = vunpack.c.l.b16 %v428
    %v2570 = vunpack.c.h.b16 %v428
    %v2571 = vunpack.c.l.b16 %v429
    %v2572 = vunpack.c.h.b16 %v429
    %v2573 = vunpack.c.l.b16 %v430
    %v2574 = vunpack.c.h.b16 %v430
    %v2575 = vunpack.c.l.b16 %v431
    %v2576 = vunpack.c.h.b16 %v431
    %v2577 = vunpack.c.l.b16 %v432
    %v2578 = vunpack.c.h.b16 %v432
    %v2579 = vunpack.c.l.b16 %v433
    %v2580 = vunpack.c.h.b16 %v433
    %v2581 = vunpack.c.l.b16 %v434
    %v2582 = vunpack.c.h.b16 %v434
    %v2583 = vunpack.c.l.b16 %v435
    %v2584 = vunpack.c.h.b16 %v435
    %v2585 = vunpack.c.l.b16 %v436
    %v2586 = vunpack.c.h.b16 %v436
    %v2587 = vunpack.c.l.b16 %v437
    %v2588 = vunpack.c.h.b16 %v437
    %v2589 = vunpack.c.l.b16 %v438
    %v2590 = vunpack.c.h.b16 %v438
    %v2591 = vunpack.c.l.b16 %v439
    %v2592 = vunpack.c.h.b16 %v439
    %v2593 = vunpack.c.l.b16 %v440
    %v2594 = vunpack.c.h.b16 %v440
    %v2595 = vunpack.c.l.b16 %v441
    %v2596 = vunpack.c.h.b16 %v441
    %v2597 = vunpack.c.l.b16 %v442
    %v2598 = vunpack.c.h.b16 %v442
    %v2599 = vunpack.c.l.b16 %v443
    %v2600 = vunpack.c.h.b16 %v443
    %v2601 = vunpack.c.l.b16 %v444
    %v2602 = vunpack.c.h.b16 %v444
    %v2603 = vunpack.c.l.b16 %v445
    %v2604 = vunpack.c.h.b16 %v445
    %v2605 = vunpack.c.l.b16 %v446
    %v2606 = vunpack.c.h.b16 %v446
    %v2607 = vunpack.c.l.b16 %v447
    %v2608 = vunpack.c.h.b16 %v447
    %v2609 = vunpack.c.l.b16 %v448
    %v2610 = vunpack.c.h.b16 %v448
    %v2611 = vunpack.c.l.b16 %v449
    %v2612 = vunpack.c.h.b16 %v449
    %v2613 = vunpack.c.l.b16 %v450
    %v2614 = vunpack.c.h.b16 %v450
    %v2615 = vunpack.c.l.b16 %v451
    %v2616 = vunpack.c.h.b16 %v451
    %v2617 = vunpack.c.l.b16 %v452
    %v2618 = vunpack.c.h.b16 %v452
    %v2619 = vunpack.c.l.b16 %v453
    %v2620 = vunpack.c.h.b16 %v453
    %v2621 = vunpack.c.l.b16 %v454
    %v2622 = vunpack.c.h.b16 %v454
    %v2623 = vunpack.c.l.b16 %v455
    %v2624 = vunpack.c.h.b16 %v455
    %v2625 = vunpack.c.l.b16 %v456
    %v2626 = vunpack.c.h.b16 %v456
    %v2627 = vunpack.c.l.b16 %v457
    %v2628 = vunpack.c.h.b16 %v457
    %v2629 = vunpack.c.l.b16 %v458
    %v2630 = vunpack.c.h.b16 %v458
    %v2631 = vunpack.c.l.b16 %v459
    %v2632 = vunpack.c.h.b16 %v459
    %v2633 = vunpack.c.l.b16 %v460
    %v2634 = vunpack.c.h.b16 %v460
    %v2635 = vunpack.c.l.b16 %v461
    %v2636 = vunpack.c.h.b16 %v461
    %v2637 = vunpack.c.l.b16 %v462
    %v2638 = vunpack.c.h.b16 %v462
    %v2639 = vunpack.c.l.b16 %v463
    %v2640 = vunpack.c.h.b16 %v463
    %v2641 = vunpack.c.l.b16 %v464
    %v2642 = vunpack.c.h.b16 %v464
    %v2643 = vunpack.c.l.b16 %v465
    %v2644 = vunpack.c.h.b16 %v465
    %v2645 = vunpack.c.l.b16 %v466
    %v2646 = vunpack.c.h.b16 %v466
    %v2647 = vunpack.c.l.b16 %v467
    %v2648 = vunpack.c.h.b16 %v467
    %v2649 = vunpack.c.l.b16 %v468
    %v2650 = vunpack.c.h.b16 %v468
    %v2651 = vunpack.c.l.b16 %v469
    %v2652 = vunpack.c.h.b16 %v469
    %v2653 = vunpack.c.l.b16 %v470
    %v2654 = vunpack.c.h.b16 %v470
    %v2655 = vunpack.c.l.b16 %v471
    %v2656 = vunpack.c.h.b16 %v471
    %v2657 = vunpack.c.l.b16 %v472
    %v2658 = vunpack.c.h.b16 %v472
    %v2659 = vunpack.c.l.b16 %v473
    %v2660 = vunpack.c.h.b16 %v473
    %v2661 = vunpack.c.l.b16 %v474
    %v2662 = vunpack.c.h.b16 %v474
    %v2663 = vunpack.c.l.b16 %v475
    %v2664 = vunpack.c.h.b16 %v475
    %v2665 = vunpack.c.l.b16 %v476
    %v2666 = vunpack.c.h.b16 %v476
    %v2667 = vunpack.c.l.b16 %v477
    %v2668 = vunpack.c.h.b16 %v477
    %v2669 = vunpack.c.l.b16 %v478
    %v2670 = vunpack.c.h.b16 %v478
    %v2671 = vunpack.c.l.b16 %v479
    %v2672 = vunpack.c.h.b16 %v479
    %v2673 = vunpack.c.l.b16 %v480
    %v2674 = vunpack.c.h.b16 %v480
    %v2675 = vunpack.c.l.b16 %v481
    %v2676 = vunpack.c.h.b16 %v481
    %v2677 = vunpack.c.l.b16 %v482
    %v2678 = vunpack.c.h.b16 %v482
    %v2679 = vunpack.c.l.b16 %v483
    %v2680 = vunpack.c.h.b16 %v483
    %v2681 = vunpack.c.l.b16 %v484
    %v2682 = vunpack.c.h.b16 %v484
    %v2683 = vunpack.c.l.b16 %v485
    %v2684 = vunpack.c.h.b16 %v485
    %v2685 = vunpack.c.l.b16 %v486
    %v2686 = vunpack.c.h.b16 %v486
    %v2687 = vunpack.c.l.b16 %v487
    %v2688 = vunpack.c.h.b16 %v487
    %v2689 = vunpack.c.l.b16 %v488
    %v2690 = vunpack.c.h.b16 %v488
    %v2691 = vunpack.c.l.b16 %v489
    %v2692 = vunpack.c.h.b16 %v489
    %v2693 = vunpack.c.l.b16 %v490
    %v2694 = vunpack.c.h.b16 %v490
    %v2695 = vunpack.c.l.b16 %v491
    %v2696 = vunpack.c.h.b16 %v491
    %v2697 = vunpack.c.l.b16 %v492
    %v2698 = vunpack.c.h.b16 %v492
    %v2699 = vunpack.c.l.b16 %v493
    %v2700 = vunpack.c.h.b16 %v493
    %v2701 = vunpack.c.l.b16 %v494
    %v2702 = vunpack.c.h.b16 %v494
    %v2703 = vunpack.c.l.b16 %v495
    %v2704 = vunpack.c.h.b16 %v495
    %v2705 = vunpack.c.l.b16 %v496
    %v2706 = vunpack.c.h.b16 %v496
    %v2707 = vunpack.c.l.b16 %v497
    %v2708 = vunpack.c.h.b16 %v497
    %v2709 = vunpack.c.l.b16 %v498
    %v2710 = vunpack.c.h.b16 %v498
    %v2711 = vunpack.c.l.b16 %v499
    %v2712 = vunpack.c.h.b16 %v499
    %v2713 = vunpack.c.l.b16 %v500
    %v2714 = vunpack.c.h.b16 %v500
    %v2715 = vunpack.c.l.b16 %v501
    %v2716 = vunpack.c.h.b16 %v501
    %v2717 = vunpack.c.l.b16 %v502
    %v2718 = vunpack.c.h.b16 %v502
    %v2719 = vunpack.c.l.b16 %v503
    %v2720 = vunpack.c.h.b16 %v503
    %v2721 = vunpack.c.l.b16 %v504
    %v2722 = vunpack.c.h.b16 %v504
    %v2723 = vunpack.c.l.b16 %v505
    %v2724 = vunpack.c.h.b16 %v505
    %v2725 = vunpack.c.l.b16 %v506
    %v2726 = vunpack.c.h.b16 %v506
    %v2727 = vunpack.c.l.b16 %v507
    %v2728 = vunpack.c.h.b16 %v507
    %v2729 = vunpack.c.l.b16 %v508
    %v2730 = vunpack.c.h.b16 %v508
    %v2731 = vunpack.c.l.b16 %v509
    %v2732 = vunpack.c.h.b16 %v509
    %v2733 = vunpack.c.l.b16 %v510
    %v2734 = vunpack.c.h.b16 %v510
    %v2735 = vunpack.c.l.b16 %v511
    %v2736 = vunpack.c.h.b16 %v511
    %v2737 = vunpack.c.l.b16 %v512
    %v2738 = vunpack.c.h.b16 %v512
    %v2739 = vunpack.c.l.b16 %v513
    %v2740 = vunpack.c.h.b16 %v513
    %v2741 = vunpack.c.l.b16 %v514
    %v2742 = vunpack.c.h.b16 %v514
    %v2743 = vunpack.c.l.b16 %v515
    %v2744 = vunpack.c.h.b16 %v515
    %v2745 = vunpack.c.l.b16 %v516
    %v2746 = vunpack.c.h.b16 %v516
    %v2747 = vunpack.c.l.b16 %v517
    %v2748 = vunpack.c.h.b16 %v517
    %v2749 = vunpack.c.l.b16 %v518
    %v2750 = vunpack.c.h.b16 %v518
    %v2751 = vunpack.c.l.b16 %v519
    %v2752 = vunpack.c.h.b16 %v519
    %v2753 = vunpack.c.l.b16 %v520
    %v2754 = vunpack.c.h.b16 %v520
    %v2755 = vunpack.c.l.b16 %v521
    %v2756 = vunpack.c.h.b16 %v521
    %v2757 = vunpack.c.l.b16 %v522
    %v2758 = vunpack.c.h.b16 %v522
    %v2759 = vunpack.c.l.b16 %v523
    %v2760 = vunpack.c.h.b16 %v523
    %v2761 = vunpack.c.l.b16 %v524
    %v2762 = vunpack.c.h.b16 %v524
    %v2763 = vunpack.c.l.b16 %v525
    %v2764 = vunpack.c.h.b16 %v525
    %v2765 = vunpack.c.l.b16 %v526
    %v2766 = vunpack.c.h.b16 %v526
    %v2767 = vunpack.c.l.b16 %v527
    %v2768 = vunpack.c.h.b16 %v527
    %v2769 = vunpack.c.l.b16 %v528
    %v2770 = vunpack.c.h.b16 %v528
    %v2771 = vunpack.c.l.b16 %v529
    %v2772 = vunpack.c.h.b16 %v529
    %v2773 = vunpack.c.l.b16 %v530
    %v2774 = vunpack.c.h.b16 %v530
    %v2775 = vunpack.c.l.b16 %v531
    %v2776 = vunpack.c.h.b16 %v531
    %v2777 = vunpack.c.l.b16 %v532
    %v2778 = vunpack.c.h.b16 %v532
    %v2779 = vunpack.c.l.b16 %v533
    %v2780 = vunpack.c.h.b16 %v533
    %v2781 = vunpack.c.l.b16 %v534
    %v2782 = vunpack.c.h.b16 %v534
    %v2783 = vunpack.c.l.b16 %v535
    %v2784 = vunpack.c.h.b16 %v535
    %v2785 = vunpack.c.l.b16 %v536
    %v2786 = vunpack.c.h.b16 %v536
    %v2787 = vunpack.c.l.b16 %v537
    %v2788 = vunpack.c.h.b16 %v537
    %v2789 = vunpack.c.l.b16 %v538
    %v2790 = vunpack.c.h.b16 %v538
    %v2791 = vunpack.c.l.b16 %v539
    %v2792 = vunpack.c.h.b16 %v539
    %v2793 = vunpack.c.l.b16 %v540
    %v2794 = vunpack.c.h.b16 %v540
    %v2795 = vunpack.c.l.b16 %v541
    %v2796 = vunpack.c.h.b16 %v541
    %v2797 = vunpack.c.l.b16 %v542
    %v2798 = vunpack.c.h.b16 %v542
    %v2799 = vunpack.c.l.b16 %v543
    %v2800 = vunpack.c.h.b16 %v543
    %v2801 = vunpack.c.l.b16 %v544
    %v2802 = vunpack.c.h.b16 %v544
    %v2803 = vunpack.c.l.b16 %v545
    %v2804 = vunpack.c.h.b16 %v545
    %v2805 = vunpack.c.l.b16 %v546
    %v2806 = vunpack.c.h.b16 %v546
    %v2807 = vunpack.c.l.b16 %v547
    %v2808 = vunpack.c.h.b16 %v547
    %v2809 = vunpack.c.l.b16 %v548
    %v2810 = vunpack.c.h.b16 %v548
    %v2811 = vunpack.c.l.b16 %v549
    %v2812 = vunpack.c.h.b16 %v549
    %v2813 = vunpack.c.l.b16 %v550
    %v2814 = vunpack.c.h.b16 %v550
    %v2815 = vunpack.c.l.b16 %v551
    %v2816 = vunpack.c.h.b16 %v551
    %v2817 = vunpack.c.l.b16 %v552
    %v2818 = vunpack.c.h.b16 %v552
    %v2819 = vunpack.c.l.b16 %v553
    %v2820 = vunpack.c.h.b16 %v553
    %v2821 = vunpack.c.l.b16 %v554
    %v2822 = vunpack.c.h.b16 %v554
    %v2823 = vunpack.c.l.b16 %v555
    %v2824 = vunpack.c.h.b16 %v555
    %v2825 = vunpack.c.l.b16 %v556
    %v2826 = vunpack.c.h.b16 %v556
    %v2827 = vunpack.c.l.b16 %v557
    %v2828 = vunpack.c.h.b16 %v557
    %v2829 = vunpack.c.l.b16 %v558
    %v2830 = vunpack.c.h.b16 %v558
    %v2831 = vunpack.c.l.b16 %v559
    %v2832 = vunpack.c.h.b16 %v559
    %v2833 = vunpack.c.l.b16 %v560
    %v2834 = vunpack.c.h.b16 %v560
    %v2835 = vunpack.c.l.b16 %v561
    %v2836 = vunpack.c.h.b16 %v561
    %v2837 = vunpack.c.l.b16 %v562
    %v2838 = vunpack.c.h.b16 %v562
    %v2839 = vunpack.c.l.b16 %v563
    %v2840 = vunpack.c.h.b16 %v563
    %v2841 = vunpack.c.l.b16 %v564
    %v2842 = vunpack.c.h.b16 %v564
    %v2843 = vunpack.c.l.b16 %v565
    %v2844 = vunpack.c.h.b16 %v565
    %v2845 = vunpack.c.l.b16 %v566
    %v2846 = vunpack.c.h.b16 %v566
    %v2847 = vunpack.c.l.b16 %v567
    %v2848 = vunpack.c.h.b16 %v567
    %v2849 = vunpack.c.l.b16 %v568
    %v2850 = vunpack.c.h.b16 %v568
    %v2851 = vunpack.c.l.b16 %v569
    %v2852 = vunpack.c.h.b16 %v569
    %v2853 = vunpack.c.l.b16 %v570
    %v2854 = vunpack.c.h.b16 %v570
    %v2855 = vunpack.c.l.b16 %v571
    %v2856 = vunpack.c.h.b16 %v571
    %v2857 = vunpack.c.l.b16 %v572
    %v2858 = vunpack.c.h.b16 %v572
    %v2859 = vunpack.c.l.b16 %v573
    %v2860 = vunpack.c.h.b16 %v573
    %v2861 = vunpack.c.l.b16 %v574
    %v2862 = vunpack.c.h.b16 %v574
    %v2863 = vunpack.c.l.b16 %v575
    %v2864 = vunpack.c.h.b16 %v575
    %v2865 = vunpack.c.l.b16 %v576
    %v2866 = vunpack.c.h.b16 %v576
    %v2867 = vunpack.c.l.b16 %v577
    %v2868 = vunpack.c.h.b16 %v577
    %v2869 = vunpack.c.l.b16 %v578
    %v2870 = vunpack.c.h.b16 %v578
    %v2871 = vunpack.c.l.b16 %v579
    %v2872 = vunpack.c.h.b16 %v579
    %v2873 = vunpack.c.l.b16 %v580
    %v2874 = vunpack.c.h.b16 %v580
    %v2875 = vunpack.c.l.b16 %v581
    %v2876 = vunpack.c.h.b16 %v581
    %v2877 = vunpack.c.l.b16 %v582
    %v2878 = vunpack.c.h.b16 %v582
    %v2879 = vunpack.c.l.b16 %v583
    %v2880 = vunpack.c.h.b16 %v583
    %v2881 = vunpack.c.l.b16 %v584
    %v2882 = vunpack.c.h.b16 %v584
    %v2883 = vunpack.c.l.b16 %v585
    %v2884 = vunpack.c.h.b16 %v585
    %v2885 = vunpack.c.l.b16 %v586
    %v2886 = vunpack.c.h.b16 %v586
    %v2887 = vunpack.c.l.b16 %v587
    %v2888 = vunpack.c.h.b16 %v587
    %v2889 = vunpack.c.l.b16 %v588
    %v2890 = vunpack.c.h.b16 %v588
    %v2891 = vunpack.c.l.b16 %v589
    %v2892 = vunpack.c.h.b16 %v589
    %v2893 = vunpack.c.l.b16 %v590
    %v2894 = vunpack.c.h.b16 %v590
    %v2895 = vunpack.c.l.b16 %v591
    %v2896 = vunpack.c.h.b16 %v591
    %v2897 = vunpack.c.l.b16 %v592
    %v2898 = vunpack.c.h.b16 %v592
    %v2899 = vunpack.c.l.b16 %v593
    %v2900 = vunpack.c.h.b16 %v593
    %v2901 = vunpack.c.l.b16 %v594
    %v2902 = vunpack.c.h.b16 %v594
    %v2903 = vunpack.c.l.b16 %v595
    %v2904 = vunpack.c.h.b16 %v595
    %v2905 = vunpack.c.l.b16 %v596
    %v2906 = vunpack.c.h.b16 %v596
    %v2907 = vunpack.c.l.b16 %v597
    %v2908 = vunpack.c.h.b16 %v597
    %v2909 = vunpack.c.l.b16 %v598
    %v2910 = vunpack.c.h.b16 %v598
    %v2911 = vunpack.c.l.b16 %v599
    %v2912 = vunpack.c.h.b16 %v599
    %v2913 = vunpack.c.l.b16 %v600
    %v2914 = vunpack.c.h.b16 %v600
    %v2915 = vunpack.c.l.b16 %v601
    %v2916 = vunpack.c.h.b16 %v601
    %v2917 = vunpack.c.l.b16 %v602
    %v2918 = vunpack.c.h.b16 %v602
    %v2919 = vunpack.c.l.b16 %v603
    %v2920 = vunpack.c.h.b16 %v603
    %v2921 = vunpack.c.l.b16 %v604
    %v2922 = vunpack.c.h.b16 %v604
    %v2923 = vunpack.c.l.b16 %v605
    %v2924 = vunpack.c.h.b16 %v605
    %v2925 = vunpack.c.l.b16 %v606
    %v2926 = vunpack.c.h.b16 %v606
    %v2927 = vunpack.c.l.b16 %v607
    %v2928 = vunpack.c.h.b16 %v607
    %v2929 = vunpack.c.l.b16 %v608
    %v2930 = vunpack.c.h.b16 %v608
    %v2931 = vunpack.c.l.b16 %v609
    %v2932 = vunpack.c.h.b16 %v609
    %v2933 = vunpack.c.l.b16 %v610
    %v2934 = vunpack.c.h.b16 %v610
    %v2935 = vunpack.c.l.b16 %v611
    %v2936 = vunpack.c.h.b16 %v611
    %v2937 = vunpack.c.l.b16 %v612
    %v2938 = vunpack.c.h.b16 %v612
    %v2939 = vunpack.c.l.b16 %v613
    %v2940 = vunpack.c.h.b16 %v613
    %v2941 = vunpack.c.l.b16 %v614
    %v2942 = vunpack.c.h.b16 %v614
    %v2943 = vunpack.c.l.b16 %v615
    %v2944 = vunpack.c.h.b16 %v615
    %v2945 = vunpack.c.l.b16 %v616
    %v2946 = vunpack.c.h.b16 %v616
    %v2947 = vunpack.c.l.b16 %v617
    %v2948 = vunpack.c.h.b16 %v617
    %v2949 = vunpack.c.l.b16 %v618
    %v2950 = vunpack.c.h.b16 %v618
    %v2951 = vunpack.c.l.b16 %v619
    %v2952 = vunpack.c.h.b16 %v619
    %v2953 = vunpack.c.l.b16 %v620
    %v2954 = vunpack.c.h.b16 %v620
    %v2955 = vunpack.c.l.b16 %v621
    %v2956 = vunpack.c.h.b16 %v621
    %v2957 = vunpack.c.l.b16 %v622
    %v2958 = vunpack.c.h.b16 %v622
    %v2959 = vunpack.c.l.b16 %v623
    %v2960 = vunpack.c.h.b16 %v623
    %v2961 = vunpack.c.l.b16 %v624
    %v2962 = vunpack.c.h.b16 %v624
    %v2963 = vunpack.c.l.b16 %v625
    %v2964 = vunpack.c.h.b16 %v625
    %v2965 = vunpack.c.l.b16 %v626
    %v2966 = vunpack.c.h.b16 %v626
    %v2967 = vunpack.c.l.b16 %v627
    %v2968 = vunpack.c.h.b16 %v627
    %v2969 = vunpack.c.l.b16 %v628
    %v2970 = vunpack.c.h.b16 %v628
    %v2971 = vunpack.c.l.b16 %v629
    %v2972 = vunpack.c.h.b16 %v629
    %v2973 = vunpack.c.l.b16 %v630
    %v2974 = vunpack.c.h.b16 %v630
    %v2975 = vunpack.c.l.b16 %v631
    %v2976 = vunpack.c.h.b16 %v631
    %v2977 = vunpack.c.l.b16 %v632
    %v2978 = vunpack.c.h.b16 %v632
    %v2979 = vunpack.c.l.b16 %v633
    %v2980 = vunpack.c.h.b16 %v633
    %v2981 = vunpack.c.l.b16 %v634
    %v2982 = vunpack.c.h.b16 %v634
    %v2983 = vunpack.c.l.b16 %v635
    %v2984 = vunpack.c.h.b16 %v635
    %v2985 = vunpack.c.l.b16 %v636
    %v2986 = vunpack.c.h.b16 %v636
    %v2987 = vunpack.c.l.b16 %v637
    %v2988 = vunpack.c.h.b16 %v637
    %v2989 = vunpack.c.l.b16 %v638
    %v2990 = vunpack.c.h.b16 %v638
    %v2991 = vunpack.c.l.b16 %v639
    %v2992 = vunpack.c.h.b16 %v639
    %v2993 = vunpack.c.l.b16 %v640
    %v2994 = vunpack.c.h.b16 %v640
    %v2995 = vunpack.c.l.b16 %v641
    %v2996 = vunpack.c.h.b16 %v641
    %v2997 = vunpack.c.l.b16 %v642
    %v2998 = vunpack.c.h.b16 %v642
    %v2999 = vunpack.c.l.b16 %v643
    %v3000 = vunpack.c.h.b16 %v643
    %v3001 = vunpack.c.l.b16 %v644
    %v3002 = vunpack.c.h.b16 %v644
    %v3003 = vunpack.c.l.b16 %v645
    %v3004 = vunpack.c.h.b16 %v645
    %v3005 = vunpack.c.l.b16 %v646
    %v3006 = vunpack.c.h.b16 %v646
    %v3007 = vunpack.c.l.b16 %v647
    %v3008 = vunpack.c.h.b16 %v647
    %v3009 = vunpack.c.l.b16 %v648
    %v3010 = vunpack.c.h.b16 %v648
    %v3011 = vunpack.c.l.b16 %v649
    %v3012 = vunpack.c.h.b16 %v649
    %v3013 = vunpack.c.l.b16 %v650
    %v3014 = vunpack.c.h.b16 %v650
    %v3015 = vunpack.c.l.b16 %v651
    %v3016 = vunpack.c.h.b16 %v651
    %v3017 = vunpack.c.l.b16 %v652
    %v3018 = vunpack.c.h.b16 %v652
    %v3019 = vunpack.c.l.b16 %v653
    %v3020 = vunpack.c.h.b16 %v653
    %v3021 = vunpack.c.l.b16 %v654
    %v3022 = vunpack.c.h.b16 %v654
    %v3023 = vunpack.c.l.b16 %v655
    %v3024 = vunpack.c.h.b16 %v655
    %v3025 = vunpack.c.l.b16 %v656
    %v3026 = vunpack.c.h.b16 %v656
    %v3027 = vunpack.c.l.b16 %v657
    %v3028 = vunpack.c.h.b16 %v657
    %v3029 = vunpack.c.l.b16 %v658
    %v3030 = vunpack.c.h.b16 %v658
    %v3031 = vunpack.c.l.b16 %v659
    %v3032 = vunpack.c.h.b16 %v659
    %v3033 = vunpack.c.l.b16 %v660
    %v3034 = vunpack.c.h.b16 %v660
    %v3035 = vunpack.c.l.b16 %v661
    %v3036 = vunpack.c.h.b16 %v661
    %v3037 = vunpack.c.l.b16 %v662
    %v3038 = vunpack.c.h.b16 %v662
    %v3039 = vunpack.c.l.b16 %v663
    %v3040 = vunpack.c.h.b16 %v663
    %v3041 = vunpack.c.l.b16 %v664
    %v3042 = vunpack.c.h.b16 %v664
    %v3043 = vunpack.c.l.b16 %v665
    %v3044 = vunpack.c.h.b16 %v665
    %v3045 = vunpack.c.l.b16 %v666
    %v3046 = vunpack.c.h.b16 %v666
    %v3047 = vunpack.c.l.b16 %v667
    %v3048 = vunpack.c.h.b16 %v667
    %v3049 = vunpack.c.l.b16 %v668
    %v3050 = vunpack.c.h.b16 %v668
    %v3051 = vunpack.c.l.b16 %v669
    %v3052 = vunpack.c.h.b16 %v669
    %v3053 = vunpack.c.l.b16 %v670
    %v3054 = vunpack.c.h.b16 %v670
    %v3055 = vunpack.c.l.b16 %v671
    %v3056 = vunpack.c.h.b16 %v671
    %v3057 = vunpack.c.l.b16 %v672
    %v3058 = vunpack.c.h.b16 %v672
    %v3059 = vunpack.c.l.b16 %v673
    %v3060 = vunpack.c.h.b16 %v673
    %v3061 = vunpack.c.l.b16 %v674
    %v3062 = vunpack.c.h.b16 %v674
    %v3063 = vunpack.c.l.b16 %v675
    %v3064 = vunpack.c.h.b16 %v675
    %v3065 = vunpack.c.l.b16 %v676
    %v3066 = vunpack.c.h.b16 %v676
    %v3067 = vunpack.c.l.b16 %v677
    %v3068 = vunpack.c.h.b16 %v677
    %v3069 = vunpack.c.l.b16 %v678
    %v3070 = vunpack.c.h.b16 %v678
    %v3071 = vunpack.c.l.b16 %v679
    %v3072 = vunpack.c.h.b16 %v679
    %v3073 = vunpack.c.l.b16 %v680
    %v3074 = vunpack.c.h.b16 %v680
    %v3075 = vunpack.c.l.b16 %v681
    %v3076 = vunpack.c.h.b16 %v681
    %v3077 = vunpack.c.l.b16 %v682
    %v3078 = vunpack.c.h.b16 %v682
    %v3079 = vunpack.c.l.b16 %v683
    %v3080 = vunpack.c.h.b16 %v683
    %v3081 = vunpack.c.l.b16 %v684
    %v3082 = vunpack.c.h.b16 %v684
    %v3083 = vunpack.c.l.b16 %v685
    %v3084 = vunpack.c.h.b16 %v685
    %v3085 = vunpack.c.l.b16 %v686
    %v3086 = vunpack.c.h.b16 %v686
    %v3087 = vunpack.c.l.b16 %v687
    %v3088 = vunpack.c.h.b16 %v687
    %v3089 = vunpack.c.l.b16 %v688
    %v3090 = vunpack.c.h.b16 %v688
    %v3091 = vunpack.c.l.b16 %v689
    %v3092 = vunpack.c.h.b16 %v689
    %v3093 = vunpack.c.l.b16 %v690
    %v3094 = vunpack.c.h.b16 %v690
    %v3095 = vunpack.c.l.b16 %v691
    %v3096 = vunpack.c.h.b16 %v691
    %v3097 = vunpack.c.l.b16 %v692
    %v3098 = vunpack.c.h.b16 %v692
    %v3099 = vunpack.c.l.b16 %v693
    %v3100 = vunpack.c.h.b16 %v693
    %v3101 = vunpack.c.l.b16 %v694
    %v3102 = vunpack.c.h.b16 %v694
    %v3103 = vunpack.c.l.b16 %v695
    %v3104 = vunpack.c.h.b16 %v695
    %v3105 = vunpack.c.l.b16 %v696
    %v3106 = vunpack.c.h.b16 %v696
    %v3107 = vunpack.c.l.b16 %v697
    %v3108 = vunpack.c.h.b16 %v697
    %v3109 = vunpack.c.l.b16 %v698
    %v3110 = vunpack.c.h.b16 %v698
    %v3111 = vunpack.c.l.b16 %v699
    %v3112 = vunpack.c.h.b16 %v699
    %v3113 = vunpack.c.l.b16 %v700
    %v3114 = vunpack.c.h.b16 %v700
    %v3115 = vunpack.c.l.b16 %v701
    %v3116 = vunpack.c.h.b16 %v701
    %v3117 = vunpack.c.l.b16 %v702
    %v3118 = vunpack.c.h.b16 %v702
    %v3119 = vunpack.c.l.b16 %v703
    %v3120 = vunpack.c.h.b16 %v703
    %v3121 = vunpack.c.l.b16 %v704
    %v3122 = vunpack.c.h.b16 %v704
    %v3123 = vunpack.c.l.b16 %v705
    %v3124 = vunpack.c.h.b16 %v705
    %v3125 = vunpack.c.l.b16 %v706
    %v3126 = vunpack.c.h.b16 %v706
    %v3127 = vunpack.c.l.b16 %v707
    %v3128 = vunpack.c.h.b16 %v707
    %v3129 = vunpack.c.l.b16 %v708
    %v3130 = vunpack.c.h.b16 %v708
    %v3131 = vunpack.c.l.b16 %v709
    %v3132 = vunpack.c.h.b16 %v709
    %v3133 = vunpack.c.l.b16 %v710
    %v3134 = vunpack.c.h.b16 %v710
    %v3135 = vunpack.c.l.b16 %v711
    %v3136 = vunpack.c.h.b16 %v711
    %v3137 = vunpack.c.l.b16 %v712
    %v3138 = vunpack.c.h.b16 %v712
    %v3139 = vunpack.c.l.b16 %v713
    %v3140 = vunpack.c.h.b16 %v713
    %v3141 = vunpack.c.l.b16 %v714
    %v3142 = vunpack.c.h.b16 %v714
    %v3143 = vunpack.c.l.b16 %v715
    %v3144 = vunpack.c.h.b16 %v715
    %v3145 = vunpack.c.l.b16 %v716
    %v3146 = vunpack.c.h.b16 %v716
    %v3147 = vunpack.c.l.b16 %v717
    %v3148 = vunpack.c.h.b16 %v717
    %v3149 = vunpack.c.l.b16 %v718
    %v3150 = vunpack.c.h.b16 %v718
    %v3151 = vunpack.c.l.b16 %v719
    %v3152 = vunpack.c.h.b16 %v719
    %v3153 = vunpack.c.l.b16 %v720
    %v3154 = vunpack.c.h.b16 %v720
    %v3155 = vunpack.c.l.b16 %v721
    %v3156 = vunpack.c.h.b16 %v721
    %v3157 = vunpack.c.l.b16 %v722
    %v3158 = vunpack.c.h.b16 %v722
    %v3159 = vunpack.c.l.b16 %v723
    %v3160 = vunpack.c.h.b16 %v723
    %v3161 = vunpack.c.l.b16 %v724
    %v3162 = vunpack.c.h.b16 %v724
    %v3163 = vunpack.c.l.b16 %v725
    %v3164 = vunpack.c.h.b16 %v725
    %v3165 = vunpack.c.l.b16 %v726
    %v3166 = vunpack.c.h.b16 %v726
    %v3167 = vunpack.c.l.b16 %v727
    %v3168 = vunpack.c.h.b16 %v727
    %v3169 = vunpack.c.l.b16 %v728
    %v3170 = vunpack.c.h.b16 %v728
    %v3171 = vunpack.c.l.b16 %v729
    %v3172 = vunpack.c.h.b16 %v729
    %v3173 = vunpack.c.l.b16 %v730
    %v3174 = vunpack.c.h.b16 %v730
    %v3175 = vunpack.c.l.b16 %v731
    %v3176 = vunpack.c.h.b16 %v731
    %v3177 = vunpack.c.l.b16 %v732
    %v3178 = vunpack.c.h.b16 %v732
    %v3179 = vunpack.c.l.b16 %v733
    %v3180 = vunpack.c.h.b16 %v733
    %v3181 = vunpack.c.l.b16 %v734
    %v3182 = vunpack.c.h.b16 %v734
    %v3183 = vunpack.c.l.b16 %v735
    %v3184 = vunpack.c.h.b16 %v735
    %v3185 = vunpack.c.l.b16 %v736
    %v3186 = vunpack.c.h.b16 %v736
    %v3187 = vunpack.c.l.b16 %v737
    %v3188 = vunpack.c.h.b16 %v737
    %v3189 = vunpack.c.l.b16 %v738
    %v3190 = vunpack.c.h.b16 %v738
    %v3191 = vunpack.c.l.b16 %v739
    %v3192 = vunpack.c.h.b16 %v739
    %v3193 = vunpack.c.l.b16 %v740
    %v3194 = vunpack.c.h.b16 %v740
    %v3195 = vunpack.c.l.b16 %v741
    %v3196 = vunpack.c.h.b16 %v741
    %v3197 = vunpack.c.l.b16 %v742
    %v3198 = vunpack.c.h.b16 %v742
    %v3199 = vunpack.c.l.b16 %v743
    %v3200 = vunpack.c.h.b16 %v743
    %v3201 = vunpack.c.l.b16 %v744
    %v3202 = vunpack.c.h.b16 %v744
    %v3203 = vunpack.c.l.b16 %v745
    %v3204 = vunpack.c.h.b16 %v745
    %v3205 = vunpack.c.l.b16 %v746
    %v3206 = vunpack.c.h.b16 %v746
    %v3207 = vunpack.c.l.b16 %v747
    %v3208 = vunpack.c.h.b16 %v747
    %v3209 = vunpack.c.l.b16 %v748
    %v3210 = vunpack.c.h.b16 %v748
    %v3211 = vunpack.c.l.b16 %v749
    %v3212 = vunpack.c.h.b16 %v749
    %v3213 = vunpack.c.l.b16 %v750
    %v3214 = vunpack.c.h.b16 %v750
    %v3215 = vunpack.c.l.b16 %v751
    %v3216 = vunpack.c.h.b16 %v751
    %v3217 = vunpack.c.l.b16 %v752
    %v3218 = vunpack.c.h.b16 %v752
    %v3219 = vunpack.c.l.b16 %v753
    %v3220 = vunpack.c.h.b16 %v753
    %v3221 = vunpack.c.l.b16 %v754
    %v3222 = vunpack.c.h.b16 %v754
    %v3223 = vunpack.c.l.b16 %v755
    %v3224 = vunpack.c.h.b16 %v755
    %v3225 = vunpack.c.l.b16 %v756
    %v3226 = vunpack.c.h.b16 %v756
    %v3227 = vunpack.c.l.b16 %v757
    %v3228 = vunpack.c.h.b16 %v757
    %v3229 = vunpack.c.l.b16 %v758
    %v3230 = vunpack.c.h.b16 %v758
    %v3231 = vunpack.c.l.b16 %v759
    %v3232 = vunpack.c.h.b16 %v759
    %v3233 = vunpack.c.l.b16 %v760
    %v3234 = vunpack.c.h.b16 %v760
    %v3235 = vunpack.c.l.b16 %v761
    %v3236 = vunpack.c.h.b16 %v761
    %v3237 = vunpack.c.l.b16 %v762
    %v3238 = vunpack.c.h.b16 %v762
    %v3239 = vunpack.c.l.b16 %v763
    %v3240 = vunpack.c.h.b16 %v763
    %v3241 = vunpack.c.l.b16 %v764
    %v3242 = vunpack.c.h.b16 %v764
    %v3243 = vunpack.c.l.b16 %v765
    %v3244 = vunpack.c.h.b16 %v765
    %v3245 = vunpack.c.l.b16 %v766
    %v3246 = vunpack.c.h.b16 %v766
    %v3247 = vunpack.c.l.b16 %v767
    %v3248 = vunpack.c.h.b16 %v767
    %v3249 = vunpack.c.l.b16 %v768
    %v3250 = vunpack.c.h.b16 %v768
    %v3251 = vunpack.c.l.b16 %v769
    %v3252 = vunpack.c.h.b16 %v769
    %v3253 = vunpack.c.l.b16 %v770
    %v3254 = vunpack.c.h.b16 %v770
    %v3255 = vunpack.c.l.b16 %v771
    %v3256 = vunpack.c.h.b16 %v771
    %v3257 = vunpack.c.l.b16 %v772
    %v3258 = vunpack.c.h.b16 %v772
    %v3259 = vunpack.c.l.b16 %v773
    %v3260 = vunpack.c.h.b16 %v773
    %v3261 = vunpack.c.l.b16 %v774
    %v3262 = vunpack.c.h.b16 %v774
    %v3263 = vunpack.c.l.b16 %v775
    %v3264 = vunpack.c.h.b16 %v775
    %v3265 = vunpack.c.l.b16 %v776
    %v3266 = vunpack.c.h.b16 %v776
    %v3267 = vunpack.c.l.b16 %v777
    %v3268 = vunpack.c.h.b16 %v777
    %v3269 = vunpack.c.l.b16 %v778
    %v3270 = vunpack.c.h.b16 %v778
    %v3271 = vunpack.c.l.b16 %v779
    %v3272 = vunpack.c.h.b16 %v779
    %v3273 = vunpack.c.l.b16 %v780
    %v3274 = vunpack.c.h.b16 %v780
    %v3275 = vunpack.c.l.b16 %v781
    %v3276 = vunpack.c.h.b16 %v781
    %v3277 = vunpack.c.l.b16 %v782
    %v3278 = vunpack.c.h.b16 %v782
    %v3279 = vunpack.c.l.b16 %v783
    %v3280 = vunpack.c.h.b16 %v783
    %v3281 = vunpack.c.l.b16 %v784
    %v3282 = vunpack.c.h.b16 %v784
    %v3283 = vunpack.c.l.b16 %v785
    %v3284 = vunpack.c.h.b16 %v785
    %v3285 = vunpack.c.l.b16 %v786
    %v3286 = vunpack.c.h.b16 %v786
    %v3287 = vunpack.c.l.b16 %v787
    %v3288 = vunpack.c.h.b16 %v787
    %v3289 = vunpack.c.l.b16 %v788
    %v3290 = vunpack.c.h.b16 %v788
    %v3291 = vunpack.c.l.b16 %v789
    %v3292 = vunpack.c.h.b16 %v789
    %v3293 = vunpack.c.l.b16 %v790
    %v3294 = vunpack.c.h.b16 %v790
    %v3295 = vunpack.c.l.b16 %v791
    %v3296 = vunpack.c.h.b16 %v791
    %v3297 = vunpack.c.l.b16 %v792
    %v3298 = vunpack.c.h.b16 %v792
    %v3299 = vunpack.c.l.b16 %v793
    %v3300 = vunpack.c.h.b16 %v793
    %v3301 = vunpack.c.l.b16 %v794
    %v3302 = vunpack.c.h.b16 %v794
    %v3303 = vunpack.c.l.b16 %v795
    %v3304 = vunpack.c.h.b16 %v795
    %v3305 = vunpack.c.l.b16 %v796
    %v3306 = vunpack.c.h.b16 %v796
    %v3307 = vunpack.c.l.b16 %v797
    %v3308 = vunpack.c.h.b16 %v797
    %v3309 = vunpack.c.l.b16 %v798
    %v3310 = vunpack.c.h.b16 %v798
    %v3311 = vunpack.c.l.b16 %v799
    %v3312 = vunpack.c.h.b16 %v799
    %v3313 = vunpack.c.l.b16 %v800
    %v3314 = vunpack.c.h.b16 %v800
    %v3315 = vunpack.c.l.b16 %v801
    %v3316 = vunpack.c.h.b16 %v801
    %v3317 = vunpack.c.l.b16 %v802
    %v3318 = vunpack.c.h.b16 %v802
    %v3319 = vunpack.c.l.b16 %v803
    %v3320 = vunpack.c.h.b16 %v803
    %v3321 = vunpack.c.l.b16 %v804
    %v3322 = vunpack.c.h.b16 %v804
    %v3323 = vunpack.c.l.b16 %v805
    %v3324 = vunpack.c.h.b16 %v805
    %v3325 = vunpack.c.l.b16 %v806
    %v3326 = vunpack.c.h.b16 %v806
    %v3327 = vunpack.c.l.b16 %v807
    %v3328 = vunpack.c.h.b16 %v807
    %v3329 = vunpack.c.l.b16 %v808
    %v3330 = vunpack.c.h.b16 %v808
    %v3331 = vunpack.c.l.b16 %v809
    %v3332 = vunpack.c.h.b16 %v809
    %v3333 = vunpack.c.l.b16 %v810
    %v3334 = vunpack.c.h.b16 %v810
    %v3335 = vunpack.c.l.b16 %v811
    %v3336 = vunpack.c.h.b16 %v811
    %v3337 = vunpack.c.l.b16 %v812
    %v3338 = vunpack.c.h.b16 %v812
    %v3339 = vunpack.c.l.b16 %v813
    %v3340 = vunpack.c.h.b16 %v813
    %v3341 = vunpack.c.l.b16 %v814
    %v3342 = vunpack.c.h.b16 %v814
    %v3343 = vunpack.c.l.b16 %v815
    %v3344 = vunpack.c.h.b16 %v815
    %v3345 = vunpack.c.l.b16 %v816
    %v3346 = vunpack.c.h.b16 %v816
    %v3347 = vunpack.c.l.b16 %v817
    %v3348 = vunpack.c.h.b16 %v817
    %v3349 = vunpack.c.l.b16 %v818
    %v3350 = vunpack.c.h.b16 %v818
    %v3351 = vunpack.c.l.b16 %v819
    %v3352 = vunpack.c.h.b16 %v819
    %v3353 = vunpack.c.l.b16 %v820
    %v3354 = vunpack.c.h.b16 %v820
    %v3355 = vunpack.c.l.b16 %v821
    %v3356 = vunpack.c.h.b16 %v821
    %v3357 = vunpack.c.l.b16 %v822
    %v3358 = vunpack.c.h.b16 %v822
    %v3359 = vunpack.c.l.b16 %v823
    %v3360 = vunpack.c.h.b16 %v823
    %v3361 = vunpack.c.l.b16 %v824
    %v3362 = vunpack.c.h.b16 %v824
    %v3363 = vunpack.c.l.b16 %v825
    %v3364 = vunpack.c.h.b16 %v825
    %v3365 = vunpack.c.l.b16 %v826
    %v3366 = vunpack.c.h.b16 %v826
    %v3367 = vunpack.c.l.b16 %v827
    %v3368 = vunpack.c.h.b16 %v827
    %v3369 = vunpack.c.l.b16 %v828
    %v3370 = vunpack.c.h.b16 %v828
    %v3371 = vunpack.c.l.b16 %v829
    %v3372 = vunpack.c.h.b16 %v829
    %v3373 = vunpack.c.l.b16 %v830
    %v3374 = vunpack.c.h.b16 %v830
    %v3375 = vunpack.c.l.b16 %v831
    %v3376 = vunpack.c.h.b16 %v831
    %v3377 = vunpack.c.l.b16 %v832
    %v3378 = vunpack.c.h.b16 %v832
    %v3379 = vunpack.c.l.b16 %v833
    %v3380 = vunpack.c.h.b16 %v833
    %v3381 = vunpack.c.l.b16 %v834
    %v3382 = vunpack.c.h.b16 %v834
    %v3383 = vunpack.c.l.b16 %v835
    %v3384 = vunpack.c.h.b16 %v835
    %v3385 = vunpack.c.l.b16 %v836
    %v3386 = vunpack.c.h.b16 %v836
    %v3387 = vunpack.c.l.b16 %v837
    %v3388 = vunpack.c.h.b16 %v837
    %v3389 = vunpack.c.l.b16 %v838
    %v3390 = vunpack.c.h.b16 %v838
    %v3391 = vunpack.c.l.b16 %v839
    %v3392 = vunpack.c.h.b16 %v839
    %v3393 = vunpack.c.l.b16 %v840
    %v3394 = vunpack.c.h.b16 %v840
    %v3395 = vunpack.c.l.b16 %v841
    %v3396 = vunpack.c.h.b16 %v841
    %v3397 = vunpack.c.l.b16 %v842
    %v3398 = vunpack.c.h.b16 %v842
    %v3399 = vunpack.c.l.b16 %v843
    %v3400 = vunpack.c.h.b16 %v843
    %v3401 = vunpack.c.l.b16 %v844
    %v3402 = vunpack.c.h.b16 %v844
    %v3403 = vunpack.c.l.b16 %v845
    %v3404 = vunpack.c.h.b16 %v845
    %v3405 = vunpack.c.l.b16 %v846
    %v3406 = vunpack.c.h.b16 %v846
    %v3407 = vunpack.c.l.b16 %v847
    %v3408 = vunpack.c.h.b16 %v847
    %v3409 = vunpack.c.l.b16 %v848
    %v3410 = vunpack.c.h.b16 %v848
    %v3411 = vunpack.c.l.b16 %v849
    %v3412 = vunpack.c.h.b16 %v849
    %v3413 = vunpack.c.l.b16 %v850
    %v3414 = vunpack.c.h.b16 %v850
    %v3415 = vunpack.c.l.b16 %v851
    %v3416 = vunpack.c.h.b16 %v851
    %v3417 = vunpack.c.l.b16 %v852
    %v3418 = vunpack.c.h.b16 %v852
    %v3419 = vunpack.c.l.b16 %v853
    %v3420 = vunpack.c.h.b16 %v853
    %v3421 = vunpack.c.l.b16 %v854
    %v3422 = vunpack.c.h.b16 %v854
    %v3423 = vunpack.c.l.b16 %v855
    %v3424 = vunpack.c.h.b16 %v855
    %v3425 = vunpack.c.l.b16 %v856
    %v3426 = vunpack.c.h.b16 %v856
    %v3427 = vunpack.c.l.b16 %v857
    %v3428 = vunpack.c.h.b16 %v857
    %v3429 = vunpack.c.l.b16 %v858
    %v3430 = vunpack.c.h.b16 %v858
    %v3431 = vunpack.c.l.b16 %v859
    %v3432 = vunpack.c.h.b16 %v859
    %v3433 = vunpack.c.l.b16 %v860
    %v3434 = vunpack.c.h.b16 %v860
    %v3435 = vunpack.c.l.b16 %v861
    %v3436 = vunpack.c.h.b16 %v861
    %v3437 = vunpack.c.l.b16 %v862
    %v3438 = vunpack.c.h.b16 %v862
    %v3439 = vunpack.c.l.b16 %v863
    %v3440 = vunpack.c.h.b16 %v863
    %v3441 = vunpack.c.l.b16 %v864
    %v3442 = vunpack.c.h.b16 %v864
    %v3443 = vunpack.c.l.b16 %v865
    %v3444 = vunpack.c.h.b16 %v865
    %v3445 = vunpack.c.l.b16 %v866
    %v3446 = vunpack.c.h.b16 %v866
    %v3447 = vunpack.c.l.b16 %v867
    %v3448 = vunpack.c.h.b16 %v867
    %v3449 = vunpack.c.l.b16 %v868
    %v3450 = vunpack.c.h.b16 %v868
    %v3451 = vunpack.c.l.b16 %v869
    %v3452 = vunpack.c.h.b16 %v869
    %v3453 = vunpack.c.l.b16 %v870
    %v3454 = vunpack.c.h.b16 %v870
    %v3455 = vunpack.c.l.b16 %v871
    %v3456 = vunpack.c.h.b16 %v871
    %v3457 = vunpack.c.l.b16 %v872
    %v3458 = vunpack.c.h.b16 %v872
    %v3459 = vunpack.c.l.b16 %v873
    %v3460 = vunpack.c.h.b16 %v873
    %v3461 = vunpack.c.l.b16 %v874
    %v3462 = vunpack.c.h.b16 %v874
    %v3463 = vunpack.c.l.b16 %v875
    %v3464 = vunpack.c.h.b16 %v875
    %v3465 = vunpack.c.l.b16 %v876
    %v3466 = vunpack.c.h.b16 %v876
    %v3467 = vunpack.c.l.b16 %v877
    %v3468 = vunpack.c.h.b16 %v877
    %v3469 = vunpack.c.l.b16 %v878
    %v3470 = vunpack.c.h.b16 %v878
    %v3471 = vunpack.c.l.b16 %v879
    %v3472 = vunpack.c.h.b16 %v879
    %v3473 = vunpack.c.l.b16 %v880
    %v3474 = vunpack.c.h.b16 %v880
    %v3475 = vunpack.c.l.b16 %v881
    %v3476 = vunpack.c.h.b16 %v881
    %v3477 = vunpack.c.l.b16 %v882
    %v3478 = vunpack.c.h.b16 %v882
    %v3479 = vunpack.c.l.b16 %v883
    %v3480 = vunpack.c.h.b16 %v883
    %v3481 = vunpack.c.l.b16 %v884
    %v3482 = vunpack.c.h.b16 %v884
    %v3483 = vunpack.c.l.b16 %v885
    %v3484 = vunpack.c.h.b16 %v885
    %v3485 = vunpack.c.l.b16 %v886
    %v3486 = vunpack.c.h.b16 %v886
    %v3487 = vunpack.c.l.b16 %v887
    %v3488 = vunpack.c.h.b16 %v887
    %v3489 = vunpack.c.l.b16 %v888
    %v3490 = vunpack.c.h.b16 %v888
    %v3491 = vunpack.c.l.b16 %v889
    %v3492 = vunpack.c.h.b16 %v889
    %v3493 = vunpack.c.l.b16 %v890
    %v3494 = vunpack.c.h.b16 %v890
    %v3495 = vunpack.c.l.b16 %v891
    %v3496 = vunpack.c.h.b16 %v891
    %v3497 = vunpack.c.l.b16 %v892
    %v3498 = vunpack.c.h.b16 %v892
    %v3499 = vunpack.c.l.b16 %v893
    %v3500 = vunpack.c.h.b16 %v893
    %v3501 = vunpack.c.l.b16 %v894
    %v3502 = vunpack.c.h.b16 %v894
    %v3503 = vunpack.c.l.b16 %v895
    %v3504 = vunpack.c.h.b16 %v895
    %v3505 = vunpack.c.l.b16 %v896
    %v3506 = vunpack.c.h.b16 %v896
    %v3507 = vunpack.c.l.b16 %v897
    %v3508 = vunpack.c.h.b16 %v897
    %v3509 = vunpack.c.l.b16 %v898
    %v3510 = vunpack.c.h.b16 %v898
    %v3511 = vunpack.c.l.b16 %v899
    %v3512 = vunpack.c.h.b16 %v899
    %v3513 = vunpack.c.l.b16 %v900
    %v3514 = vunpack.c.h.b16 %v900
    %v3515 = vunpack.c.l.b16 %v901
    %v3516 = vunpack.c.h.b16 %v901
    %v3517 = vunpack.c.l.b16 %v902
    %v3518 = vunpack.c.h.b16 %v902
    %v3519 = vunpack.c.l.b16 %v903
    %v3520 = vunpack.c.h.b16 %v903
    %v3521 = vunpack.c.l.b16 %v904
    %v3522 = vunpack.c.h.b16 %v904
    %v3523 = vunpack.c.l.b16 %v905
    %v3524 = vunpack.c.h.b16 %v905
    %v3525 = vunpack.c.l.b16 %v906
    %v3526 = vunpack.c.h.b16 %v906
    %v3527 = vunpack.c.l.b16 %v907
    %v3528 = vunpack.c.h.b16 %v907
    %v3529 = vunpack.c.l.b16 %v908
    %v3530 = vunpack.c.h.b16 %v908
    %v3531 = vunpack.c.l.b16 %v909
    %v3532 = vunpack.c.h.b16 %v909
    %v3533 = vunpack.c.l.b16 %v910
    %v3534 = vunpack.c.h.b16 %v910
    %v3535 = vunpack.c.l.b16 %v911
    %v3536 = vunpack.c.h.b16 %v911
    %v3537 = vunpack.c.l.b16 %v912
    %v3538 = vunpack.c.h.b16 %v912
    %v3539 = vunpack.c.l.b16 %v913
    %v3540 = vunpack.c.h.b16 %v913
    %v3541 = vunpack.c.l.b16 %v914
    %v3542 = vunpack.c.h.b16 %v914
    %v3543 = vunpack.c.l.b16 %v915
    %v3544 = vunpack.c.h.b16 %v915
    %v3545 = vunpack.c.l.b16 %v916
    %v3546 = vunpack.c.h.b16 %v916
    %v3547 = vunpack.c.l.b16 %v917
    %v3548 = vunpack.c.h.b16 %v917
    %v3549 = vunpack.c.l.b16 %v918
    %v3550 = vunpack.c.h.b16 %v918
    %v3551 = vunpack.c.l.b16 %v919
    %v3552 = vunpack.c.h.b16 %v919
    %v3553 = vunpack.c.l.b16 %v920
    %v3554 = vunpack.c.h.b16 %v920
    %v3555 = vunpack.c.l.b16 %v921
    %v3556 = vunpack.c.h.b16 %v921
    %v3557 = vunpack.c.l.b16 %v922
    %v3558 = vunpack.c.h.b16 %v922
    %v3559 = vunpack.c.l.b16 %v923
    %v3560 = vunpack.c.h.b16 %v923
    %v3561 = vunpack.c.l.b16 %v924
    %v3562 = vunpack.c.h.b16 %v924
    %v3563 = vunpack.c.l.b16 %v925
    %v3564 = vunpack.c.h.b16 %v925
    %v3565 = vunpack.c.l.b16 %v926
    %v3566 = vunpack.c.h.b16 %v926
    %v3567 = vunpack.c.l.b16 %v927
    %v3568 = vunpack.c.h.b16 %v927
    %v3569 = vunpack.c.l.b16 %v928
    %v3570 = vunpack.c.h.b16 %v928
    %v3571 = vunpack.c.l.b16 %v929
    %v3572 = vunpack.c.h.b16 %v929
    %v3573 = vunpack.c.l.b16 %v930
    %v3574 = vunpack.c.h.b16 %v930
    %v3575 = vunpack.c.l.b16 %v931
    %v3576 = vunpack.c.h.b16 %v931
    %v3577 = vunpack.c.l.b16 %v932
    %v3578 = vunpack.c.h.b16 %v932
    %v3579 = vunpack.c.l.b16 %v933
    %v3580 = vunpack.c.h.b16 %v933
    %v3581 = vunpack.c.l.b16 %v934
    %v3582 = vunpack.c.h.b16 %v934
    %v3583 = vunpack.c.l.b16 %v935
    %v3584 = vunpack.c.h.b16 %v935
    %v3585 = vunpack.c.l.b16 %v936
    %v3586 = vunpack.c.h.b16 %v936
    %v3587 = vunpack.c.l.b16 %v937
    %v3588 = vunpack.c.h.b16 %v937
    %v3589 = vunpack.c.l.b16 %v938
    %v3590 = vunpack.c.h.b16 %v938
    %v3591 = vunpack.c.l.b16 %v939
    %v3592 = vunpack.c.h.b16 %v939
    %v3593 = vunpack.c.l.b16 %v940
    %v3594 = vunpack.c.h.b16 %v940
    %v3595 = vunpack.c.l.b16 %v941
    %v3596 = vunpack.c.h.b16 %v941
    %v3597 = vunpack.c.l.b16 %v942
    %v3598 = vunpack.c.h.b16 %v942
    %v3599 = vunpack.c.l.b16 %v943
    %v3600 = vunpack.c.h.b16 %v943
    %v3601 = vunpack.c.l.b16 %v944
    %v3602 = vunpack.c.h.b16 %v944
    %v3603 = vunpack.c.l.b16 %v945
    %v3604 = vunpack.c.h.b16 %v945
    %v3605 = vunpack.c.l.b16 %v946
    %v3606 = vunpack.c.h.b16 %v946
    %v3607 = vunpack.c.l.b16 %v947
    %v3608 = vunpack.c.h.b16 %v947
    %v3609 = vunpack.c.l.b16 %v948
    %v3610 = vunpack.c.h.b16 %v948
    %v3611 = vunpack.c.l.b16 %v949
    %v3612 = vunpack.c.h.b16 %v949
    %v3613 = vunpack.c.l.b16 %v950
    %v3614 = vunpack.c.h.b16 %v950
    %v3615 = vunpack.c.l.b16 %v951
    %v3616 = vunpack.c.h.b16 %v951
    %v3617 = vunpack.c.l.b16 %v952
    %v3618 = vunpack.c.h.b16 %v952
    %v3619 = vunpack.c.l.b16 %v953
    %v3620 = vunpack.c.h.b16 %v953
    %v3621 = vunpack.c.l.b16 %v954
    %v3622 = vunpack.c.h.b16 %v954
    %v3623 = vunpack.c.l.b16 %v955
    %v3624 = vunpack.c.h.b16 %v955
    %v3625 = vunpack.c.l.b16 %v956
    %v3626 = vunpack.c.h.b16 %v956
    %v3627 = vunpack.c.l.b16 %v957
    %v3628 = vunpack.c.h.b16 %v957
    %v3629 = vunpack.c.l.b16 %v958
    %v3630 = vunpack.c.h.b16 %v958
    %v3631 = vunpack.c.l.b16 %v959
    %v3632 = vunpack.c.h.b16 %v959
    %v3633 = vunpack.c.l.b16 %v960
    %v3634 = vunpack.c.h.b16 %v960
    %v3635 = vunpack.c.l.b16 %v961
    %v3636 = vunpack.c.h.b16 %v961
    %v3637 = vunpack.c.l.b16 %v962
    %v3638 = vunpack.c.h.b16 %v962
    %v3639 = vunpack.c.l.b16 %v963
    %v3640 = vunpack.c.h.b16 %v963
    %v3641 = vunpack.c.l.b16 %v964
    %v3642 = vunpack.c.h.b16 %v964
    %v3643 = vunpack.c.l.b16 %v965
    %v3644 = vunpack.c.h.b16 %v965
    %v3645 = vunpack.c.l.b16 %v966
    %v3646 = vunpack.c.h.b16 %v966
    %v3647 = vunpack.c.l.b16 %v967
    %v3648 = vunpack.c.h.b16 %v967
    %v3649 = vunpack.c.l.b16 %v968
    %v3650 = vunpack.c.h.b16 %v968
    %v3651 = vunpack.c.l.b16 %v969
    %v3652 = vunpack.c.h.b16 %v969
    %v3653 = vunpack.c.l.b16 %v970
    %v3654 = vunpack.c.h.b16 %v970
    %v3655 = vunpack.c.l.b16 %v971
    %v3656 = vunpack.c.h.b16 %v971
    %v3657 = vunpack.c.l.b16 %v972
    %v3658 = vunpack.c.h.b16 %v972
    %v3659 = vunpack.c.l.b16 %v973
    %v3660 = vunpack.c.h.b16 %v973
    %v3661 = vunpack.c.l.b16 %v974
    %v3662 = vunpack.c.h.b16 %v974
    %v3663 = vunpack.c.l.b16 %v975
    %v3664 = vunpack.c.h.b16 %v975
    %v3665 = vunpack.c.l.b16 %v976
    %v3666 = vunpack.c.h.b16 %v976
    %v3667 = vunpack.c.l.b16 %v977
    %v3668 = vunpack.c.h.b16 %v977
    %v3669 = vunpack.c.l.b16 %v978
    %v3670 = vunpack.c.h.b16 %v978
    %v3671 = vunpack.c.l.b16 %v979
    %v3672 = vunpack.c.h.b16 %v979
    %v3673 = vunpack.c.l.b16 %v980
    %v3674 = vunpack.c.h.b16 %v980
    %v3675 = vunpack.c.l.b16 %v981
    %v3676 = vunpack.c.h.b16 %v981
    %v3677 = vunpack.c.l.b16 %v982
    %v3678 = vunpack.c.h.b16 %v982
    %v3679 = vunpack.c.l.b16 %v983
    %v3680 = vunpack.c.h.b16 %v983
    %v3681 = vunpack.c.l.b16 %v984
    %v3682 = vunpack.c.h.b16 %v984
    %v3683 = vunpack.c.l.b16 %v985
    %v3684 = vunpack.c.h.b16 %v985
    %v3685 = vunpack.c.l.b16 %v986
    %v3686 = vunpack.c.h.b16 %v986
    %v3687 = vunpack.c.l.b16 %v987
    %v3688 = vunpack.c.h.b16 %v987
    %v3689 = vunpack.c.l.b16 %v988
    %v3690 = vunpack.c.h.b16 %v988
    %v3691 = vunpack.c.l.b16 %v989
    %v3692 = vunpack.c.h.b16 %v989
    %v3693 = vunpack.c.l.b16 %v990
    %v3694 = vunpack.c.h.b16 %v990
    %v3695 = vunpack.c.l.b16 %v991
    %v3696 = vunpack.c.h.b16 %v991
    %v3697 = vunpack.c.l.b16 %v992
    %v3698 = vunpack.c.h.b16 %v992
    %v3699 = vunpack.c.l.b16 %v993
    %v3700 = vunpack.c.h.b16 %v993
    %v3701 = vunpack.c.l.b16 %v994
    %v3702 = vunpack.c.h.b16 %v994
    %v3703 = vunpack.c.l.b16 %v995
    %v3704 = vunpack.c.h.b16 %v995
    %v3705 = vunpack.c.l.b16 %v996
    %v3706 = vunpack.c.h.b16 %v996
    %v3707 = vunpack.c.l.b16 %v997
    %v3708 = vunpack.c.h.b16 %v997
    %v3709 = vunpack.c.l.b16 %v998
    %v3710 = vunpack.c.h.b16 %v998
    %v3711 = vunpack.c.l.b16 %v999
    %v3712 = vunpack.c.h.b16 %v999
    %v3713 = vunpack.c.l.b16 %v1000
    %v3714 = vunpack.c.h.b16 %v1000
    %v3715 = vunpack.c.l.b16 %v1001
    %v3716 = vunpack.c.h.b16 %v1001
    %v3717 = vunpack.c.l.b16 %v1002
    %v3718 = vunpack.c.h.b16 %v1002
    %v3719 = vunpack.c.l.b16 %v1003
    %v3720 = vunpack.c.h.b16 %v1003
    %v3721 = vunpack.c.l.b16 %v1004
    %v3722 = vunpack.c.h.b16 %v1004
    %v3723 = vunpack.c.l.b16 %v1005
    %v3724 = vunpack.c.h.b16 %v1005
    %v3725 = vunpack.c.l.b16 %v1006
    %v3726 = vunpack.c.h.b16 %v1006
    %v3727 = vunpack.c.l.b16 %v1007
    %v3728 = vunpack.c.h.b16 %v1007
    %v3729 = vunpack.c.l.b16 %v1008
    %v3730 = vunpack.c.h.b16 %v1008
    %v3731 = vunpack.c.l.b16 %v1009
    %v3732 = vunpack.c.h.b16 %v1009
    %v3733 = vunpack.c.l.b16 %v1010
    %v3734 = vunpack.c.h.b16 %v1010
    %v3735 = vunpack.c.l.b16 %v1011
    %v3736 = vunpack.c.h.b16 %v1011
    %v3737 = vunpack.c.l.b16 %v1012
    %v3738 = vunpack.c.h.b16 %v1012
    %v3739 = vunpack.c.l.b16 %v1013
    %v3740 = vunpack.c.h.b16 %v1013
    %v3741 = vunpack.c.l.b16 %v1014
    %v3742 = vunpack.c.h.b16 %v1014
    %v3743 = vunpack.c.l.b16 %v1015
    %v3744 = vunpack.c.h.b16 %v1015
    %v3745 = vunpack.c.l.b16 %v1016
    %v3746 = vunpack.c.h.b16 %v1016
    %v3747 = vunpack.c.l.b16 %v1017
    %v3748 = vunpack.c.h.b16 %v1017
    %v3749 = vunpack.c.l.b16 %v1018
    %v3750 = vunpack.c.h.b16 %v1018
    %v3751 = vunpack.c.l.b16 %v1019
    %v3752 = vunpack.c.h.b16 %v1019
    %v3753 = vunpack.c.l.b16 %v1020
    %v3754 = vunpack.c.h.b16 %v1020
    %v3755 = vunpack.c.l.b16 %v1021
    %v3756 = vunpack.c.h.b16 %v1021
    %v3757 = vunpack.c.l.b16 %v1022
    %v3758 = vunpack.c.h.b16 %v1022
    %v3759 = vunpack.c.l.b16 %v1023
    %v3760 = vunpack.c.h.b16 %v1023
    %v3761 = vunpack.c.l.b16 %v1024
    %v3762 = vunpack.c.h.b16 %v1024
    %v3763 = vunpack.c.l.b16 %v1025
    %v3764 = vunpack.c.h.b16 %v1025
    %v3765 = vunpack.c.l.b16 %v1026
    %v3766 = vunpack.c.h.b16 %v1026
    %v3767 = vunpack.c.l.b16 %v1027
    %v3768 = vunpack.c.h.b16 %v1027
    %v3769 = vunpack.c.l.b16 %v1028
    %v3770 = vunpack.c.h.b16 %v1028
    %v3771 = vunpack.c.l.b16 %v1029
    %v3772 = vunpack.c.h.b16 %v1029
    %v3773 = vunpack.c.l.b16 %v1030
    %v3774 = vunpack.c.h.b16 %v1030
    %v3775 = vunpack.c.l.b16 %v1031
    %v3776 = vunpack.c.h.b16 %v1031
    %v3777 = vunpack.c.l.b16 %v1032
    %v3778 = vunpack.c.h.b16 %v1032
    %v3779 = vunpack.c.l.b16 %v1033
    %v3780 = vunpack.c.h.b16 %v1033
    %v3781 = vunpack.c.l.b16 %v1034
    %v3782 = vunpack.c.h.b16 %v1034
    %v3783 = vunpack.c.l.b16 %v1035
    %v3784 = vunpack.c.h.b16 %v1035
    %v3785 = vunpack.c.l.b16 %v1036
    %v3786 = vunpack.c.h.b16 %v1036
    %v3787 = vunpack.c.l.b16 %v1037
    %v3788 = vunpack.c.h.b16 %v1037
    %v3789 = vunpack.c.l.b16 %v1038
    %v3790 = vunpack.c.h.b16 %v1038
    %v3791 = vunpack.c.l.b16 %v1039
    %v3792 = vunpack.c.h.b16 %v1039
    %v3793 = vunpack.c.l.b16 %v1040
    %v3794 = vunpack.c.h.b16 %v1040
    %v3795 = vunpack.c.l.b16 %v1041
    %v3796 = vunpack.c.h.b16 %v1041
    %v3797 = vunpack.c.l.b16 %v1042
    %v3798 = vunpack.c.h.b16 %v1042
    %v3799 = vunpack.c.l.b16 %v1043
    %v3800 = vunpack.c.h.b16 %v1043
    %v3801 = vunpack.c.l.b16 %v1044
    %v3802 = vunpack.c.h.b16 %v1044
    %v3803 = vunpack.c.l.b16 %v1045
    %v3804 = vunpack.c.h.b16 %v1045
    %v3805 = vunpack.c.l.b16 %v1046
    %v3806 = vunpack.c.h.b16 %v1046
    %v3807 = vunpack.c.l.b16 %v1047
    %v3808 = vunpack.c.h.b16 %v1047
    %v3809 = vunpack.c.l.b16 %v1048
    %v3810 = vunpack.c.h.b16 %v1048
    %v3811 = vunpack.c.l.b16 %v1049
    %v3812 = vunpack.c.h.b16 %v1049
    %v3813 = vunpack.c.l.b16 %v1050
    %v3814 = vunpack.c.h.b16 %v1050
    %v3815 = vunpack.c.l.b16 %v1051
    %v3816 = vunpack.c.h.b16 %v1051
    %v3817 = vunpack.c.l.b16 %v1052
    %v3818 = vunpack.c.h.b16 %v1052
    %v3819 = vunpack.c.l.b16 %v1053
    %v3820 = vunpack.c.h.b16 %v1053
    %v3821 = vunpack.c.l.b16 %v1054
    %v3822 = vunpack.c.h.b16 %v1054
    %v3823 = vunpack.c.l.b16 %v1055
    %v3824 = vunpack.c.h.b16 %v1055
    %v3825 = vunpack.c.l.b16 %v1056
    %v3826 = vunpack.c.h.b16 %v1056
    %v3827 = vunpack.c.l.b16 %v1057
    %v3828 = vunpack.c.h.b16 %v1057
    %v3829 = vunpack.c.l.b16 %v1058
    %v3830 = vunpack.c.h.b16 %v1058
    %v3831 = vunpack.c.l.b16 %v1059
    %v3832 = vunpack.c.h.b16 %v1059
    %v3833 = vunpack.c.l.b16 %v1060
    %v3834 = vunpack.c.h.b16 %v1060
    %v3835 = vunpack.c.l.b16 %v1061
    %v3836 = vunpack.c.h.b16 %v1061
    %v3837 = vunpack.c.l.b16 %v1062
    %v3838 = vunpack.c.h.b16 %v1062
    %v3839 = vunpack.c.l.b16 %v1063
    %v3840 = vunpack.c.h.b16 %v1063
    %v3841 = vunpack.c.l.b16 %v1064
    %v3842 = vunpack.c.h.b16 %v1064
    %v3843 = vunpack.c.l.b16 %v1065
    %v3844 = vunpack.c.h.b16 %v1065
    %v3845 = vunpack.c.l.b16 %v1066
    %v3846 = vunpack.c.h.b16 %v1066
    %v3847 = vunpack.c.l.b16 %v1067
    %v3848 = vunpack.c.h.b16 %v1067
    %v3849 = vunpack.c.l.b16 %v1068
    %v3850 = vunpack.c.h.b16 %v1068
    %v3851 = vunpack.c.l.b16 %v1069
    %v3852 = vunpack.c.h.b16 %v1069
    %v3853 = vunpack.c.l.b16 %v1070
    %v3854 = vunpack.c.h.b16 %v1070
    %v3855 = vunpack.c.l.b16 %v1071
    %v3856 = vunpack.c.h.b16 %v1071
    %v3857 = vunpack.c.l.b16 %v1072
    %v3858 = vunpack.c.h.b16 %v1072
    %v3859 = vunpack.c.l.b16 %v1073
    %v3860 = vunpack.c.h.b16 %v1073
    %v3861 = vunpack.c.l.b16 %v1074
    %v3862 = vunpack.c.h.b16 %v1074
    %v3863 = vunpack.c.l.b16 %v1075
    %v3864 = vunpack.c.h.b16 %v1075
    %v3865 = vunpack.c.l.b16 %v1076
    %v3866 = vunpack.c.h.b16 %v1076
    %v3867 = vunpack.c.l.b16 %v1077
    %v3868 = vunpack.c.h.b16 %v1077
    %v3869 = vunpack.c.l.b16 %v1078
    %v3870 = vunpack.c.h.b16 %v1078
    %v3871 = vunpack.c.l.b16 %v1079
    %v3872 = vunpack.c.h.b16 %v1079
    %v3873 = vunpack.c.l.b16 %v1080
    %v3874 = vunpack.c.h.b16 %v1080
    %v3875 = vunpack.c.l.b16 %v1081
    %v3876 = vunpack.c.h.b16 %v1081
    %v3877 = vunpack.c.l.b16 %v1082
    %v3878 = vunpack.c.h.b16 %v1082
    %v3879 = vunpack.c.l.b16 %v1083
    %v3880 = vunpack.c.h.b16 %v1083
    %v3881 = vunpack.c.l.b16 %v1084
    %v3882 = vunpack.c.h.b16 %v1084
    %v3883 = vunpack.c.l.b16 %v1085
    %v3884 = vunpack.c.h.b16 %v1085
    %v3885 = vunpack.c.l.b16 %v1086
    %v3886 = vunpack.c.h.b16 %v1086
    %v3887 = vunpack.c.l.b16 %v1087
    %v3888 = vunpack.c.h.b16 %v1087
    %v3889 = vunpack.c.l.b16 %v1088
    %v3890 = vunpack.c.h.b16 %v1088
    %v3891 = vunpack.c.l.b16 %v1089
    %v3892 = vunpack.c.h.b16 %v1089
    %v3893 = vunpack.c.l.b16 %v1090
    %v3894 = vunpack.c.h.b16 %v1090
    %v3895 = vunpack.c.l.b16 %v1091
    %v3896 = vunpack.c.h.b16 %v1091
    %v3897 = vunpack.c.l.b16 %v1092
    %v3898 = vunpack.c.h.b16 %v1092
    %v3899 = vunpack.c.l.b16 %v1093
    %v3900 = vunpack.c.h.b16 %v1093
    %v3901 = vunpack.c.l.b16 %v1094
    %v3902 = vunpack.c.h.b16 %v1094
    %v3903 = vunpack.c.l.b16 %v1095
    %v3904 = vunpack.c.h.b16 %v1095
    %v3905 = vunpack.c.l.b16 %v1096
    %v3906 = vunpack.c.h.b16 %v1096
    %v3907 = vunpack.c.l.b16 %v1097
    %v3908 = vunpack.c.h.b16 %v1097
    %v3909 = vunpack.c.l.b16 %v1098
    %v3910 = vunpack.c.h.b16 %v1098
    %v3911 = vunpack.c.l.b16 %v1099
    %v3912 = vunpack.c.h.b16 %v1099
    %v3913 = vunpack.c.l.b16 %v1100
    %v3914 = vunpack.c.h.b16 %v1100
    %v3915 = vunpack.c.l.b16 %v1101
    %v3916 = vunpack.c.h.b16 %v1101
    %v3917 = vunpack.c.l.b16 %v1102
    %v3918 = vunpack.c.h.b16 %v1102
    %v3919 = vunpack.c.l.b16 %v1103
    %v3920 = vunpack.c.h.b16 %v1103
    %v3921 = vunpack.c.l.b16 %v1104
    %v3922 = vunpack.c.h.b16 %v1104
    %v3923 = vunpack.c.l.b16 %v1105
    %v3924 = vunpack.c.h.b16 %v1105
    %v3925 = vunpack.c.l.b16 %v1106
    %v3926 = vunpack.c.h.b16 %v1106
    %v3927 = vunpack.c.l.b16 %v1107
    %v3928 = vunpack.c.h.b16 %v1107
    %v3929 = vunpack.c.l.b16 %v1108
    %v3930 = vunpack.c.h.b16 %v1108
    %v3931 = vunpack.c.l.b16 %v1109
    %v3932 = vunpack.c.h.b16 %v1109
    %v3933 = vunpack.c.l.b16 %v1110
    %v3934 = vunpack.c.h.b16 %v1110
    %v3935 = vunpack.c.l.b16 %v1111
    %v3936 = vunpack.c.h.b16 %v1111
    %v3937 = vunpack.c.l.b16 %v1112
    %v3938 = vunpack.c.h.b16 %v1112
    %v3939 = vunpack.c.l.b16 %v1113
    %v3940 = vunpack.c.h.b16 %v1113
    %v3941 = vunpack.c.l.b16 %v1114
    %v3942 = vunpack.c.h.b16 %v1114
    %v3943 = vunpack.c.l.b16 %v1115
    %v3944 = vunpack.c.h.b16 %v1115
    %v3945 = vunpack.c.l.b16 %v1116
    %v3946 = vunpack.c.h.b16 %v1116
    %v3947 = vunpack.c.l.b16 %v1117
    %v3948 = vunpack.c.h.b16 %v1117
    %v3949 = vunpack.c.l.b16 %v1118
    %v3950 = vunpack.c.h.b16 %v1118
    %v3951 = vunpack.c.l.b16 %v1119
    %v3952 = vunpack.c.h.b16 %v1119
    %v3953 = vunpack.c.l.b16 %v1120
    %v3954 = vunpack.c.h.b16 %v1120
    %v3955 = vunpack.c.l.b16 %v1121
    %v3956 = vunpack.c.h.b16 %v1121
    %v3957 = vunpack.c.l.b16 %v1122
    %v3958 = vunpack.c.h.b16 %v1122
    %v3959 = vunpack.c.l.b16 %v1123
    %v3960 = vunpack.c.h.b16 %v1123
    %v3961 = vunpack.c.l.b16 %v1124
    %v3962 = vunpack.c.h.b16 %v1124
    %v3963 = vunpack.c.l.b16 %v1125
    %v3964 = vunpack.c.h.b16 %v1125
    %v3965 = vunpack.c.l.b16 %v1126
    %v3966 = vunpack.c.h.b16 %v1126
    %v3967 = vunpack.c.l.b16 %v1127
    %v3968 = vunpack.c.h.b16 %v1127
    %v3969 = vunpack.c.l.b16 %v1128
    %v3970 = vunpack.c.h.b16 %v1128
    %v3971 = vunpack.c.l.b16 %v1129
    %v3972 = vunpack.c.h.b16 %v1129
    %v3973 = vunpack.c.l.b16 %v1130
    %v3974 = vunpack.c.h.b16 %v1130
    %v3975 = vunpack.c.l.b16 %v1131
    %v3976 = vunpack.c.h.b16 %v1131
    %v3977 = vunpack.c.l.b16 %v1132
    %v3978 = vunpack.c.h.b16 %v1132
    %v3979 = vunpack.c.l.b16 %v1133
    %v3980 = vunpack.c.h.b16 %v1133
    %v3981 = vunpack.c.l.b16 %v1134
    %v3982 = vunpack.c.h.b16 %v1134
    %v3983 = vunpack.c.l.b16 %v1135
    %v3984 = vunpack.c.h.b16 %v1135
    %v3985 = vunpack.c.l.b16 %v1136
    %v3986 = vunpack.c.h.b16 %v1136
    %v3987 = vunpack.c.l.b16 %v1137
    %v3988 = vunpack.c.h.b16 %v1137
    %v3989 = vunpack.c.l.b16 %v1138
    %v3990 = vunpack.c.h.b16 %v1138
    %v3991 = vunpack.c.l.b16 %v1139
    %v3992 = vunpack.c.h.b16 %v1139
    %v3993 = vunpack.c.l.b16 %v1140
    %v3994 = vunpack.c.h.b16 %v1140
    %v3995 = vunpack.c.l.b16 %v1141
    %v3996 = vunpack.c.h.b16 %v1141
    %v3997 = vunpack.c.l.b16 %v1142
    %v3998 = vunpack.c.h.b16 %v1142
    %v3999 = vunpack.c.l.b16 %v1143
    %v4000 = vunpack.c.h.b16 %v1143
    %v4001 = vunpack.c.l.b16 %v1144
    %v4002 = vunpack.c.h.b16 %v1144
    %v4003 = vunpack.c.l.b16 %v1145
    %v4004 = vunpack.c.h.b16 %v1145
    %v4005 = vunpack.c.l.b16 %v1146
    %v4006 = vunpack.c.h.b16 %v1146
    %v4007 = vunpack.c.l.b16 %v1147
    %v4008 = vunpack.c.h.b16 %v1147
    %v4009 = vunpack.c.l.b16 %v1148
    %v4010 = vunpack.c.h.b16 %v1148
    %v4011 = vunpack.c.l.b16 %v1149
    %v4012 = vunpack.c.h.b16 %v1149
    %v4013 = vunpack.c.l.b16 %v1150
    %v4014 = vunpack.c.h.b16 %v1150
    %v4015 = vunpack.c.l.b16 %v1151
    %v4016 = vunpack.c.h.b16 %v1151
    %v4017 = vunpack.c.l.b16 %v1152
    %v4018 = vunpack.c.h.b16 %v1152
    %v4019 = vunpack.c.l.b16 %v1153
    %v4020 = vunpack.c.h.b16 %v1153
    %v4021 = vunpack.c.l.b16 %v1154
    %v4022 = vunpack.c.h.b16 %v1154
    %v4023 = vunpack.c.l.b16 %v1155
    %v4024 = vunpack.c.h.b16 %v1155
    %v4025 = vunpack.c.l.b16 %v1156
    %v4026 = vunpack.c.h.b16 %v1156
    %v4027 = vunpack.c.l.b16 %v1157
    %v4028 = vunpack.c.h.b16 %v1157
    %v4029 = vunpack.c.l.b16 %v1158
    %v4030 = vunpack.c.h.b16 %v1158
    %v4031 = vunpack.c.l.b16 %v1159
    %v4032 = vunpack.c.h.b16 %v1159
    %v4033 = vunpack.c.l.b16 %v1160
    %v4034 = vunpack.c.h.b16 %v1160
    %v4035 = vunpack.c.l.b16 %v1161
    %v4036 = vunpack.c.h.b16 %v1161
    %v4037 = vunpack.c.l.b16 %v1162
    %v4038 = vunpack.c.h.b16 %v1162
    %v4039 = vunpack.c.l.b16 %v1163
    %v4040 = vunpack.c.h.b16 %v1163
    %v4041 = vunpack.c.l.b16 %v1164
    %v4042 = vunpack.c.h.b16 %v1164
    %v4043 = vunpack.c.l.b16 %v1165
    %v4044 = vunpack.c.h.b16 %v1165
    %v4045 = vunpack.c.l.b16 %v1166
    %v4046 = vunpack.c.h.b16 %v1166
    %v4047 = vunpack.c.l.b16 %v1167
    %v4048 = vunpack.c.h.b16 %v1167
    %v4049 = vunpack.c.l.b16 %v1168
    %v4050 = vunpack.c.h.b16 %v1168
    %v4051 = vunpack.c.l.b16 %v1169
    %v4052 = vunpack.c.h.b16 %v1169
    %v4053 = vunpack.c.l.b16 %v1170
    %v4054 = vunpack.c.h.b16 %v1170
    %v4055 = vunpack.c.l.b16 %v1171
    %v4056 = vunpack.c.h.b16 %v1171
    %v4057 = vunpack.c.l.b16 %v1172
    %v4058 = vunpack.c.h.b16 %v1172
    %v4059 = vunpack.c.l.b16 %v1173
    %v4060 = vunpack.c.h.b16 %v1173
    %v4061 = vunpack.c.l.b16 %v1174
    %v4062 = vunpack.c.h.b16 %v1174
    %v4063 = vunpack.c.l.b16 %v1175
    %v4064 = vunpack.c.h.b16 %v1175
    %v4065 = vunpack.c.l.b16 %v1176
    %v4066 = vunpack.c.h.b16 %v1176
    %v4067 = vunpack.c.l.b16 %v1177
    %v4068 = vunpack.c.h.b16 %v1177
    %v4069 = vunpack.c.l.b16 %v1178
    %v4070 = vunpack.c.h.b16 %v1178
    %v4071 = vunpack.c.l.b16 %v1179
    %v4072 = vunpack.c.h.b16 %v1179
    %v4073 = vunpack.c.l.b16 %v1180
    %v4074 = vunpack.c.h.b16 %v1180
    %v4075 = vunpack.c.l.b16 %v1181
    %v4076 = vunpack.c.h.b16 %v1181
    %v4077 = vunpack.c.l.b16 %v1182
    %v4078 = vunpack.c.h.b16 %v1182
    %v4079 = vunpack.c.l.b16 %v1183
    %v4080 = vunpack.c.h.b16 %v1183
    %v4081 = vunpack.c.l.b16 %v1184
    %v4082 = vunpack.c.h.b16 %v1184
    %v4083 = vunpack.c.l.b16 %v1185
    %v4084 = vunpack.c.h.b16 %v1185
    %v4085 = vunpack.c.l.b16 %v1186
    %v4086 = vunpack.c.h.b16 %v1186
    %v4087 = vunpack.c.l.b16 %v1187
    %v4088 = vunpack.c.h.b16 %v1187
    %v4089 = vunpack.c.l.b16 %v1188
    %v4090 = vunpack.c.h.b16 %v1188
    %v4091 = vunpack.c.l.b16 %v1189
    %v4092 = vunpack.c.h.b16 %v1189
    %v4093 = vunpack.c.l.b16 %v1190
    %v4094 = vunpack.c.h.b16 %v1190
    %v4095 = vunpack.c.l.b16 %v1191
    %v4096 = vunpack.c.h.b16 %v1191
    %v4097 = vunpack.c.l.b16 %v1192
    %v4098 = vunpack.c.h.b16 %v1192
    %v4099 = vunpack.c.l.b16 %v1193
    %v4100 = vunpack.c.h.b16 %v1193
    %v4101 = vunpack.c.l.b16 %v1194
    %v4102 = vunpack.c.h.b16 %v1194
    %v4103 = vunpack.c.l.b16 %v1195
    %v4104 = vunpack.c.h.b16 %v1195
    %v4105 = vunpack.c.l.b16 %v1196
    %v4106 = vunpack.c.h.b16 %v1196
    %v4107 = vunpack.c.l.b16 %v1197
    %v4108 = vunpack.c.h.b16 %v1197
    %v4109 = vunpack.c.l.b16 %v1198
    %v4110 = vunpack.c.h.b16 %v1198
    %v4111 = vunpack.c.l.b16 %v1199
    %v4112 = vunpack.c.h.b16 %v1199
    %v4113 = vunpack.c.l.b16 %v1200
    %v4114 = vunpack.c.h.b16 %v1200
    %v4115 = vunpack.c.l.b16 %v1201
    %v4116 = vunpack.c.h.b16 %v1201
    %v4117 = vunpack.c.l.b16 %v1202
    %v4118 = vunpack.c.h.b16 %v1202
    %v4119 = vunpack.c.l.b16 %v1203
    %v4120 = vunpack.c.h.b16 %v1203
    %v4121 = vunpack.c.l.b16 %v1204
    %v4122 = vunpack.c.h.b16 %v1204
    %v4123 = vunpack.c.l.b16 %v1205
    %v4124 = vunpack.c.h.b16 %v1205
    %v4125 = vunpack.c.l.b16 %v1206
    %v4126 = vunpack.c.h.b16 %v1206
    %v4127 = vunpack.c.l.b16 %v1207
    %v4128 = vunpack.c.h.b16 %v1207
    %v4129 = vunpack.c.l.b16 %v1208
    %v4130 = vunpack.c.h.b16 %v1208
    %v4131 = vunpack.c.l.b16 %v1209
    %v4132 = vunpack.c.h.b16 %v1209
    %v4133 = vunpack.c.l.b16 %v1210
    %v4134 = vunpack.c.h.b16 %v1210
    %v4135 = vunpack.c.l.b16 %v1211
    %v4136 = vunpack.c.h.b16 %v1211
    %v4137 = vunpack.c.l.b16 %v1212
    %v4138 = vunpack.c.h.b16 %v1212
    %v4139 = vunpack.c.l.b16 %v1213
    %v4140 = vunpack.c.h.b16 %v1213
    %v4141 = vunpack.c.l.b16 %v1214
    %v4142 = vunpack.c.h.b16 %v1214
    %v4143 = vunpack.c.l.b16 %v1215
    %v4144 = vunpack.c.h.b16 %v1215
    %v4145 = vunpack.c.l.b16 %v1216
    %v4146 = vunpack.c.h.b16 %v1216
    %v4147 = vunpack.c.l.b16 %v1217
    %v4148 = vunpack.c.h.b16 %v1217
    %v4149 = vunpack.c.l.b16 %v1218
    %v4150 = vunpack.c.h.b16 %v1218
    %v4151 = vunpack.c.l.b16 %v1219
    %v4152 = vunpack.c.h.b16 %v1219
    %v4153 = vunpack.c.l.b16 %v1220
    %v4154 = vunpack.c.h.b16 %v1220
    %v4155 = vunpack.c.l.b16 %v1221
    %v4156 = vunpack.c.h.b16 %v1221
    %v4157 = vunpack.c.l.b16 %v1222
    %v4158 = vunpack.c.h.b16 %v1222
    %v4159 = vunpack.c.l.b16 %v1223
    %v4160 = vunpack.c.h.b16 %v1223
    %v4161 = vunpack.c.l.b16 %v1224
    %v4162 = vunpack.c.h.b16 %v1224
    %v4163 = vunpack.c.l.b16 %v1225
    %v4164 = vunpack.c.h.b16 %v1225
    %v4165 = vunpack.c.l.b16 %v1226
    %v4166 = vunpack.c.h.b16 %v1226
    %v4167 = vunpack.c.l.b16 %v1227
    %v4168 = vunpack.c.h.b16 %v1227
    %v4169 = vunpack.c.l.b16 %v1228
    %v4170 = vunpack.c.h.b16 %v1228
    %v4171 = vunpack.c.l.b16 %v1229
    %v4172 = vunpack.c.h.b16 %v1229
    %v4173 = vunpack.c.l.b16 %v1230
    %v4174 = vunpack.c.h.b16 %v1230
    %v4175 = vunpack.c.l.b16 %v1231
    %v4176 = vunpack.c.h.b16 %v1231
    %v4177 = vunpack.c.l.b16 %v1232
    %v4178 = vunpack.c.h.b16 %v1232
    %v4179 = vunpack.c.l.b16 %v1233
    %v4180 = vunpack.c.h.b16 %v1233
    %v4181 = vunpack.c.l.b16 %v1234
    %v4182 = vunpack.c.h.b16 %v1234
    %v4183 = vunpack.c.l.b16 %v1235
    %v4184 = vunpack.c.h.b16 %v1235
    %v4185 = vunpack.c.l.b16 %v1236
    %v4186 = vunpack.c.h.b16 %v1236
    %v4187 = vunpack.c.l.b16 %v1237
    %v4188 = vunpack.c.h.b16 %v1237
    %v4189 = vunpack.c.l.b16 %v1238
    %v4190 = vunpack.c.h.b16 %v1238
    %v4191 = vunpack.c.l.b16 %v1239
    %v4192 = vunpack.c.h.b16 %v1239
    %v4193 = vunpack.c.l.b16 %v1240
    %v4194 = vunpack.c.h.b16 %v1240
    %v4195 = vunpack.c.l.b16 %v1241
    %v4196 = vunpack.c.h.b16 %v1241
    %v4197 = vunpack.c.l.b16 %v1242
    %v4198 = vunpack.c.h.b16 %v1242
    %v4199 = vunpack.c.l.b16 %v1243
    %v4200 = vunpack.c.h.b16 %v1243
    %v4201 = vunpack.c.l.b16 %v1244
    %v4202 = vunpack.c.h.b16 %v1244
    %v4203 = vunpack.c.l.b16 %v1245
    %v4204 = vunpack.c.h.b16 %v1245
    %v4205 = vunpack.c.l.b16 %v1246
    %v4206 = vunpack.c.h.b16 %v1246
    %v4207 = vunpack.c.l.b16 %v1247
    %v4208 = vunpack.c.h.b16 %v1247
    %v4209 = vunpack.c.l.b16 %v1248
    %v4210 = vunpack.c.h.b16 %v1248
    %v4211 = vunpack.c.l.b16 %v1249
    %v4212 = vunpack.c.h.b16 %v1249
    %v4213 = vunpack.c.l.b16 %v1250
    %v4214 = vunpack.c.h.b16 %v1250
    %v4215 = vunpack.c.l.b16 %v1251
    %v4216 = vunpack.c.h.b16 %v1251
    %v4217 = vunpack.c.l.b16 %v1252
    %v4218 = vunpack.c.h.b16 %v1252
    %v4219 = vunpack.c.l.b16 %v1253
    %v4220 = vunpack.c.h.b16 %v1253
    %v4221 = vunpack.c.l.b16 %v1254
    %v4222 = vunpack.c.h.b16 %v1254
    %v4223 = vunpack.c.l.b16 %v1255
    %v4224 = vunpack.c.h.b16 %v1255
    %v4225 = vunpack.c.l.b16 %v1256
    %v4226 = vunpack.c.h.b16 %v1256
    %v4227 = vunpack.c.l.b16 %v1257
    %v4228 = vunpack.c.h.b16 %v1257
    %v4229 = vunpack.c.l.b16 %v1258
    %v4230 = vunpack.c.h.b16 %v1258
    %v4231 = vunpack.c.l.b16 %v1259
    %v4232 = vunpack.c.h.b16 %v1259
    %v4233 = vunpack.c.l.b16 %v1260
    %v4234 = vunpack.c.h.b16 %v1260
    %v4235 = vunpack.c.l.b16 %v1261
    %v4236 = vunpack.c.h.b16 %v1261
    %v4237 = vunpack.c.l.b16 %v1262
    %v4238 = vunpack.c.h.b16 %v1262
    %v4239 = vunpack.c.l.b16 %v1263
    %v4240 = vunpack.c.h.b16 %v1263
    %v4241 = vunpack.c.l.b16 %v1264
    %v4242 = vunpack.c.h.b16 %v1264
    %v4243 = vunpack.c.l.b16 %v1265
    %v4244 = vunpack.c.h.b16 %v1265
    %v4245 = vunpack.c.l.b16 %v1266
    %v4246 = vunpack.c.h.b16 %v1266
    %v4247 = vunpack.c.l.b16 %v1267
    %v4248 = vunpack.c.h.b16 %v1267
    %v4249 = vunpack.c.l.b16 %v1268
    %v4250 = vunpack.c.h.b16 %v1268
    %v4251 = vunpack.c.l.b16 %v1269
    %v4252 = vunpack.c.h.b16 %v1269
    %v4253 = vunpack.c.l.b16 %v1270
    %v4254 = vunpack.c.h.b16 %v1270
    %v4255 = vunpack.c.l.b16 %v1271
    %v4256 = vunpack.c.h.b16 %v1271
    %v4257 = vunpack.c.l.b16 %v1272
    %v4258 = vunpack.c.h.b16 %v1272
    %v4259 = vunpack.c.l.b16 %v1273
    %v4260 = vunpack.c.h.b16 %v1273
    %v4261 = vunpack.c.l.b16 %v1274
    %v4262 = vunpack.c.h.b16 %v1274
    %v4263 = vunpack.c.l.b16 %v1275
    %v4264 = vunpack.c.h.b16 %v1275
    %v4265 = vunpack.c.l.b16 %v1276
    %v4266 = vunpack.c.h.b16 %v1276
    %v4267 = vunpack.c.l.b16 %v1277
    %v4268 = vunpack.c.h.b16 %v1277
    %v4269 = vunpack.c.l.b16 %v1278
    %v4270 = vunpack.c.h.b16 %v1278
    %v4271 = vunpack.c.l.b16 %v1279
    %v4272 = vunpack.c.h.b16 %v1279
    %v4273 = vunpack.c.l.b16 %v1280
    %v4274 = vunpack.c.h.b16 %v1280
    %v4275 = vunpack.c.l.b16 %v1281
    %v4276 = vunpack.c.h.b16 %v1281
    %v4277 = vunpack.c.l.b16 %v1282
    %v4278 = vunpack.c.h.b16 %v1282
    %v4279 = vunpack.c.l.b16 %v1283
    %v4280 = vunpack.c.h.b16 %v1283
    %v4281 = vunpack.c.l.b16 %v1284
    %v4282 = vunpack.c.h.b16 %v1284
    %v4283 = vunpack.c.l.b16 %v1285
    %v4284 = vunpack.c.h.b16 %v1285
    %v4285 = vunpack.c.l.b16 %v1286
    %v4286 = vunpack.c.h.b16 %v1286
    %v4287 = vunpack.c.l.b16 %v1287
    %v4288 = vunpack.c.h.b16 %v1287
    %v4289 = vunpack.c.l.b16 %v1288
    %v4290 = vunpack.c.h.b16 %v1288
    %v4291 = vunpack.c.l.b16 %v1289
    %v4292 = vunpack.c.h.b16 %v1289
    %v4293 = vunpack.c.l.b16 %v1290
    %v4294 = vunpack.c.h.b16 %v1290
    %v4295 = vunpack.c.l.b16 %v1291
    %v4296 = vunpack.c.h.b16 %v1291
    %v4297 = vunpack.c.l.b16 %v1292
    %v4298 = vunpack.c.h.b16 %v1292
    %v4299 = vunpack.c.l.b16 %v1293
    %v4300 = vunpack.c.h.b16 %v1293
    %v4301 = vunpack.c.l.b16 %v1294
    %v4302 = vunpack.c.h.b16 %v1294
    %v4303 = vunpack.c.l.b16 %v1295
    %v4304 = vunpack.c.h.b16 %v1295
    %v4305 = vunpack.c.l.b16 %v1296
    %v4306 = vunpack.c.h.b16 %v1296
    %v4307 = vunpack.c.l.b16 %v1297
    %v4308 = vunpack.c.h.b16 %v1297
    %v4309 = vunpack.c.l.b16 %v1298
    %v4310 = vunpack.c.h.b16 %v1298
    %v4311 = vunpack.c.l.b16 %v1299
    %v4312 = vunpack.c.h.b16 %v1299
    %v4313 = vunpack.c.l.b16 %v1300
    %v4314 = vunpack.c.h.b16 %v1300
    %v4315 = vunpack.c.l.b16 %v1301
    %v4316 = vunpack.c.h.b16 %v1301
    %v4317 = vunpack.c.l.b16 %v1302
    %v4318 = vunpack.c.h.b16 %v1302
    %v4319 = vunpack.c.l.b16 %v1303
    %v4320 = vunpack.c.h.b16 %v1303
    %v4321 = vunpack.c.l.b16 %v1304
    %v4322 = vunpack.c.h.b16 %v1304
    %v4323 = vunpack.c.l.b16 %v1305
    %v4324 = vunpack.c.h.b16 %v1305
    %v4325 = vunpack.c.l.b16 %v1306
    %v4326 = vunpack.c.h.b16 %v1306
    %v4327 = vunpack.c.l.b16 %v1307
    %v4328 = vunpack.c.h.b16 %v1307
    %v4329 = vunpack.c.l.b16 %v1308
    %v4330 = vunpack.c.h.b16 %v1308
    %v4331 = vunpack.c.l.b16 %v1309
    %v4332 = vunpack.c.h.b16 %v1309
    %v4333 = vunpack.c.l.b16 %v1310
    %v4334 = vunpack.c.h.b16 %v1310
    %v4335 = vunpack.c.l.b16 %v1311
    %v4336 = vunpack.c.h.b16 %v1311
    %v4337 = vunpack.c.l.b16 %v1312
    %v4338 = vunpack.c.h.b16 %v1312
    %v4339 = vunpack.c.l.b16 %v1313
    %v4340 = vunpack.c.h.b16 %v1313
    %v4341 = vunpack.c.l.b16 %v1314
    %v4342 = vunpack.c.h.b16 %v1314
    %v4343 = vunpack.c.l.b16 %v1315
    %v4344 = vunpack.c.h.b16 %v1315
    %v4345 = vunpack.c.l.b16 %v1316
    %v4346 = vunpack.c.h.b16 %v1316
    %v4347 = vunpack.c.l.b16 %v1317
    %v4348 = vunpack.c.h.b16 %v1317
    %v4349 = vunpack.c.l.b16 %v1318
    %v4350 = vunpack.c.h.b16 %v1318
    %v4351 = vunpack.c.l.b16 %v1319
    %v4352 = vunpack.c.h.b16 %v1319
    %v4353 = vunpack.c.l.b16 %v1320
    %v4354 = vunpack.c.h.b16 %v1320
    %v4355 = vunpack.c.l.b16 %v1321
    %v4356 = vunpack.c.h.b16 %v1321
    %v4357 = vunpack.c.l.b16 %v1322
    %v4358 = vunpack.c.h.b16 %v1322
    %v4359 = vunpack.c.l.b16 %v1323
    %v4360 = vunpack.c.h.b16 %v1323
    %v4361 = vunpack.c.l.b16 %v1324
    %v4362 = vunpack.c.h.b16 %v1324
    %v4363 = vunpack.c.l.b16 %v1325
    %v4364 = vunpack.c.h.b16 %v1325
    %v4365 = vunpack.c.l.b16 %v1326
    %v4366 = vunpack.c.h.b16 %v1326
    %v4367 = vunpack.c.l.b16 %v1327
    %v4368 = vunpack.c.h.b16 %v1327
    %v4369 = vunpack.c.l.b16 %v1328
    %v4370 = vunpack.c.h.b16 %v1328
    %v4371 = vunpack.c.l.b16 %v1329
    %v4372 = vunpack.c.h.b16 %v1329
    %v4373 = vunpack.c.l.b16 %v1330
    %v4374 = vunpack.c.h.b16 %v1330
    %v4375 = vunpack.c.l.b16 %v1331
    %v4376 = vunpack.c.h.b16 %v1331
    %v4377 = vunpack.c.l.b16 %v1332
    %v4378 = vunpack.c.h.b16 %v1332
    %v4379 = vunpack.c.l.b16 %v1333
    %v4380 = vunpack.c.h.b16 %v1333
    %v4381 = vunpack.c.l.b16 %v1334
    %v4382 = vunpack.c.h.b16 %v1334
    %v4383 = vunpack.c.l.b16 %v1335
    %v4384 = vunpack.c.h.b16 %v1335
    %v4385 = vunpack.c.l.b16 %v1336
    %v4386 = vunpack.c.h.b16 %v1336
    %v4387 = vunpack.c.l.b16 %v1337
    %v4388 = vunpack.c.h.b16 %v1337
    %v4389 = vunpack.c.l.b16 %v1338
    %v4390 = vunpack.c.h.b16 %v1338
    %v4391 = vunpack.c.l.b16 %v1339
    %v4392 = vunpack.c.h.b16 %v1339
    %v4393 = vunpack.c.l.b16 %v1340
    %v4394 = vunpack.c.h.b16 %v1340
    %v4395 = vunpack.c.l.b16 %v1341
    %v4396 = vunpack.c.h.b16 %v1341
    %v4397 = vunpack.c.l.b16 %v1342
    %v4398 = vunpack.c.h.b16 %v1342
    %v4399 = vunpack.c.l.b16 %v1343
    %v4400 = vunpack.c.h.b16 %v1343
    %v4401 = vunpack.c.l.b16 %v1344
    %v4402 = vunpack.c.h.b16 %v1344
    %v4403 = vunpack.c.l.b16 %v1345
    %v4404 = vunpack.c.h.b16 %v1345
    %v4405 = vunpack.c.l.b16 %v1346
    %v4406 = vunpack.c.h.b16 %v1346
    %v4407 = vunpack.c.l.b16 %v1347
    %v4408 = vunpack.c.h.b16 %v1347
    %v4409 = vunpack.c.l.b16 %v1348
    %v4410 = vunpack.c.h.b16 %v1348
    %v4411 = vunpack.c.l.b16 %v1349
    %v4412 = vunpack.c.h.b16 %v1349
    %v4413 = vunpack.c.l.b16 %v1350
    %v4414 = vunpack.c.h.b16 %v1350
    %v4415 = vunpack.c.l.b16 %v1351
    %v4416 = vunpack.c.h.b16 %v1351
    %v4417 = vunpack.c.l.b16 %v1352
    %v4418 = vunpack.c.h.b16 %v1352
    %v4419 = vunpack.c.l.b16 %v1353
    %v4420 = vunpack.c.h.b16 %v1353
    %v4421 = vunpack.c.l.b16 %v1354
    %v4422 = vunpack.c.h.b16 %v1354
    %v4423 = vunpack.c.l.b16 %v1355
    %v4424 = vunpack.c.h.b16 %v1355
    %v4425 = vunpack.c.l.b16 %v1356
    %v4426 = vunpack.c.h.b16 %v1356
    %v4427 = vunpack.c.l.b16 %v1357
    %v4428 = vunpack.c.h.b16 %v1357
    %v4429 = vunpack.c.l.b16 %v1358
    %v4430 = vunpack.c.h.b16 %v1358
    %v4431 = vunpack.c.l.b16 %v1359
    %v4432 = vunpack.c.h.b16 %v1359
    %v4433 = vunpack.c.l.b16 %v1360
    %v4434 = vunpack.c.h.b16 %v1360
    %v4435 = vunpack.c.l.b16 %v1361
    %v4436 = vunpack.c.h.b16 %v1361
    %v4437 = vunpack.c.l.b16 %v1362
    %v4438 = vunpack.c.h.b16 %v1362
    %v4439 = vunpack.c.l.b16 %v1363
    %v4440 = vunpack.c.h.b16 %v1363
    %v4441 = vunpack.c.l.b16 %v1364
    %v4442 = vunpack.c.h.b16 %v1364
    %v4443 = vunpack.c.l.b16 %v1365
    %v4444 = vunpack.c.h.b16 %v1365
    %v4445 = vunpack.c.l.b16 %v1366
    %v4446 = vunpack.c.h.b16 %v1366
    %v4447 = vunpack.c.l.b16 %v1367
    %v4448 = vunpack.c.h.b16 %v1367
    %v4449 = vunpack.c.l.b16 %v1368
    %v4450 = vunpack.c.h.b16 %v1368
    %v4451 = vunpack.c.l.b16 %v1369
    %v4452 = vunpack.c.h.b16 %v1369
    %v4453 = vunpack.c.l.b16 %v1370
    %v4454 = vunpack.c.h.b16 %v1370
    %v4455 = vunpack.c.l.b16 %v1371
    %v4456 = vunpack.c.h.b16 %v1371
    %v4457 = vunpack.c.l.b16 %v1372
    %v4458 = vunpack.c.h.b16 %v1372
    %v4459 = vunpack.c.l.b16 %v1373
    %v4460 = vunpack.c.h.b16 %v1373
    %v4461 = vunpack.c.l.b16 %v1374
    %v4462 = vunpack.c.h.b16 %v1374
    %v4463 = vunpack.c.l.b16 %v1375
    %v4464 = vunpack.c.h.b16 %v1375
    %v4465 = vunpack.c.l.b16 %v1376
    %v4466 = vunpack.c.h.b16 %v1376
    %v4467 = vunpack.c.l.b16 %v1377
    %v4468 = vunpack.c.h.b16 %v1377
    %v4469 = vunpack.c.l.b16 %v1378
    %v4470 = vunpack.c.h.b16 %v1378
    %v4471 = vunpack.c.l.b16 %v1379
    %v4472 = vunpack.c.h.b16 %v1379
    %v4473 = vunpack.c.l.b16 %v1380
    %v4474 = vunpack.c.h.b16 %v1380
    %v4475 = vunpack.c.l.b16 %v1381
    %v4476 = vunpack.c.h.b16 %v1381
    %v4477 = vunpack.c.l.b16 %v1382
    %v4478 = vunpack.c.h.b16 %v1382
    %v4479 = vunpack.c.l.b16 %v1383
    %v4480 = vunpack.c.h.b16 %v1383
    %v4481 = vunpack.c.l.b16 %v1384
    %v4482 = vunpack.c.h.b16 %v1384
    %v4483 = vunpack.c.l.b16 %v1385
    %v4484 = vunpack.c.h.b16 %v1385
    %v4485 = vunpack.c.l.b16 %v1386
    %v4486 = vunpack.c.h.b16 %v1386
    %v4487 = vunpack.c.l.b16 %v1387
    %v4488 = vunpack.c.h.b16 %v1387
    %v4489 = vunpack.c.l.b16 %v1388
    %v4490 = vunpack.c.h.b16 %v1388
    %v4491 = vunpack.c.l.b16 %v1389
    %v4492 = vunpack.c.h.b16 %v1389
    %v4493 = vunpack.c.l.b16 %v1390
    %v4494 = vunpack.c.h.b16 %v1390
    %v4495 = vunpack.c.l.b16 %v1391
    %v4496 = vunpack.c.h.b16 %v1391
    %v4497 = vunpack.c.l.b16 %v1392
    %v4498 = vunpack.c.h.b16 %v1392
    %v4499 = vunpack.c.l.b16 %v1393
    %v4500 = vunpack.c.h.b16 %v1393
    %v4501 = vunpack.c.l.b16 %v1394
    %v4502 = vunpack.c.h.b16 %v1394
    %v4503 = vunpack.c.l.b16 %v1395
    %v4504 = vunpack.c.h.b16 %v1395
    %v4505 = vunpack.c.l.b16 %v1396
    %v4506 = vunpack.c.h.b16 %v1396
    %v4507 = vunpack.c.l.b16 %v1397
    %v4508 = vunpack.c.h.b16 %v1397
    %v4509 = vunpack.c.l.b16 %v1398
    %v4510 = vunpack.c.h.b16 %v1398
    %v4511 = vunpack.c.l.b16 %v1399
    %v4512 = vunpack.c.h.b16 %v1399
    %v4513 = vunpack.c.l.b16 %v1400
    %v4514 = vunpack.c.h.b16 %v1400
    %v4515 = vpack.c.b16 %v2475, %v2467
    %v4516 = vpack.c.b16 %v2476, %v2468
    %v4517 = vpack.c.b16 %v2477, %v2469
    %v4518 = vpack.c.b16 %v2478, %v2470
    %v4519 = vpack.c.b16 %v2479, %v2471
    %v4520 = vpack.c.b16 %v2480, %v2472
    %v4521 = vpack.c.b16 %v2481, %v2473
    %v4522 = vpack.c.b16 %v2482, %v2474
    %v4523 = vpack.c.b16 %v2491, %v2483
    %v4524 = vpack.c.b16 %v2492, %v2484
    %v4525 = vpack.c.b16 %v2493, %v2485
    %v4526 = vpack.c.b16 %v2494, %v2486
    %v4527 = vpack.c.b16 %v2495, %v2487
    %v4528 = vpack.c.b16 %v2496, %v2488
    %v4529 = vpack.c.b16 %v2497, %v2489
    %v4530 = vpack.c.b16 %v2498, %v2490
    %v4531 = vpack.c.b16 %v2507, %v2499
    %v4532 = vpack.c.b16 %v2508, %v2500
    %v4533 = vpack.c.b16 %v2509, %v2501
    %v4534 = vpack.c.b16 %v2510, %v2502
    %v4535 = vpack.c.b16 %v2511, %v2503
    %v4536 = vpack.c.b16 %v2512, %v2504
    %v4537 = vpack.c.b16 %v2513, %v2505
    %v4538 = vpack.c.b16 %v2514, %v2506
    %v4539 = vpack.c.b16 %v2523, %v2515
    %v4540 = vpack.c.b16 %v2524, %v2516
    %v4541 = vpack.c.b16 %v2525, %v2517
    %v4542 = vpack.c.b16 %v2526, %v2518
    %v4543 = vpack.c.b16 %v2527, %v2519
    %v4544 = vpack.c.b16 %v2528, %v2520
    %v4545 = vpack.c.b16 %v2529, %v2521
    %v4546 = vpack.c.b16 %v2530, %v2522
    %v4547 = vpack.c.b16 %v2539, %v2531
    %v4548 = vpack.c.b16 %v2540, %v2532
    %v4549 = vpack.c.b16 %v2541, %v2533
    %v4550 = vpack.c.b16 %v2542, %v2534
    %v4551 = vpack.c.b16 %v2543, %v2535
    %v4552 = vpack.c.b16 %v2544, %v2536
    %v4553 = vpack.c.b16 %v2545, %v2537
    %v4554 = vpack.c.b16 %v2546, %v2538
    %v4555 = vpack.c.b16 %v2555, %v2547
    %v4556 = vpack.c.b16 %v2556, %v2548
    %v4557 = vpack.c.b16 %v2557, %v2549
    %v4558 = vpack.c.b16 %v2558, %v2550
    %v4559 = vpack.c.b16 %v2559, %v2551
    %v4560 = vpack.c.b16 %v2560, %v2552
    %v4561 = vpack.c.b16 %v2561, %v2553
    %v4562 = vpack.c.b16 %v2562, %v2554
    %v4563 = vpack.c.b16 %v2571, %v2563
    %v4564 = vpack.c.b16 %v2572, %v2564
    %v4565 = vpack.c.b16 %v2573, %v2565
    %v4566 = vpack.c.b16 %v2574, %v2566
    %v4567 = vpack.c.b16 %v2575, %v2567
    %v4568 = vpack.c.b16 %v2576, %v2568
    %v4569 = vpack.c.b16 %v2577, %v2569
    %v4570 = vpack.c.b16 %v2578, %v2570
    %v4571 = vpack.c.b16 %v2587, %v2579
    %v4572 = vpack.c.b16 %v2588, %v2580
    %v4573 = vpack.c.b16 %v2589, %v2581
    %v4574 = vpack.c.b16 %v2590, %v2582
    %v4575 = vpack.c.b16 %v2591, %v2583
    %v4576 = vpack.c.b16 %v2592, %v2584
    %v4577 = vpack.c.b16 %v2593, %v2585
    %v4578 = vpack.c.b16 %v2594, %v2586
    %v4579 = vpack.c.b16 %v2603, %v2595
    %v4580 = vpack.c.b16 %v2604, %v2596
    %v4581 = vpack.c.b16 %v2605, %v2597
    %v4582 = vpack.c.b16 %v2606, %v2598
    %v4583 = vpack.c.b16 %v2607, %v2599
    %v4584 = vpack.c.b16 %v2608, %v2600
    %v4585 = vpack.c.b16 %v2609, %v2601
    %v4586 = vpack.c.b16 %v2610, %v2602
    %v4587 = vpack.c.b16 %v2619, %v2611
    %v4588 = vpack.c.b16 %v2620, %v2612
    %v4589 = vpack.c.b16 %v2621, %v2613
    %v4590 = vpack.c.b16 %v2622, %v2614
    %v4591 = vpack.c.b16 %v2623, %v2615
    %v4592 = vpack.c.b16 %v2624, %v2616
    %v4593 = vpack.c.b16 %v2625, %v2617
    %v4594 = vpack.c.b16 %v2626, %v2618
    %v4595 = vpack.c.b16 %v2635, %v2627
    %v4596 = vpack.c.b16 %v2636, %v2628
    %v4597 = vpack.c.b16 %v2637, %v2629
    %v4598 = vpack.c.b16 %v2638, %v2630
    %v4599 = vpack.c.b16 %v2639, %v2631
    %v4600 = vpack.c.b16 %v2640, %v2632
    %v4601 = vpack.c.b16 %v2641, %v2633
    %v4602 = vpack.c.b16 %v2642, %v2634
    %v4603 = vpack.c.b16 %v2651, %v2643
    %v4604 = vpack.c.b16 %v2652, %v2644
    %v4605 = vpack.c.b16 %v2653, %v2645
    %v4606 = vpack.c.b16 %v2654, %v2646
    %v4607 = vpack.c.b16 %v2655, %v2647
    %v4608 = vpack.c.b16 %v2656, %v2648
    %v4609 = vpack.c.b16 %v2657, %v2649
    %v4610 = vpack.c.b16 %v2658, %v2650
    %v4611 = vpack.c.b16 %v2667, %v2659
    %v4612 = vpack.c.b16 %v2668, %v2660
    %v4613 = vpack.c.b16 %v2669, %v2661
    %v4614 = vpack.c.b16 %v2670, %v2662
    %v4615 = vpack.c.b16 %v2671, %v2663
    %v4616 = vpack.c.b16 %v2672, %v2664
    %v4617 = vpack.c.b16 %v2673, %v2665
    %v4618 = vpack.c.b16 %v2674, %v2666
    %v4619 = vpack.c.b16 %v2683, %v2675
    %v4620 = vpack.c.b16 %v2684, %v2676
    %v4621 = vpack.c.b16 %v2685, %v2677
    %v4622 = vpack.c.b16 %v2686, %v2678
    %v4623 = vpack.c.b16 %v2687, %v2679
    %v4624 = vpack.c.b16 %v2688, %v2680
    %v4625 = vpack.c.b16 %v2689, %v2681
    %v4626 = vpack.c.b16 %v2690, %v2682
    %v4627 = vpack.c.b16 %v2699, %v2691
    %v4628 = vpack.c.b16 %v2700, %v2692
    %v4629 = vpack.c.b16 %v2701, %v2693
    %v4630 = vpack.c.b16 %v2702, %v2694
    %v4631 = vpack.c.b16 %v2703, %v2695
    %v4632 = vpack.c.b16 %v2704, %v2696
    %v4633 = vpack.c.b16 %v2705, %v2697
    %v4634 = vpack.c.b16 %v2706, %v2698
    %v4635 = vpack.c.b16 %v2715, %v2707
    %v4636 = vpack.c.b16 %v2716, %v2708
    %v4637 = vpack.c.b16 %v2717, %v2709
    %v4638 = vpack.c.b16 %v2718, %v2710
    %v4639 = vpack.c.b16 %v2719, %v2711
    %v4640 = vpack.c.b16 %v2720, %v2712
    %v4641 = vpack.c.b16 %v2721, %v2713
    %v4642 = vpack.c.b16 %v2722, %v2714
    %v4643 = vpack.c.b16 %v2731, %v2723
    %v4644 = vpack.c.b16 %v2732, %v2724
    %v4645 = vpack.c.b16 %v2733, %v2725
    %v4646 = vpack.c.b16 %v2734, %v2726
    %v4647 = vpack.c.b16 %v2735, %v2727
    %v4648 = vpack.c.b16 %v2736, %v2728
    %v4649 = vpack.c.b16 %v2737, %v2729
    %v4650 = vpack.c.b16 %v2738, %v2730
    %v4651 = vpack.c.b16 %v2747, %v2739
    %v4652 = vpack.c.b16 %v2748, %v2740
    %v4653 = vpack.c.b16 %v2749, %v2741
    %v4654 = vpack.c.b16 %v2750, %v2742
    %v4655 = vpack.c.b16 %v2751, %v2743
    %v4656 = vpack.c.b16 %v2752, %v2744
    %v4657 = vpack.c.b16 %v2753, %v2745
    %v4658 = vpack.c.b16 %v2754, %v2746
    %v4659 = vpack.c.b16 %v2763, %v2755
    %v4660 = vpack.c.b16 %v2764, %v2756
    %v4661 = vpack.c.b16 %v2765, %v2757
    %v4662 = vpack.c.b16 %v2766, %v2758
    %v4663 = vpack.c.b16 %v2767, %v2759
    %v4664 = vpack.c.b16 %v2768, %v2760
    %v4665 = vpack.c.b16 %v2769, %v2761
    %v4666 = vpack.c.b16 %v2770, %v2762
    %v4667 = vpack.c.b16 %v2779, %v2771
    %v4668 = vpack.c.b16 %v2780, %v2772
    %v4669 = vpack.c.b16 %v2781, %v2773
    %v4670 = vpack.c.b16 %v2782, %v2774
    %v4671 = vpack.c.b16 %v2783, %v2775
    %v4672 = vpack.c.b16 %v2784, %v2776
    %v4673 = vpack.c.b16 %v2785, %v2777
    %v4674 = vpack.c.b16 %v2786, %v2778
    %v4675 = vpack.c.b16 %v2795, %v2787
    %v4676 = vpack.c.b16 %v2796, %v2788
    %v4677 = vpack.c.b16 %v2797, %v2789
    %v4678 = vpack.c.b16 %v2798, %v2790
    %v4679 = vpack.c.b16 %v2799, %v2791
    %v4680 = vpack.c.b16 %v2800, %v2792
    %v4681 = vpack.c.b16 %v2801, %v2793
    %v4682 = vpack.c.b16 %v2802, %v2794
    %v4683 = vpack.c.b16 %v2811, %v2803
    %v4684 = vpack.c.b16 %v2812, %v2804
    %v4685 = vpack.c.b16 %v2813, %v2805
    %v4686 = vpack.c.b16 %v2814, %v2806
    %v4687 = vpack.c.b16 %v2815, %v2807
    %v4688 = vpack.c.b16 %v2816, %v2808
    %v4689 = vpack.c.b16 %v2817, %v2809
    %v4690 = vpack.c.b16 %v2818, %v2810
    %v4691 = vpack.c.b16 %v2827, %v2819
    %v4692 = vpack.c.b16 %v2828, %v2820
    %v4693 = vpack.c.b16 %v2829, %v2821
    %v4694 = vpack.c.b16 %v2830, %v2822
    %v4695 = vpack.c.b16 %v2831, %v2823
    %v4696 = vpack.c.b16 %v2832, %v2824
    %v4697 = vpack.c.b16 %v2833, %v2825
    %v4698 = vpack.c.b16 %v2834, %v2826
    %v4699 = vpack.c.b16 %v2843, %v2835
    %v4700 = vpack.c.b16 %v2844, %v2836
    %v4701 = vpack.c.b16 %v2845, %v2837
    %v4702 = vpack.c.b16 %v2846, %v2838
    %v4703 = vpack.c.b16 %v2847, %v2839
    %v4704 = vpack.c.b16 %v2848, %v2840
    %v4705 = vpack.c.b16 %v2849, %v2841
    %v4706 = vpack.c.b16 %v2850, %v2842
    %v4707 = vpack.c.b16 %v2859, %v2851
    %v4708 = vpack.c.b16 %v2860, %v2852
    %v4709 = vpack.c.b16 %v2861, %v2853
    %v4710 = vpack.c.b16 %v2862, %v2854
    %v4711 = vpack.c.b16 %v2863, %v2855
    %v4712 = vpack.c.b16 %v2864, %v2856
    %v4713 = vpack.c.b16 %v2865, %v2857
    %v4714 = vpack.c.b16 %v2866, %v2858
    %v4715 = vpack.c.b16 %v2875, %v2867
    %v4716 = vpack.c.b16 %v2876, %v2868
    %v4717 = vpack.c.b16 %v2877, %v2869
    %v4718 = vpack.c.b16 %v2878, %v2870
    %v4719 = vpack.c.b16 %v2879, %v2871
    %v4720 = vpack.c.b16 %v2880, %v2872
    %v4721 = vpack.c.b16 %v2881, %v2873
    %v4722 = vpack.c.b16 %v2882, %v2874
    %v4723 = vpack.c.b16 %v2891, %v2883
    %v4724 = vpack.c.b16 %v2892, %v2884
    %v4725 = vpack.c.b16 %v2893, %v2885
    %v4726 = vpack.c.b16 %v2894, %v2886
    %v4727 = vpack.c.b16 %v2895, %v2887
    %v4728 = vpack.c.b16 %v2896, %v2888
    %v4729 = vpack.c.b16 %v2897, %v2889
    %v4730 = vpack.c.b16 %v2898, %v2890
    %v4731 = vpack.c.b16 %v2907, %v2899
    %v4732 = vpack.c.b16 %v2908, %v2900
    %v4733 = vpack.c.b16 %v2909, %v2901
    %v4734 = vpack.c.b16 %v2910, %v2902
    %v4735 = vpack.c.b16 %v2911, %v2903
    %v4736 = vpack.c.b16 %v2912, %v2904
    %v4737 = vpack.c.b16 %v2913, %v2905
    %v4738 = vpack.c.b16 %v2914, %v2906
    %v4739 = vpack.c.b16 %v2923, %v2915
    %v4740 = vpack.c.b16 %v2924, %v2916
    %v4741 = vpack.c.b16 %v2925, %v2917
    %v4742 = vpack.c.b16 %v2926, %v2918
    %v4743 = vpack.c.b16 %v2927, %v2919
    %v4744 = vpack.c.b16 %v2928, %v2920
    %v4745 = vpack.c.b16 %v2929, %v2921
    %v4746 = vpack.c.b16 %v2930, %v2922
    %v4747 = vpack.c.b16 %v2939, %v2931
    %v4748 = vpack.c.b16 %v2940, %v2932
    %v4749 = vpack.c.b16 %v2941, %v2933
    %v4750 = vpack.c.b16 %v2942, %v2934
    %v4751 = vpack.c.b16 %v2943, %v2935
    %v4752 = vpack.c.b16 %v2944, %v2936
    %v4753 = vpack.c.b16 %v2945, %v2937
    %v4754 = vpack.c.b16 %v2946, %v2938
    %v4755 = vpack.c.b16 %v2955, %v2947
    %v4756 = vpack.c.b16 %v2956, %v2948
    %v4757 = vpack.c.b16 %v2957, %v2949
    %v4758 = vpack.c.b16 %v2958, %v2950
    %v4759 = vpack.c.b16 %v2959, %v2951
    %v4760 = vpack.c.b16 %v2960, %v2952
    %v4761 = vpack.c.b16 %v2961, %v2953
    %v4762 = vpack.c.b16 %v2962, %v2954
    %v4763 = vpack.c.b16 %v2971, %v2963
    %v4764 = vpack.c.b16 %v2972, %v2964
    %v4765 = vpack.c.b16 %v2973, %v2965
    %v4766 = vpack.c.b16 %v2974, %v2966
    %v4767 = vpack.c.b16 %v2975, %v2967
    %v4768 = vpack.c.b16 %v2976, %v2968
    %v4769 = vpack.c.b16 %v2977, %v2969
    %v4770 = vpack.c.b16 %v2978, %v2970
    %v4771 = vpack.c.b16 %v2987, %v2979
    %v4772 = vpack.c.b16 %v2988, %v2980
    %v4773 = vpack.c.b16 %v2989, %v2981
    %v4774 = vpack.c.b16 %v2990, %v2982
    %v4775 = vpack.c.b16 %v2991, %v2983
    %v4776 = vpack.c.b16 %v2992, %v2984
    %v4777 = vpack.c.b16 %v2993, %v2985
    %v4778 = vpack.c.b16 %v2994, %v2986
    %v4779 = vpack.c.b16 %v3003, %v2995
    %v4780 = vpack.c.b16 %v3004, %v2996
    %v4781 = vpack.c.b16 %v3005, %v2997
    %v4782 = vpack.c.b16 %v3006, %v2998
    %v4783 = vpack.c.b16 %v3007, %v2999
    %v4784 = vpack.c.b16 %v3008, %v3000
    %v4785 = vpack.c.b16 %v3009, %v3001
    %v4786 = vpack.c.b16 %v3010, %v3002
    %v4787 = vpack.c.b16 %v3019, %v3011
    %v4788 = vpack.c.b16 %v3020, %v3012
    %v4789 = vpack.c.b16 %v3021, %v3013
    %v4790 = vpack.c.b16 %v3022, %v3014
    %v4791 = vpack.c.b16 %v3023, %v3015
    %v4792 = vpack.c.b16 %v3024, %v3016
    %v4793 = vpack.c.b16 %v3025, %v3017
    %v4794 = vpack.c.b16 %v3026, %v3018
    %v4795 = vpack.c.b16 %v3035, %v3027
    %v4796 = vpack.c.b16 %v3036, %v3028
    %v4797 = vpack.c.b16 %v3037, %v3029
    %v4798 = vpack.c.b16 %v3038, %v3030
    %v4799 = vpack.c.b16 %v3039, %v3031
    %v4800 = vpack.c.b16 %v3040, %v3032
    %v4801 = vpack.c.b16 %v3041, %v3033
    %v4802 = vpack.c.b16 %v3042, %v3034
    %v4803 = vpack.c.b16 %v3051, %v3043
    %v4804 = vpack.c.b16 %v3052, %v3044
    %v4805 = vpack.c.b16 %v3053, %v3045
    %v4806 = vpack.c.b16 %v3054, %v3046
    %v4807 = vpack.c.b16 %v3055, %v3047
    %v4808 = vpack.c.b16 %v3056, %v3048
    %v4809 = vpack.c.b16 %v3057, %v3049
    %v4810 = vpack.c.b16 %v3058, %v3050
    %v4811 = vpack.c.b16 %v3067, %v3059
    %v4812 = vpack.c.b16 %v3068, %v3060
    %v4813 = vpack.c.b16 %v3069, %v3061
    %v4814 = vpack.c.b16 %v3070, %v3062
    %v4815 = vpack.c.b16 %v3071, %v3063
    %v4816 = vpack.c.b16 %v3072, %v3064
    %v4817 = vpack.c.b16 %v3073, %v3065
    %v4818 = vpack.c.b16 %v3074, %v3066
    %v4819 = vpack.c.b16 %v3083, %v3075
    %v4820 = vpack.c.b16 %v3084, %v3076
    %v4821 = vpack.c.b16 %v3085, %v3077
    %v4822 = vpack.c.b16 %v3086, %v3078
    %v4823 = vpack.c.b16 %v3087, %v3079
    %v4824 = vpack.c.b16 %v3088, %v3080
    %v4825 = vpack.c.b16 %v3089, %v3081
    %v4826 = vpack.c.b16 %v3090, %v3082
    %v4827 = vpack.c.b16 %v3099, %v3091
    %v4828 = vpack.c.b16 %v3100, %v3092
    %v4829 = vpack.c.b16 %v3101, %v3093
    %v4830 = vpack.c.b16 %v3102, %v3094
    %v4831 = vpack.c.b16 %v3103, %v3095
    %v4832 = vpack.c.b16 %v3104, %v3096
    %v4833 = vpack.c.b16 %v3105, %v3097
    %v4834 = vpack.c.b16 %v3106, %v3098
    %v4835 = vpack.c.b16 %v3115, %v3107
    %v4836 = vpack.c.b16 %v3116, %v3108
    %v4837 = vpack.c.b16 %v3117, %v3109
    %v4838 = vpack.c.b16 %v3118, %v3110
    %v4839 = vpack.c.b16 %v3119, %v3111
    %v4840 = vpack.c.b16 %v3120, %v3112
    %v4841 = vpack.c.b16 %v3121, %v3113
    %v4842 = vpack.c.b16 %v3122, %v3114
    %v4843 = vpack.c.b16 %v3131, %v3123
    %v4844 = vpack.c.b16 %v3132, %v3124
    %v4845 = vpack.c.b16 %v3133, %v3125
    %v4846 = vpack.c.b16 %v3134, %v3126
    %v4847 = vpack.c.b16 %v3135, %v3127
    %v4848 = vpack.c.b16 %v3136, %v3128
    %v4849 = vpack.c.b16 %v3137, %v3129
    %v4850 = vpack.c.b16 %v3138, %v3130
    %v4851 = vpack.c.b16 %v3147, %v3139
    %v4852 = vpack.c.b16 %v3148, %v3140
    %v4853 = vpack.c.b16 %v3149, %v3141
    %v4854 = vpack.c.b16 %v3150, %v3142
    %v4855 = vpack.c.b16 %v3151, %v3143
    %v4856 = vpack.c.b16 %v3152, %v3144
    %v4857 = vpack.c.b16 %v3153, %v3145
    %v4858 = vpack.c.b16 %v3154, %v3146
    %v4859 = vpack.c.b16 %v3163, %v3155
    %v4860 = vpack.c.b16 %v3164, %v3156
    %v4861 = vpack.c.b16 %v3165, %v3157
    %v4862 = vpack.c.b16 %v3166, %v3158
    %v4863 = vpack.c.b16 %v3167, %v3159
    %v4864 = vpack.c.b16 %v3168, %v3160
    %v4865 = vpack.c.b16 %v3169, %v3161
    %v4866 = vpack.c.b16 %v3170, %v3162
    %v4867 = vpack.c.b16 %v3179, %v3171
    %v4868 = vpack.c.b16 %v3180, %v3172
    %v4869 = vpack.c.b16 %v3181, %v3173
    %v4870 = vpack.c.b16 %v3182, %v3174
    %v4871 = vpack.c.b16 %v3183, %v3175
    %v4872 = vpack.c.b16 %v3184, %v3176
    %v4873 = vpack.c.b16 %v3185, %v3177
    %v4874 = vpack.c.b16 %v3186, %v3178
    %v4875 = vpack.c.b16 %v3195, %v3187
    %v4876 = vpack.c.b16 %v3196, %v3188
    %v4877 = vpack.c.b16 %v3197, %v3189
    %v4878 = vpack.c.b16 %v3198, %v3190
    %v4879 = vpack.c.b16 %v3199, %v3191
    %v4880 = vpack.c.b16 %v3200, %v3192
    %v4881 = vpack.c.b16 %v3201, %v3193
    %v4882 = vpack.c.b16 %v3202, %v3194
    %v4883 = vpack.c.b16 %v3211, %v3203
    %v4884 = vpack.c.b16 %v3212, %v3204
    %v4885 = vpack.c.b16 %v3213, %v3205
    %v4886 = vpack.c.b16 %v3214, %v3206
    %v4887 = vpack.c.b16 %v3215, %v3207
    %v4888 = vpack.c.b16 %v3216, %v3208
    %v4889 = vpack.c.b16 %v3217, %v3209
    %v4890 = vpack.c.b16 %v3218, %v3210
    %v4891 = vpack.c.b16 %v3227, %v3219
    %v4892 = vpack.c.b16 %v3228, %v3220
    %v4893 = vpack.c.b16 %v3229, %v3221
    %v4894 = vpack.c.b16 %v3230, %v3222
    %v4895 = vpack.c.b16 %v3231, %v3223
    %v4896 = vpack.c.b16 %v3232, %v3224
    %v4897 = vpack.c.b16 %v3233, %v3225
    %v4898 = vpack.c.b16 %v3234, %v3226
    %v4899 = vpack.c.b16 %v3243, %v3235
    %v4900 = vpack.c.b16 %v3244, %v3236
    %v4901 = vpack.c.b16 %v3245, %v3237
    %v4902 = vpack.c.b16 %v3246, %v3238
    %v4903 = vpack.c.b16 %v3247, %v3239
    %v4904 = vpack.c.b16 %v3248, %v3240
    %v4905 = vpack.c.b16 %v3249, %v3241
    %v4906 = vpack.c.b16 %v3250, %v3242
    %v4907 = vpack.c.b16 %v3259, %v3251
    %v4908 = vpack.c.b16 %v3260, %v3252
    %v4909 = vpack.c.b16 %v3261, %v3253
    %v4910 = vpack.c.b16 %v3262, %v3254
    %v4911 = vpack.c.b16 %v3263, %v3255
    %v4912 = vpack.c.b16 %v3264, %v3256
    %v4913 = vpack.c.b16 %v3265, %v3257
    %v4914 = vpack.c.b16 %v3266, %v3258
    %v4915 = vpack.c.b16 %v3275, %v3267
    %v4916 = vpack.c.b16 %v3276, %v3268
    %v4917 = vpack.c.b16 %v3277, %v3269
    %v4918 = vpack.c.b16 %v3278, %v3270
    %v4919 = vpack.c.b16 %v3279, %v3271
    %v4920 = vpack.c.b16 %v3280, %v3272
    %v4921 = vpack.c.b16 %v3281, %v3273
    %v4922 = vpack.c.b16 %v3282, %v3274
    %v4923 = vpack.c.b16 %v3291, %v3283
    %v4924 = vpack.c.b16 %v3292, %v3284
    %v4925 = vpack.c.b16 %v3293, %v3285
    %v4926 = vpack.c.b16 %v3294, %v3286
    %v4927 = vpack.c.b16 %v3295, %v3287
    %v4928 = vpack.c.b16 %v3296, %v3288
    %v4929 = vpack.c.b16 %v3297, %v3289
    %v4930 = vpack.c.b16 %v3298, %v3290
    %v4931 = vpack.c.b16 %v3307, %v3299
    %v4932 = vpack.c.b16 %v3308, %v3300
    %v4933 = vpack.c.b16 %v3309, %v3301
    %v4934 = vpack.c.b16 %v3310, %v3302
    %v4935 = vpack.c.b16 %v3311, %v3303
    %v4936 = vpack.c.b16 %v3312, %v3304
    %v4937 = vpack.c.b16 %v3313, %v3305
    %v4938 = vpack.c.b16 %v3314, %v3306
    %v4939 = vpack.c.b16 %v3323, %v3315
    %v4940 = vpack.c.b16 %v3324, %v3316
    %v4941 = vpack.c.b16 %v3325, %v3317
    %v4942 = vpack.c.b16 %v3326, %v3318
    %v4943 = vpack.c.b16 %v3327, %v3319
    %v4944 = vpack.c.b16 %v3328, %v3320
    %v4945 = vpack.c.b16 %v3329, %v3321
    %v4946 = vpack.c.b16 %v3330, %v3322
    %v4947 = vpack.c.b16 %v3339, %v3331
    %v4948 = vpack.c.b16 %v3340, %v3332
    %v4949 = vpack.c.b16 %v3341, %v3333
    %v4950 = vpack.c.b16 %v3342, %v3334
    %v4951 = vpack.c.b16 %v3343, %v3335
    %v4952 = vpack.c.b16 %v3344, %v3336
    %v4953 = vpack.c.b16 %v3345, %v3337
    %v4954 = vpack.c.b16 %v3346, %v3338
    %v4955 = vpack.c.b16 %v3355, %v3347
    %v4956 = vpack.c.b16 %v3356, %v3348
    %v4957 = vpack.c.b16 %v3357, %v3349
    %v4958 = vpack.c.b16 %v3358, %v3350
    %v4959 = vpack.c.b16 %v3359, %v3351
    %v4960 = vpack.c.b16 %v3360, %v3352
    %v4961 = vpack.c.b16 %v3361, %v3353
    %v4962 = vpack.c.b16 %v3362, %v3354
    %v4963 = vpack.c.b16 %v3371, %v3363
    %v4964 = vpack.c.b16 %v3372, %v3364
    %v4965 = vpack.c.b16 %v3373, %v3365
    %v4966 = vpack.c.b16 %v3374, %v3366
    %v4967 = vpack.c.b16 %v3375, %v3367
    %v4968 = vpack.c.b16 %v3376, %v3368
    %v4969 = vpack.c.b16 %v3377, %v3369
    %v4970 = vpack.c.b16 %v3378, %v3370
    %v4971 = vpack.c.b16 %v3387, %v3379
    %v4972 = vpack.c.b16 %v3388, %v3380
    %v4973 = vpack.c.b16 %v3389, %v3381
    %v4974 = vpack.c.b16 %v3390, %v3382
    %v4975 = vpack.c.b16 %v3391, %v3383
    %v4976 = vpack.c.b16 %v3392, %v3384
    %v4977 = vpack.c.b16 %v3393, %v3385
    %v4978 = vpack.c.b16 %v3394, %v3386
    %v4979 = vpack.c.b16 %v3403, %v3395
    %v4980 = vpack.c.b16 %v3404, %v3396
    %v4981 = vpack.c.b16 %v3405, %v3397
    %v4982 = vpack.c.b16 %v3406, %v3398
    %v4983 = vpack.c.b16 %v3407, %v3399
    %v4984 = vpack.c.b16 %v3408, %v3400
    %v4985 = vpack.c.b16 %v3409, %v3401
    %v4986 = vpack.c.b16 %v3410, %v3402
    %v4987 = vpack.c.b16 %v3419, %v3411
    %v4988 = vpack.c.b16 %v3420, %v3412
    %v4989 = vpack.c.b16 %v3421, %v3413
    %v4990 = vpack.c.b16 %v3422, %v3414
    %v4991 = vpack.c.b16 %v3423, %v3415
    %v4992 = vpack.c.b16 %v3424, %v3416
    %v4993 = vpack.c.b16 %v3425, %v3417
    %v4994 = vpack.c.b16 %v3426, %v3418
    %v4995 = vpack.c.b16 %v3435, %v3427
    %v4996 = vpack.c.b16 %v3436, %v3428
    %v4997 = vpack.c.b16 %v3437, %v3429
    %v4998 = vpack.c.b16 %v3438, %v3430
    %v4999 = vpack.c.b16 %v3439, %v3431
    %v5000 = vpack.c.b16 %v3440, %v3432
    %v5001 = vpack.c.b16 %v3441, %v3433
    %v5002 = vpack.c.b16 %v3442, %v3434
    %v5003 = vpack.c.b16 %v3451, %v3443
    %v5004 = vpack.c.b16 %v3452, %v3444
    %v5005 = vpack.c.b16 %v3453, %v3445
    %v5006 = vpack.c.b16 %v3454, %v3446
    %v5007 = vpack.c.b16 %v3455, %v3447
    %v5008 = vpack.c.b16 %v3456, %v3448
    %v5009 = vpack.c.b16 %v3457, %v3449
    %v5010 = vpack.c.b16 %v3458, %v3450
    %v5011 = vpack.c.b16 %v3467, %v3459
    %v5012 = vpack.c.b16 %v3468, %v3460
    %v5013 = vpack.c.b16 %v3469, %v3461
    %v5014 = vpack.c.b16 %v3470, %v3462
    %v5015 = vpack.c.b16 %v3471, %v3463
    %v5016 = vpack.c.b16 %v3472, %v3464
    %v5017 = vpack.c.b16 %v3473, %v3465
    %v5018 = vpack.c.b16 %v3474, %v3466
    %v5019 = vpack.c.b16 %v3483, %v3475
    %v5020 = vpack.c.b16 %v3484, %v3476
    %v5021 = vpack.c.b16 %v3485, %v3477
    %v5022 = vpack.c.b16 %v3486, %v3478
    %v5023 = vpack.c.b16 %v3487, %v3479
    %v5024 = vpack.c.b16 %v3488, %v3480
    %v5025 = vpack.c.b16 %v3489, %v3481
    %v5026 = vpack.c.b16 %v3490, %v3482
    %v5027 = vpack.c.b16 %v3499, %v3491
    %v5028 = vpack.c.b16 %v3500, %v3492
    %v5029 = vpack.c.b16 %v3501, %v3493
    %v5030 = vpack.c.b16 %v3502, %v3494
    %v5031 = vpack.c.b16 %v3503, %v3495
    %v5032 = vpack.c.b16 %v3504, %v3496
    %v5033 = vpack.c.b16 %v3505, %v3497
    %v5034 = vpack.c.b16 %v3506, %v3498
    %v5035 = vpack.c.b16 %v3515, %v3507
    %v5036 = vpack.c.b16 %v3516, %v3508
    %v5037 = vpack.c.b16 %v3517, %v3509
    %v5038 = vpack.c.b16 %v3518, %v3510
    %v5039 = vpack.c.b16 %v3519, %v3511
    %v5040 = vpack.c.b16 %v3520, %v3512
    %v5041 = vpack.c.b16 %v3521, %v3513
    %v5042 = vpack.c.b16 %v3522, %v3514
    %v5043 = vpack.c.b16 %v3531, %v3523
    %v5044 = vpack.c.b16 %v3532, %v3524
    %v5045 = vpack.c.b16 %v3533, %v3525
    %v5046 = vpack.c.b16 %v3534, %v3526
    %v5047 = vpack.c.b16 %v3535, %v3527
    %v5048 = vpack.c.b16 %v3536, %v3528
    %v5049 = vpack.c.b16 %v3537, %v3529
    %v5050 = vpack.c.b16 %v3538, %v3530
    %v5051 = vpack.c.b16 %v3547, %v3539
    %v5052 = vpack.c.b16 %v3548, %v3540
    %v5053 = vpack.c.b16 %v3549, %v3541
    %v5054 = vpack.c.b16 %v3550, %v3542
    %v5055 = vpack.c.b16 %v3551, %v3543
    %v5056 = vpack.c.b16 %v3552, %v3544
    %v5057 = vpack.c.b16 %v3553, %v3545
    %v5058 = vpack.c.b16 %v3554, %v3546
    %v5059 = vpack.c.b16 %v3563, %v3555
    %v5060 = vpack.c.b16 %v3564, %v3556
    %v5061 = vpack.c.b16 %v3565, %v3557
    %v5062 = vpack.c.b16 %v3566, %v3558
    %v5063 = vpack.c.b16 %v3567, %v3559
    %v5064 = vpack.c.b16 %v3568, %v3560
    %v5065 = vpack.c.b16 %v3569, %v3561
    %v5066 = vpack.c.b16 %v3570, %v3562
    %v5067 = vpack.c.b16 %v3579, %v3571
    %v5068 = vpack.c.b16 %v3580, %v3572
    %v5069 = vpack.c.b16 %v3581, %v3573
    %v5070 = vpack.c.b16 %v3582, %v3574
    %v5071 = vpack.c.b16 %v3583, %v3575
    %v5072 = vpack.c.b16 %v3584, %v3576
    %v5073 = vpack.c.b16 %v3585, %v3577
    %v5074 = vpack.c.b16 %v3586, %v3578
    %v5075 = vpack.c.b16 %v3595, %v3587
    %v5076 = vpack.c.b16 %v3596, %v3588
    %v5077 = vpack.c.b16 %v3597, %v3589
    %v5078 = vpack.c.b16 %v3598, %v3590
    %v5079 = vpack.c.b16 %v3599, %v3591
    %v5080 = vpack.c.b16 %v3600, %v3592
    %v5081 = vpack.c.b16 %v3601, %v3593
    %v5082 = vpack.c.b16 %v3602, %v3594
    %v5083 = vpack.c.b16 %v3611, %v3603
    %v5084 = vpack.c.b16 %v3612, %v3604
    %v5085 = vpack.c.b16 %v3613, %v3605
    %v5086 = vpack.c.b16 %v3614, %v3606
    %v5087 = vpack.c.b16 %v3615, %v3607
    %v5088 = vpack.c.b16 %v3616, %v3608
    %v5089 = vpack.c.b16 %v3617, %v3609
    %v5090 = vpack.c.b16 %v3618, %v3610
    %v5091 = vpack.c.b16 %v3627, %v3619
    %v5092 = vpack.c.b16 %v3628, %v3620
    %v5093 = vpack.c.b16 %v3629, %v3621
    %v5094 = vpack.c.b16 %v3630, %v3622
    %v5095 = vpack.c.b16 %v3631, %v3623
    %v5096 = vpack.c.b16 %v3632, %v3624
    %v5097 = vpack.c.b16 %v3633, %v3625
    %v5098 = vpack.c.b16 %v3634, %v3626
    %v5099 = vpack.c.b16 %v3643, %v3635
    %v5100 = vpack.c.b16 %v3644, %v3636
    %v5101 = vpack.c.b16 %v3645, %v3637
    %v5102 = vpack.c.b16 %v3646, %v3638
    %v5103 = vpack.c.b16 %v3647, %v3639
    %v5104 = vpack.c.b16 %v3648, %v3640
    %v5105 = vpack.c.b16 %v3649, %v3641
    %v5106 = vpack.c.b16 %v3650, %v3642
    %v5107 = vpack.c.b16 %v3659, %v3651
    %v5108 = vpack.c.b16 %v3660, %v3652
    %v5109 = vpack.c.b16 %v3661, %v3653
    %v5110 = vpack.c.b16 %v3662, %v3654
    %v5111 = vpack.c.b16 %v3663, %v3655
    %v5112 = vpack.c.b16 %v3664, %v3656
    %v5113 = vpack.c.b16 %v3665, %v3657
    %v5114 = vpack.c.b16 %v3666, %v3658
    %v5115 = vpack.c.b16 %v3675, %v3667
    %v5116 = vpack.c.b16 %v3676, %v3668
    %v5117 = vpack.c.b16 %v3677, %v3669
    %v5118 = vpack.c.b16 %v3678, %v3670
    %v5119 = vpack.c.b16 %v3679, %v3671
    %v5120 = vpack.c.b16 %v3680, %v3672
    %v5121 = vpack.c.b16 %v3681, %v3673
    %v5122 = vpack.c.b16 %v3682, %v3674
    %v5123 = vpack.c.b16 %v3691, %v3683
    %v5124 = vpack.c.b16 %v3692, %v3684
    %v5125 = vpack.c.b16 %v3693, %v3685
    %v5126 = vpack.c.b16 %v3694, %v3686
    %v5127 = vpack.c.b16 %v3695, %v3687
    %v5128 = vpack.c.b16 %v3696, %v3688
    %v5129 = vpack.c.b16 %v3697, %v3689
    %v5130 = vpack.c.b16 %v3698, %v3690
    %v5131 = vpack.c.b16 %v3707, %v3699
    %v5132 = vpack.c.b16 %v3708, %v3700
    %v5133 = vpack.c.b16 %v3709, %v3701
    %v5134 = vpack.c.b16 %v3710, %v3702
    %v5135 = vpack.c.b16 %v3711, %v3703
    %v5136 = vpack.c.b16 %v3712, %v3704
    %v5137 = vpack.c.b16 %v3713, %v3705
    %v5138 = vpack.c.b16 %v3714, %v3706
    %v5139 = vpack.c.b16 %v3723, %v3715
    %v5140 = vpack.c.b16 %v3724, %v3716
    %v5141 = vpack.c.b16 %v3725, %v3717
    %v5142 = vpack.c.b16 %v3726, %v3718
    %v5143 = vpack.c.b16 %v3727, %v3719
    %v5144 = vpack.c.b16 %v3728, %v3720
    %v5145 = vpack.c.b16 %v3729, %v3721
    %v5146 = vpack.c.b16 %v3730, %v3722
    %v5147 = vpack.c.b16 %v3739, %v3731
    %v5148 = vpack.c.b16 %v3740, %v3732
    %v5149 = vpack.c.b16 %v3741, %v3733
    %v5150 = vpack.c.b16 %v3742, %v3734
    %v5151 = vpack.c.b16 %v3743, %v3735
    %v5152 = vpack.c.b16 %v3744, %v3736
    %v5153 = vpack.c.b16 %v3745, %v3737
    %v5154 = vpack.c.b16 %v3746, %v3738
    %v5155 = vpack.c.b16 %v3755, %v3747
    %v5156 = vpack.c.b16 %v3756, %v3748
    %v5157 = vpack.c.b16 %v3757, %v3749
    %v5158 = vpack.c.b16 %v3758, %v3750
    %v5159 = vpack.c.b16 %v3759, %v3751
    %v5160 = vpack.c.b16 %v3760, %v3752
    %v5161 = vpack.c.b16 %v3761, %v3753
    %v5162 = vpack.c.b16 %v3762, %v3754
    %v5163 = vpack.c.b16 %v3771, %v3763
    %v5164 = vpack.c.b16 %v3772, %v3764
    %v5165 = vpack.c.b16 %v3773, %v3765
    %v5166 = vpack.c.b16 %v3774, %v3766
    %v5167 = vpack.c.b16 %v3775, %v3767
    %v5168 = vpack.c.b16 %v3776, %v3768
    %v5169 = vpack.c.b16 %v3777, %v3769
    %v5170 = vpack.c.b16 %v3778, %v3770
    %v5171 = vpack.c.b16 %v3787, %v3779
    %v5172 = vpack.c.b16 %v3788, %v3780
    %v5173 = vpack.c.b16 %v3789, %v3781
    %v5174 = vpack.c.b16 %v3790, %v3782
    %v5175 = vpack.c.b16 %v3791, %v3783
    %v5176 = vpack.c.b16 %v3792, %v3784
    %v5177 = vpack.c.b16 %v3793, %v3785
    %v5178 = vpack.c.b16 %v3794, %v3786
    %v5179 = vpack.c.b16 %v3803, %v3795
    %v5180 = vpack.c.b16 %v3804, %v3796
    %v5181 = vpack.c.b16 %v3805, %v3797
    %v5182 = vpack.c.b16 %v3806, %v3798
    %v5183 = vpack.c.b16 %v3807, %v3799
    %v5184 = vpack.c.b16 %v3808, %v3800
    %v5185 = vpack.c.b16 %v3809, %v3801
    %v5186 = vpack.c.b16 %v3810, %v3802
    %v5187 = vpack.c.b16 %v3819, %v3811
    %v5188 = vpack.c.b16 %v3820, %v3812
    %v5189 = vpack.c.b16 %v3821, %v3813
    %v5190 = vpack.c.b16 %v3822, %v3814
    %v5191 = vpack.c.b16 %v3823, %v3815
    %v5192 = vpack.c.b16 %v3824, %v3816
    %v5193 = vpack.c.b16 %v3825, %v3817
    %v5194 = vpack.c.b16 %v3826, %v3818
    %v5195 = vpack.c.b16 %v3835, %v3827
    %v5196 = vpack.c.b16 %v3836, %v3828
    %v5197 = vpack.c.b16 %v3837, %v3829
    %v5198 = vpack.c.b16 %v3838, %v3830
    %v5199 = vpack.c.b16 %v3839, %v3831
    %v5200 = vpack.c.b16 %v3840, %v3832
    %v5201 = vpack.c.b16 %v3841, %v3833
    %v5202 = vpack.c.b16 %v3842, %v3834
    %v5203 = vpack.c.b16 %v3851, %v3843
    %v5204 = vpack.c.b16 %v3852, %v3844
    %v5205 = vpack.c.b16 %v3853, %v3845
    %v5206 = vpack.c.b16 %v3854, %v3846
    %v5207 = vpack.c.b16 %v3855, %v3847
    %v5208 = vpack.c.b16 %v3856, %v3848
    %v5209 = vpack.c.b16 %v3857, %v3849
    %v5210 = vpack.c.b16 %v3858, %v3850
    %v5211 = vpack.c.b16 %v3867, %v3859
    %v5212 = vpack.c.b16 %v3868, %v3860
    %v5213 = vpack.c.b16 %v3869, %v3861
    %v5214 = vpack.c.b16 %v3870, %v3862
    %v5215 = vpack.c.b16 %v3871, %v3863
    %v5216 = vpack.c.b16 %v3872, %v3864
    %v5217 = vpack.c.b16 %v3873, %v3865
    %v5218 = vpack.c.b16 %v3874, %v3866
    %v5219 = vpack.c.b16 %v3883, %v3875
    %v5220 = vpack.c.b16 %v3884, %v3876
    %v5221 = vpack.c.b16 %v3885, %v3877
    %v5222 = vpack.c.b16 %v3886, %v3878
    %v5223 = vpack.c.b16 %v3887, %v3879
    %v5224 = vpack.c.b16 %v3888, %v3880
    %v5225 = vpack.c.b16 %v3889, %v3881
    %v5226 = vpack.c.b16 %v3890, %v3882
    %v5227 = vpack.c.b16 %v3899, %v3891
    %v5228 = vpack.c.b16 %v3900, %v3892
    %v5229 = vpack.c.b16 %v3901, %v3893
    %v5230 = vpack.c.b16 %v3902, %v3894
    %v5231 = vpack.c.b16 %v3903, %v3895
    %v5232 = vpack.c.b16 %v3904, %v3896
    %v5233 = vpack.c.b16 %v3905, %v3897
    %v5234 = vpack.c.b16 %v3906, %v3898
    %v5235 = vpack.c.b16 %v3915, %v3907
    %v5236 = vpack.c.b16 %v3916, %v3908
    %v5237 = vpack.c.b16 %v3917, %v3909
    %v5238 = vpack.c.b16 %v3918, %v3910
    %v5239 = vpack.c.b16 %v3919, %v3911
    %v5240 = vpack.c.b16 %v3920, %v3912
    %v5241 = vpack.c.b16 %v3921, %v3913
    %v5242 = vpack.c.b16 %v3922, %v3914
    %v5243 = vpack.c.b16 %v3931, %v3923
    %v5244 = vpack.c.b16 %v3932, %v3924
    %v5245 = vpack.c.b16 %v3933, %v3925
    %v5246 = vpack.c.b16 %v3934, %v3926
    %v5247 = vpack.c.b16 %v3935, %v3927
    %v5248 = vpack.c.b16 %v3936, %v3928
    %v5249 = vpack.c.b16 %v3937, %v3929
    %v5250 = vpack.c.b16 %v3938, %v3930
    %v5251 = vpack.c.b16 %v3947, %v3939
    %v5252 = vpack.c.b16 %v3948, %v3940
    %v5253 = vpack.c.b16 %v3949, %v3941
    %v5254 = vpack.c.b16 %v3950, %v3942
    %v5255 = vpack.c.b16 %v3951, %v3943
    %v5256 = vpack.c.b16 %v3952, %v3944
    %v5257 = vpack.c.b16 %v3953, %v3945
    %v5258 = vpack.c.b16 %v3954, %v3946
    %v5259 = vpack.c.b16 %v3963, %v3955
    %v5260 = vpack.c.b16 %v3964, %v3956
    %v5261 = vpack.c.b16 %v3965, %v3957
    %v5262 = vpack.c.b16 %v3966, %v3958
    %v5263 = vpack.c.b16 %v3967, %v3959
    %v5264 = vpack.c.b16 %v3968, %v3960
    %v5265 = vpack.c.b16 %v3969, %v3961
    %v5266 = vpack.c.b16 %v3970, %v3962
    %v5267 = vpack.c.b16 %v3979, %v3971
    %v5268 = vpack.c.b16 %v3980, %v3972
    %v5269 = vpack.c.b16 %v3981, %v3973
    %v5270 = vpack.c.b16 %v3982, %v3974
    %v5271 = vpack.c.b16 %v3983, %v3975
    %v5272 = vpack.c.b16 %v3984, %v3976
    %v5273 = vpack.c.b16 %v3985, %v3977
    %v5274 = vpack.c.b16 %v3986, %v3978
    %v5275 = vpack.c.b16 %v3995, %v3987
    %v5276 = vpack.c.b16 %v3996, %v3988
    %v5277 = vpack.c.b16 %v3997, %v3989
    %v5278 = vpack.c.b16 %v3998, %v3990
    %v5279 = vpack.c.b16 %v3999, %v3991
    %v5280 = vpack.c.b16 %v4000, %v3992
    %v5281 = vpack.c.b16 %v4001, %v3993
    %v5282 = vpack.c.b16 %v4002, %v3994
    %v5283 = vpack.c.b16 %v4011, %v4003
    %v5284 = vpack.c.b16 %v4012, %v4004
    %v5285 = vpack.c.b16 %v4013, %v4005
    %v5286 = vpack.c.b16 %v4014, %v4006
    %v5287 = vpack.c.b16 %v4015, %v4007
    %v5288 = vpack.c.b16 %v4016, %v4008
    %v5289 = vpack.c.b16 %v4017, %v4009
    %v5290 = vpack.c.b16 %v4018, %v4010
    %v5291 = vpack.c.b16 %v4027, %v4019
    %v5292 = vpack.c.b16 %v4028, %v4020
    %v5293 = vpack.c.b16 %v4029, %v4021
    %v5294 = vpack.c.b16 %v4030, %v4022
    %v5295 = vpack.c.b16 %v4031, %v4023
    %v5296 = vpack.c.b16 %v4032, %v4024
    %v5297 = vpack.c.b16 %v4033, %v4025
    %v5298 = vpack.c.b16 %v4034, %v4026
    %v5299 = vpack.c.b16 %v4043, %v4035
    %v5300 = vpack.c.b16 %v4044, %v4036
    %v5301 = vpack.c.b16 %v4045, %v4037
    %v5302 = vpack.c.b16 %v4046, %v4038
    %v5303 = vpack.c.b16 %v4047, %v4039
    %v5304 = vpack.c.b16 %v4048, %v4040
    %v5305 = vpack.c.b16 %v4049, %v4041
    %v5306 = vpack.c.b16 %v4050, %v4042
    %v5307 = vpack.c.b16 %v4059, %v4051
    %v5308 = vpack.c.b16 %v4060, %v4052
    %v5309 = vpack.c.b16 %v4061, %v4053
    %v5310 = vpack.c.b16 %v4062, %v4054
    %v5311 = vpack.c.b16 %v4063, %v4055
    %v5312 = vpack.c.b16 %v4064, %v4056
    %v5313 = vpack.c.b16 %v4065, %v4057
    %v5314 = vpack.c.b16 %v4066, %v4058
    %v5315 = vpack.c.b16 %v4075, %v4067
    %v5316 = vpack.c.b16 %v4076, %v4068
    %v5317 = vpack.c.b16 %v4077, %v4069
    %v5318 = vpack.c.b16 %v4078, %v4070
    %v5319 = vpack.c.b16 %v4079, %v4071
    %v5320 = vpack.c.b16 %v4080, %v4072
    %v5321 = vpack.c.b16 %v4081, %v4073
    %v5322 = vpack.c.b16 %v4082, %v4074
    %v5323 = vpack.c.b16 %v4091, %v4083
    %v5324 = vpack.c.b16 %v4092, %v4084
    %v5325 = vpack.c.b16 %v4093, %v4085
    %v5326 = vpack.c.b16 %v4094, %v4086
    %v5327 = vpack.c.b16 %v4095, %v4087
    %v5328 = vpack.c.b16 %v4096, %v4088
    %v5329 = vpack.c.b16 %v4097, %v4089
    %v5330 = vpack.c.b16 %v4098, %v4090
    %v5331 = vpack.c.b16 %v4107, %v4099
    %v5332 = vpack.c.b16 %v4108, %v4100
    %v5333 = vpack.c.b16 %v4109, %v4101
    %v5334 = vpack.c.b16 %v4110, %v4102
    %v5335 = vpack.c.b16 %v4111, %v4103
    %v5336 = vpack.c.b16 %v4112, %v4104
    %v5337 = vpack.c.b16 %v4113, %v4105
    %v5338 = vpack.c.b16 %v4114, %v4106
    %v5339 = vpack.c.b16 %v4123, %v4115
    %v5340 = vpack.c.b16 %v4124, %v4116
    %v5341 = vpack.c.b16 %v4125, %v4117
    %v5342 = vpack.c.b16 %v4126, %v4118
    %v5343 = vpack.c.b16 %v4127, %v4119
    %v5344 = vpack.c.b16 %v4128, %v4120
    %v5345 = vpack.c.b16 %v4129, %v4121
    %v5346 = vpack.c.b16 %v4130, %v4122
    %v5347 = vpack.c.b16 %v4139, %v4131
    %v5348 = vpack.c.b16 %v4140, %v4132
    %v5349 = vpack.c.b16 %v4141, %v4133
    %v5350 = vpack.c.b16 %v4142, %v4134
    %v5351 = vpack.c.b16 %v4143, %v4135
    %v5352 = vpack.c.b16 %v4144, %v4136
    %v5353 = vpack.c.b16 %v4145, %v4137
    %v5354 = vpack.c.b16 %v4146, %v4138
    %v5355 = vpack.c.b16 %v4155, %v4147
    %v5356 = vpack.c.b16 %v4156, %v4148
    %v5357 = vpack.c.b16 %v4157, %v4149
    %v5358 = vpack.c.b16 %v4158, %v4150
    %v5359 = vpack.c.b16 %v4159, %v4151
    %v5360 = vpack.c.b16 %v4160, %v4152
    %v5361 = vpack.c.b16 %v4161, %v4153
    %v5362 = vpack.c.b16 %v4162, %v4154
    %v5363 = vpack.c.b16 %v4171, %v4163
    %v5364 = vpack.c.b16 %v4172, %v4164
    %v5365 = vpack.c.b16 %v4173, %v4165
    %v5366 = vpack.c.b16 %v4174, %v4166
    %v5367 = vpack.c.b16 %v4175, %v4167
    %v5368 = vpack.c.b16 %v4176, %v4168
    %v5369 = vpack.c.b16 %v4177, %v4169
    %v5370 = vpack.c.b16 %v4178, %v4170
    %v5371 = vpack.c.b16 %v4187, %v4179
    %v5372 = vpack.c.b16 %v4188, %v4180
    %v5373 = vpack.c.b16 %v4189, %v4181
    %v5374 = vpack.c.b16 %v4190, %v4182
    %v5375 = vpack.c.b16 %v4191, %v4183
    %v5376 = vpack.c.b16 %v4192, %v4184
    %v5377 = vpack.c.b16 %v4193, %v4185
    %v5378 = vpack.c.b16 %v4194, %v4186
    %v5379 = vpack.c.b16 %v4203, %v4195
    %v5380 = vpack.c.b16 %v4204, %v4196
    %v5381 = vpack.c.b16 %v4205, %v4197
    %v5382 = vpack.c.b16 %v4206, %v4198
    %v5383 = vpack.c.b16 %v4207, %v4199
    %v5384 = vpack.c.b16 %v4208, %v4200
    %v5385 = vpack.c.b16 %v4209, %v4201
    %v5386 = vpack.c.b16 %v4210, %v4202
    %v5387 = vpack.c.b16 %v4219, %v4211
    %v5388 = vpack.c.b16 %v4220, %v4212
    %v5389 = vpack.c.b16 %v4221, %v4213
    %v5390 = vpack.c.b16 %v4222, %v4214
    %v5391 = vpack.c.b16 %v4223, %v4215
    %v5392 = vpack.c.b16 %v4224, %v4216
    %v5393 = vpack.c.b16 %v4225, %v4217
    %v5394 = vpack.c.b16 %v4226, %v4218
    %v5395 = vpack.c.b16 %v4235, %v4227
    %v5396 = vpack.c.b16 %v4236, %v4228
    %v5397 = vpack.c.b16 %v4237, %v4229
    %v5398 = vpack.c.b16 %v4238, %v4230
    %v5399 = vpack.c.b16 %v4239, %v4231
    %v5400 = vpack.c.b16 %v4240, %v4232
    %v5401 = vpack.c.b16 %v4241, %v4233
    %v5402 = vpack.c.b16 %v4242, %v4234
    %v5403 = vpack.c.b16 %v4251, %v4243
    %v5404 = vpack.c.b16 %v4252, %v4244
    %v5405 = vpack.c.b16 %v4253, %v4245
    %v5406 = vpack.c.b16 %v4254, %v4246
    %v5407 = vpack.c.b16 %v4255, %v4247
    %v5408 = vpack.c.b16 %v4256, %v4248
    %v5409 = vpack.c.b16 %v4257, %v4249
    %v5410 = vpack.c.b16 %v4258, %v4250
    %v5411 = vpack.c.b16 %v4267, %v4259
    %v5412 = vpack.c.b16 %v4268, %v4260
    %v5413 = vpack.c.b16 %v4269, %v4261
    %v5414 = vpack.c.b16 %v4270, %v4262
    %v5415 = vpack.c.b16 %v4271, %v4263
    %v5416 = vpack.c.b16 %v4272, %v4264
    %v5417 = vpack.c.b16 %v4273, %v4265
    %v5418 = vpack.c.b16 %v4274, %v4266
    %v5419 = vpack.c.b16 %v4283, %v4275
    %v5420 = vpack.c.b16 %v4284, %v4276
    %v5421 = vpack.c.b16 %v4285, %v4277
    %v5422 = vpack.c.b16 %v4286, %v4278
    %v5423 = vpack.c.b16 %v4287, %v4279
    %v5424 = vpack.c.b16 %v4288, %v4280
    %v5425 = vpack.c.b16 %v4289, %v4281
    %v5426 = vpack.c.b16 %v4290, %v4282
    %v5427 = vpack.c.b16 %v4299, %v4291
    %v5428 = vpack.c.b16 %v4300, %v4292
    %v5429 = vpack.c.b16 %v4301, %v4293
    %v5430 = vpack.c.b16 %v4302, %v4294
    %v5431 = vpack.c.b16 %v4303, %v4295
    %v5432 = vpack.c.b16 %v4304, %v4296
    %v5433 = vpack.c.b16 %v4305, %v4297
    %v5434 = vpack.c.b16 %v4306, %v4298
    %v5435 = vpack.c.b16 %v4315, %v4307
    %v5436 = vpack.c.b16 %v4316, %v4308
    %v5437 = vpack.c.b16 %v4317, %v4309
    %v5438 = vpack.c.b16 %v4318, %v4310
    %v5439 = vpack.c.b16 %v4319, %v4311
    %v5440 = vpack.c.b16 %v4320, %v4312
    %v5441 = vpack.c.b16 %v4321, %v4313
    %v5442 = vpack.c.b16 %v4322, %v4314
    %v5443 = vpack.c.b16 %v4331, %v4323
    %v5444 = vpack.c.b16 %v4332, %v4324
    %v5445 = vpack.c.b16 %v4333, %v4325
    %v5446 = vpack.c.b16 %v4334, %v4326
    %v5447 = vpack.c.b16 %v4335, %v4327
    %v5448 = vpack.c.b16 %v4336, %v4328
    %v5449 = vpack.c.b16 %v4337, %v4329
    %v5450 = vpack.c.b16 %v4338, %v4330
    %v5451 = vpack.c.b16 %v4347, %v4339
    %v5452 = vpack.c.b16 %v4348, %v4340
    %v5453 = vpack.c.b16 %v4349, %v4341
    %v5454 = vpack.c.b16 %v4350, %v4342
    %v5455 = vpack.c.b16 %v4351, %v4343
    %v5456 = vpack.c.b16 %v4352, %v4344
    %v5457 = vpack.c.b16 %v4353, %v4345
    %v5458 = vpack.c.b16 %v4354, %v4346
    %v5459 = vpack.c.b16 %v4363, %v4355
    %v5460 = vpack.c.b16 %v4364, %v4356
    %v5461 = vpack.c.b16 %v4365, %v4357
    %v5462 = vpack.c.b16 %v4366, %v4358
    %v5463 = vpack.c.b16 %v4367, %v4359
    %v5464 = vpack.c.b16 %v4368, %v4360
    %v5465 = vpack.c.b16 %v4369, %v4361
    %v5466 = vpack.c.b16 %v4370, %v4362
    %v5467 = vpack.c.b16 %v4379, %v4371
    %v5468 = vpack.c.b16 %v4380, %v4372
    %v5469 = vpack.c.b16 %v4381, %v4373
    %v5470 = vpack.c.b16 %v4382, %v4374
    %v5471 = vpack.c.b16 %v4383, %v4375
    %v5472 = vpack.c.b16 %v4384, %v4376
    %v5473 = vpack.c.b16 %v4385, %v4377
    %v5474 = vpack.c.b16 %v4386, %v4378
    %v5475 = vpack.c.b16 %v4395, %v4387
    %v5476 = vpack.c.b16 %v4396, %v4388
    %v5477 = vpack.c.b16 %v4397, %v4389
    %v5478 = vpack.c.b16 %v4398, %v4390
    %v5479 = vpack.c.b16 %v4399, %v4391
    %v5480 = vpack.c.b16 %v4400, %v4392
    %v5481 = vpack.c.b16 %v4401, %v4393
    %v5482 = vpack.c.b16 %v4402, %v4394
    %v5483 = vpack.c.b16 %v4411, %v4403
    %v5484 = vpack.c.b16 %v4412, %v4404
    %v5485 = vpack.c.b16 %v4413, %v4405
    %v5486 = vpack.c.b16 %v4414, %v4406
    %v5487 = vpack.c.b16 %v4415, %v4407
    %v5488 = vpack.c.b16 %v4416, %v4408
    %v5489 = vpack.c.b16 %v4417, %v4409
    %v5490 = vpack.c.b16 %v4418, %v4410
    %v5491 = vpack.c.b16 %v4427, %v4419
    %v5492 = vpack.c.b16 %v4428, %v4420
    %v5493 = vpack.c.b16 %v4429, %v4421
    %v5494 = vpack.c.b16 %v4430, %v4422
    %v5495 = vpack.c.b16 %v4431, %v4423
    %v5496 = vpack.c.b16 %v4432, %v4424
    %v5497 = vpack.c.b16 %v4433, %v4425
    %v5498 = vpack.c.b16 %v4434, %v4426
    %v5499 = vpack.c.b16 %v4443, %v4435
    %v5500 = vpack.c.b16 %v4444, %v4436
    %v5501 = vpack.c.b16 %v4445, %v4437
    %v5502 = vpack.c.b16 %v4446, %v4438
    %v5503 = vpack.c.b16 %v4447, %v4439
    %v5504 = vpack.c.b16 %v4448, %v4440
    %v5505 = vpack.c.b16 %v4449, %v4441
    %v5506 = vpack.c.b16 %v4450, %v4442
    %v5507 = vpack.c.b16 %v4459, %v4451
    %v5508 = vpack.c.b16 %v4460, %v4452
    %v5509 = vpack.c.b16 %v4461, %v4453
    %v5510 = vpack.c.b16 %v4462, %v4454
    %v5511 = vpack.c.b16 %v4463, %v4455
    %v5512 = vpack.c.b16 %v4464, %v4456
    %v5513 = vpack.c.b16 %v4465, %v4457
    %v5514 = vpack.c.b16 %v4466, %v4458
    %v5515 = vpack.c.b16 %v4475, %v4467
    %v5516 = vpack.c.b16 %v4476, %v4468
    %v5517 = vpack.c.b16 %v4477, %v4469
    %v5518 = vpack.c.b16 %v4478, %v4470
    %v5519 = vpack.c.b16 %v4479, %v4471
    %v5520 = vpack.c.b16 %v4480, %v4472
    %v5521 = vpack.c.b16 %v4481, %v4473
    %v5522 = vpack.c.b16 %v4482, %v4474
    %v5523 = vpack.c.b16 %v4491, %v4483
    %v5524 = vpack.c.b16 %v4492, %v4484
    %v5525 = vpack.c.b16 %v4493, %v4485
    %v5526 = vpack.c.b16 %v4494, %v4486
    %v5527 = vpack.c.b16 %v4495, %v4487
    %v5528 = vpack.c.b16 %v4496, %v4488
    %v5529 = vpack.c.b16 %v4497, %v4489
    %v5530 = vpack.c.b16 %v4498, %v4490
    %v5531 = vpack.c.b16 %v4507, %v4499
    %v5532 = vpack.c.b16 %v4508, %v4500
    %v5533 = vpack.c.b16 %v4509, %v4501
    %v5534 = vpack.c.b16 %v4510, %v4502
    %v5535 = vpack.c.b16 %v4511, %v4503
    %v5536 = vpack.c.b16 %v4512, %v4504
    %v5537 = vpack.c.b16 %v4513, %v4505
    %v5538 = vpack.c.b16 %v4514, %v4506
    %6563 = vmatprep.subr.bf16.mxu0 %v4516
    %6564 = vmatpush1.bf16.msra.mxu0 %v4515
    %6565 = vmatprep.subr.bf16.mxu0 %v4524
    %6566 = vmatpush1.bf16.msra.mxu0 %v4523
    %6567 = vmatprep.subr.bf16.mxu0 %v4532
    %6568 = vmatpush1.bf16.msra.mxu0 %v4531
    %6569 = vmatprep.subr.bf16.mxu0 %v4540
    %6570 = vmatpush1.bf16.msra.mxu0 %v4539
    %6571 = vmatprep.subr.bf16.mxu0 %v4548
    %6572 = vmatpush1.bf16.msra.mxu0 %v4547
    %6573 = vmatprep.subr.bf16.mxu0 %v4556
    %6574 = vmatpush1.bf16.msra.mxu0 %v4555
    %6575 = vmatprep.subr.bf16.mxu0 %v4564
    %6576 = vmatpush1.bf16.msra.mxu0 %v4563
    %6577 = vmatprep.subr.bf16.mxu0 %v4572
    %6578 = vmatpush1.bf16.msra.mxu0 %v4571
    %6579 = vmatprep.subr.bf16.mxu0 %v4580
    %6580 = vmatpush1.bf16.msra.mxu0 %v4579
    %6581 = vmatprep.subr.bf16.mxu0 %v4588
    %6582 = vmatpush1.bf16.msra.mxu0 %v4587
    %6583 = vmatprep.subr.bf16.mxu0 %v4596
    %6584 = vmatpush1.bf16.msra.mxu0 %v4595
    %6585 = vmatprep.subr.bf16.mxu0 %v4604
    %6586 = vmatpush1.bf16.msra.mxu0 %v4603
    %6587 = vmatprep.subr.bf16.mxu0 %v4612
    %6588 = vmatpush1.bf16.msra.mxu0 %v4611
    %6589 = vmatprep.subr.bf16.mxu0 %v4620
    %6590 = vmatpush1.bf16.msra.mxu0 %v4619
    %6591 = vmatprep.subr.bf16.mxu0 %v4628
    %6592 = vmatpush1.bf16.msra.mxu0 %v4627
    %6593 = vmatprep.subr.bf16.mxu0 %v4636
    %6594 = vmatpush1.bf16.msra.mxu0 %v4635
    %6595 = vmatprep.mubr.bf16.mxu0 %v362
    %6596 = vmatmul.mubr.bf16.gmra.mrb[0].mxu0 %v361
    %v6597 = vpop.f32.mrb[0].mxu0
    %v6598 = vadd.f32 %v1406, %v6597
    %v6599 = vpop.f32.mrb[0].mxu0
    %v6600 = vadd.f32 %v1410, %v6599
    %v6601 = vpop.f32.mrb[0].mxu0
    %v6602 = vpop.f32.mrb[0].mxu0
    %6603 = vdwg.mxu0
    %6604 = vmatprep.subr.bf16.mxu0 %v4644
    %6605 = vmatpush1.bf16.msra.mxu0 %v4643
    %6606 = vmatprep.subr.bf16.mxu0 %v4652
    %6607 = vmatpush1.bf16.msra.mxu0 %v4651
    %6608 = vmatprep.subr.bf16.mxu0 %v4660
    %6609 = vmatpush1.bf16.msra.mxu0 %v4659
    %6610 = vmatprep.subr.bf16.mxu0 %v4668
    %6611 = vmatpush1.bf16.msra.mxu0 %v4667
    %6612 = vmatprep.subr.bf16.mxu0 %v4676
    %6613 = vmatpush1.bf16.msra.mxu0 %v4675
    %6614 = vmatprep.subr.bf16.mxu0 %v4684
    %6615 = vmatpush1.bf16.msra.mxu0 %v4683
    %6616 = vmatprep.subr.bf16.mxu0 %v4692
    %6617 = vmatpush1.bf16.msra.mxu0 %v4691
    %6618 = vmatprep.subr.bf16.mxu0 %v4700
    %6619 = vmatpush1.bf16.msra.mxu0 %v4699
    %6620 = vmatprep.subr.bf16.mxu0 %v4708
    %6621 = vmatpush1.bf16.msra.mxu0 %v4707
    %6622 = vmatprep.subr.bf16.mxu0 %v4716
    %6623 = vmatpush1.bf16.msra.mxu0 %v4715
    %6624 = vmatprep.subr.bf16.mxu0 %v4724
    %6625 = vmatpush1.bf16.msra.mxu0 %v4723
    %6626 = vmatprep.subr.bf16.mxu0 %v4732
    %6627 = vmatpush1.bf16.msra.mxu0 %v4731
    %6628 = vmatprep.subr.bf16.mxu0 %v4740
    %6629 = vmatpush1.bf16.msra.mxu0 %v4739
    %6630 = vmatprep.subr.bf16.mxu0 %v4748
    %6631 = vmatpush1.bf16.msra.mxu0 %v4747
    %6632 = vmatprep.subr.bf16.mxu0 %v4756
    %6633 = vmatpush1.bf16.msra.mxu0 %v4755
    %6634 = vmatprep.subr.bf16.mxu0 %v4764
    %6635 = vmatpush1.bf16.msra.mxu0 %v4763
    %6636 = vmatprep.mubr.bf16.mxu0 %v364
    %6637 = vmatmul.mubr.bf16.gmra.mrb[0].mxu0 %v363
    %v6638 = vpop.f32.mrb[0].mxu0
    %v6639 = vadd.f32 %v6598, %v6638
    %v6640 = vpop.f32.mrb[0].mxu0
    %v6641 = vadd.f32 %v6600, %v6640
    %v6642 = vpop.f32.mrb[0].mxu0
    %v6643 = vpop.f32.mrb[0].mxu0
    %6644 = vdwg.mxu0
    %6645 = vmatprep.subr.bf16.mxu0 %v4772
    %6646 = vmatpush1.bf16.msra.mxu0 %v4771
    %6647 = vmatprep.subr.bf16.mxu0 %v4780
    %6648 = vmatpush1.bf16.msra.mxu0 %v4779
    %6649 = vmatprep.subr.bf16.mxu0 %v4788
    %6650 = vmatpush1.bf16.msra.mxu0 %v4787
    %6651 = vmatprep.subr.bf16.mxu0 %v4796
    %6652 = vmatpush1.bf16.msra.mxu0 %v4795
    %6653 = vmatprep.subr.bf16.mxu0 %v4804
    %6654 = vmatpush1.bf16.msra.mxu0 %v4803
    %6655 = vmatprep.subr.bf16.mxu0 %v4812
    %6656 = vmatpush1.bf16.msra.mxu0 %v4811
    %6657 = vmatprep.subr.bf16.mxu0 %v4820
    %6658 = vmatpush1.bf16.msra.mxu0 %v4819
    %6659 = vmatprep.subr.bf16.mxu0 %v4828
    %6660 = vmatpush1.bf16.msra.mxu0 %v4827
    %6661 = vmatprep.subr.bf16.mxu0 %v4836
    %6662 = vmatpush1.bf16.msra.mxu0 %v4835
    %6663 = vmatprep.subr.bf16.mxu0 %v4844
    %6664 = vmatpush1.bf16.msra.mxu0 %v4843
    %6665 = vmatprep.subr.bf16.mxu0 %v4852
    %6666 = vmatpush1.bf16.msra.mxu0 %v4851
    %6667 = vmatprep.subr.bf16.mxu0 %v4860
    %6668 = vmatpush1.bf16.msra.mxu0 %v4859
    %6669 = vmatprep.subr.bf16.mxu0 %v4868
    %6670 = vmatpush1.bf16.msra.mxu0 %v4867
    %6671 = vmatprep.subr.bf16.mxu0 %v4876
    %6672 = vmatpush1.bf16.msra.mxu0 %v4875
    %6673 = vmatprep.subr.bf16.mxu0 %v4884
    %6674 = vmatpush1.bf16.msra.mxu0 %v4883
    %6675 = vmatprep.subr.bf16.mxu0 %v4892
    %6676 = vmatpush1.bf16.msra.mxu0 %v4891
    %6677 = vmatprep.mubr.bf16.mxu0 %v366
    %6678 = vmatmul.mubr.bf16.gmra.mrb[0].mxu0 %v365
    %v6679 = vpop.f32.mrb[0].mxu0
    %v6680 = vadd.f32 %v6639, %v6679
    %v6681 = vpop.f32.mrb[0].mxu0
    %v6682 = vadd.f32 %v6641, %v6681
    %v6683 = vpop.f32.mrb[0].mxu0
    %v6684 = vpop.f32.mrb[0].mxu0
    %6685 = vdwg.mxu0
    %6686 = vmatprep.subr.bf16.mxu0 %v4900
    %6687 = vmatpush1.bf16.msra.mxu0 %v4899
    %6688 = vmatprep.subr.bf16.mxu0 %v4908
    %6689 = vmatpush1.bf16.msra.mxu0 %v4907
    %6690 = vmatprep.subr.bf16.mxu0 %v4916
    %6691 = vmatpush1.bf16.msra.mxu0 %v4915
    %6692 = vmatprep.subr.bf16.mxu0 %v4924
    %6693 = vmatpush1.bf16.msra.mxu0 %v4923
    %6694 = vmatprep.subr.bf16.mxu0 %v4932
    %6695 = vmatpush1.bf16.msra.mxu0 %v4931
    %6696 = vmatprep.subr.bf16.mxu0 %v4940
    %6697 = vmatpush1.bf16.msra.mxu0 %v4939
    %6698 = vmatprep.subr.bf16.mxu0 %v4948
    %6699 = vmatpush1.bf16.msra.mxu0 %v4947
    %6700 = vmatprep.subr.bf16.mxu0 %v4956
    %6701 = vmatpush1.bf16.msra.mxu0 %v4955
    %6702 = vmatprep.subr.bf16.mxu0 %v4964
    %6703 = vmatpush1.bf16.msra.mxu0 %v4963
    %6704 = vmatprep.subr.bf16.mxu0 %v4972
    %6705 = vmatpush1.bf16.msra.mxu0 %v4971
    %6706 = vmatprep.subr.bf16.mxu0 %v4980
    %6707 = vmatpush1.bf16.msra.mxu0 %v4979
    %6708 = vmatprep.subr.bf16.mxu0 %v4988
    %6709 = vmatpush1.bf16.msra.mxu0 %v4987
    %6710 = vmatprep.subr.bf16.mxu0 %v4996
    %6711 = vmatpush1.bf16.msra.mxu0 %v4995
    %6712 = vmatprep.subr.bf16.mxu0 %v5004
    %6713 = vmatpush1.bf16.msra.mxu0 %v5003
    %6714 = vmatprep.subr.bf16.mxu0 %v5012
    %6715 = vmatpush1.bf16.msra.mxu0 %v5011
    %6716 = vmatprep.subr.bf16.mxu0 %v5020
    %6717 = vmatpush1.bf16.msra.mxu0 %v5019
    %6718 = vmatprep.mubr.bf16.mxu0 %v368
    %6719 = vmatmul.mubr.bf16.gmra.mrb[0].mxu0 %v367
    %v6720 = vpop.f32.mrb[0].mxu0
    %v6721 = vadd.f32 %v6680, %v6720
    %v6722 = vpop.f32.mrb[0].mxu0
    %v6723 = vadd.f32 %v6682, %v6722
    %v6724 = vpop.f32.mrb[0].mxu0
    %v6725 = vpop.f32.mrb[0].mxu0
    %6726 = vdwg.mxu0
    %6727 = vmatprep.subr.bf16.mxu0 %v5028
    %6728 = vmatpush1.bf16.msra.mxu0 %v5027
    %6729 = vmatprep.subr.bf16.mxu0 %v5036
    %6730 = vmatpush1.bf16.msra.mxu0 %v5035
    %6731 = vmatprep.subr.bf16.mxu0 %v5044
    %6732 = vmatpush1.bf16.msra.mxu0 %v5043
    %6733 = vmatprep.subr.bf16.mxu0 %v5052
    %6734 = vmatpush1.bf16.msra.mxu0 %v5051
    %6735 = vmatprep.subr.bf16.mxu0 %v5060
    %6736 = vmatpush1.bf16.msra.mxu0 %v5059
    %6737 = vmatprep.subr.bf16.mxu0 %v5068
    %6738 = vmatpush1.bf16.msra.mxu0 %v5067
    %6739 = vmatprep.subr.bf16.mxu0 %v5076
    %6740 = vmatpush1.bf16.msra.mxu0 %v5075
    %6741 = vmatprep.subr.bf16.mxu0 %v5084
    %6742 = vmatpush1.bf16.msra.mxu0 %v5083
    %6743 = vmatprep.subr.bf16.mxu0 %v5092
    %6744 = vmatpush1.bf16.msra.mxu0 %v5091
    %6745 = vmatprep.subr.bf16.mxu0 %v5100
    %6746 = vmatpush1.bf16.msra.mxu0 %v5099
    %6747 = vmatprep.subr.bf16.mxu0 %v5108
    %6748 = vmatpush1.bf16.msra.mxu0 %v5107
    %6749 = vmatprep.subr.bf16.mxu0 %v5116
    %6750 = vmatpush1.bf16.msra.mxu0 %v5115
    %6751 = vmatprep.subr.bf16.mxu0 %v5124
    %6752 = vmatpush1.bf16.msra.mxu0 %v5123
    %6753 = vmatprep.subr.bf16.mxu0 %v5132
    %6754 = vmatpush1.bf16.msra.mxu0 %v5131
    %6755 = vmatprep.subr.bf16.mxu0 %v5140
    %6756 = vmatpush1.bf16.msra.mxu0 %v5139
    %6757 = vmatprep.subr.bf16.mxu0 %v5148
    %6758 = vmatpush1.bf16.msra.mxu0 %v5147
    %6759 = vmatprep.mubr.bf16.mxu0 %v370
    %6760 = vmatmul.mubr.bf16.gmra.mrb[0].mxu0 %v369
    %v6761 = vpop.f32.mrb[0].mxu0
    %v6762 = vadd.f32 %v6721, %v6761
    %v6763 = vpop.f32.mrb[0].mxu0
    %v6764 = vadd.f32 %v6723, %v6763
    %v6765 = vpop.f32.mrb[0].mxu0
    %v6766 = vpop.f32.mrb[0].mxu0
    %6767 = vdwg.mxu0
    %6768 = vmatprep.subr.bf16.mxu0 %v5156
    %6769 = vmatpush1.bf16.msra.mxu0 %v5155
    %6770 = vmatprep.subr.bf16.mxu0 %v5164
    %6771 = vmatpush1.bf16.msra.mxu0 %v5163
    %6772 = vmatprep.subr.bf16.mxu0 %v5172
    %6773 = vmatpush1.bf16.msra.mxu0 %v5171
    %6774 = vmatprep.subr.bf16.mxu0 %v5180
    %6775 = vmatpush1.bf16.msra.mxu0 %v5179
    %6776 = vmatprep.subr.bf16.mxu0 %v5188
    %6777 = vmatpush1.bf16.msra.mxu0 %v5187
    %6778 = vmatprep.subr.bf16.mxu0 %v5196
    %6779 = vmatpush1.bf16.msra.mxu0 %v5195
    %6780 = vmatprep.subr.bf16.mxu0 %v5204
    %6781 = vmatpush1.bf16.msra.mxu0 %v5203
    %6782 = vmatprep.subr.bf16.mxu0 %v5212
    %6783 = vmatpush1.bf16.msra.mxu0 %v5211
    %6784 = vmatprep.subr.bf16.mxu0 %v5220
    %6785 = vmatpush1.bf16.msra.mxu0 %v5219
    %6786 = vmatprep.subr.bf16.mxu0 %v5228
    %6787 = vmatpush1.bf16.msra.mxu0 %v5227
    %6788 = vmatprep.subr.bf16.mxu0 %v5236
    %6789 = vmatpush1.bf16.msra.mxu0 %v5235
    %6790 = vmatprep.subr.bf16.mxu0 %v5244
    %6791 = vmatpush1.bf16.msra.mxu0 %v5243
    %6792 = vmatprep.subr.bf16.mxu0 %v5252
    %6793 = vmatpush1.bf16.msra.mxu0 %v5251
    %6794 = vmatprep.subr.bf16.mxu0 %v5260
    %6795 = vmatpush1.bf16.msra.mxu0 %v5259
    %6796 = vmatprep.subr.bf16.mxu0 %v5268
    %6797 = vmatpush1.bf16.msra.mxu0 %v5267
    %6798 = vmatprep.subr.bf16.mxu0 %v5276
    %6799 = vmatpush1.bf16.msra.mxu0 %v5275
    %6800 = vmatprep.mubr.bf16.mxu0 %v372
    %6801 = vmatmul.mubr.bf16.gmra.mrb[0].mxu0 %v371
    %v6802 = vpop.f32.mrb[0].mxu0
    %v6803 = vadd.f32 %v6762, %v6802
    %v6804 = vpop.f32.mrb[0].mxu0
    %v6805 = vadd.f32 %v6764, %v6804
    %v6806 = vpop.f32.mrb[0].mxu0
    %v6807 = vpop.f32.mrb[0].mxu0
    %6808 = vdwg.mxu0
    %6809 = vmatprep.subr.bf16.mxu0 %v5284
    %6810 = vmatpush1.bf16.msra.mxu0 %v5283
    %6811 = vmatprep.subr.bf16.mxu0 %v5292
    %6812 = vmatpush1.bf16.msra.mxu0 %v5291
    %6813 = vmatprep.subr.bf16.mxu0 %v5300
    %6814 = vmatpush1.bf16.msra.mxu0 %v5299
    %6815 = vmatprep.subr.bf16.mxu0 %v5308
    %6816 = vmatpush1.bf16.msra.mxu0 %v5307
    %6817 = vmatprep.subr.bf16.mxu0 %v5316
    %6818 = vmatpush1.bf16.msra.mxu0 %v5315
    %6819 = vmatprep.subr.bf16.mxu0 %v5324
    %6820 = vmatpush1.bf16.msra.mxu0 %v5323
    %6821 = vmatprep.subr.bf16.mxu0 %v5332
    %6822 = vmatpush1.bf16.msra.mxu0 %v5331
    %6823 = vmatprep.subr.bf16.mxu0 %v5340
    %6824 = vmatpush1.bf16.msra.mxu0 %v5339
    %6825 = vmatprep.subr.bf16.mxu0 %v5348
    %6826 = vmatpush1.bf16.msra.mxu0 %v5347
    %6827 = vmatprep.subr.bf16.mxu0 %v5356
    %6828 = vmatpush1.bf16.msra.mxu0 %v5355
    %6829 = vmatprep.subr.bf16.mxu0 %v5364
    %6830 = vmatpush1.bf16.msra.mxu0 %v5363
    %6831 = vmatprep.subr.bf16.mxu0 %v5372
    %6832 = vmatpush1.bf16.msra.mxu0 %v5371
    %6833 = vmatprep.subr.bf16.mxu0 %v5380
    %6834 = vmatpush1.bf16.msra.mxu0 %v5379
    %6835 = vmatprep.subr.bf16.mxu0 %v5388
    %6836 = vmatpush1.bf16.msra.mxu0 %v5387
    %6837 = vmatprep.subr.bf16.mxu0 %v5396
    %6838 = vmatpush1.bf16.msra.mxu0 %v5395
    %6839 = vmatprep.subr.bf16.mxu0 %v5404
    %6840 = vmatpush1.bf16.msra.mxu0 %v5403
    %6841 = vmatprep.mubr.bf16.mxu0 %v374
    %6842 = vmatmul.mubr.bf16.gmra.mrb[0].mxu0 %v373
    %v6843 = vpop.f32.mrb[0].mxu0
    %v6844 = vadd.f32 %v6803, %v6843
    %v6845 = vpop.f32.mrb[0].mxu0
    %v6846 = vadd.f32 %v6805, %v6845
    %v6847 = vpop.f32.mrb[0].mxu0
    %v6848 = vpop.f32.mrb[0].mxu0
    %6849 = vdwg.mxu0
    %6850 = vmatprep.subr.bf16.mxu0 %v5412
    %6851 = vmatpush1.bf16.msra.mxu0 %v5411
    %6852 = vmatprep.subr.bf16.mxu0 %v5420
    %6853 = vmatpush1.bf16.msra.mxu0 %v5419
    %6854 = vmatprep.subr.bf16.mxu0 %v5428
    %6855 = vmatpush1.bf16.msra.mxu0 %v5427
    %6856 = vmatprep.subr.bf16.mxu0 %v5436
    %6857 = vmatpush1.bf16.msra.mxu0 %v5435
    %6858 = vmatprep.subr.bf16.mxu0 %v5444
    %6859 = vmatpush1.bf16.msra.mxu0 %v5443
    %6860 = vmatprep.subr.bf16.mxu0 %v5452
    %6861 = vmatpush1.bf16.msra.mxu0 %v5451
    %6862 = vmatprep.subr.bf16.mxu0 %v5460
    %6863 = vmatpush1.bf16.msra.mxu0 %v5459
    %6864 = vmatprep.subr.bf16.mxu0 %v5468
    %6865 = vmatpush1.bf16.msra.mxu0 %v5467
    %6866 = vmatprep.subr.bf16.mxu0 %v5476
    %6867 = vmatpush1.bf16.msra.mxu0 %v5475
    %6868 = vmatprep.subr.bf16.mxu0 %v5484
    %6869 = vmatpush1.bf16.msra.mxu0 %v5483
    %6870 = vmatprep.subr.bf16.mxu0 %v5492
    %6871 = vmatpush1.bf16.msra.mxu0 %v5491
    %6872 = vmatprep.subr.bf16.mxu0 %v5500
    %6873 = vmatpush1.bf16.msra.mxu0 %v5499
    %6874 = vmatprep.subr.bf16.mxu0 %v5508
    %6875 = vmatpush1.bf16.msra.mxu0 %v5507
    %6876 = vmatprep.subr.bf16.mxu0 %v5516
    %6877 = vmatpush1.bf16.msra.mxu0 %v5515
    %6878 = vmatprep.subr.bf16.mxu0 %v5524
    %6879 = vmatpush1.bf16.msra.mxu0 %v5523
    %6880 = vmatprep.subr.bf16.mxu0 %v5532
    %6881 = vmatpush1.bf16.msra.mxu0 %v5531
    %6882 = vmatprep.mubr.bf16.mxu0 %v376
    %6883 = vmatmul.mubr.bf16.gmra.mrb[0].mxu0 %v375
    %v6884 = vpop.f32.mrb[0].mxu0
    %v6885 = vadd.f32 %v6844, %v6884
    %v6886 = vpop.f32.mrb[0].mxu0
    %v6887 = vadd.f32 %v6846, %v6886
    %v6888 = vpop.f32.mrb[0].mxu0
    %v6889 = vpop.f32.mrb[0].mxu0
    %6890 = vdwg.mxu0
    %6891 = vmatprep.subr.bf16.mxu0 %v4518
    %6892 = vmatpush1.bf16.msra.mxu0 %v4517
    %6893 = vmatprep.subr.bf16.mxu0 %v4526
    %6894 = vmatpush1.bf16.msra.mxu0 %v4525
    %6895 = vmatprep.subr.bf16.mxu0 %v4534
    %6896 = vmatpush1.bf16.msra.mxu0 %v4533
    %6897 = vmatprep.subr.bf16.mxu0 %v4542
    %6898 = vmatpush1.bf16.msra.mxu0 %v4541
    %6899 = vmatprep.subr.bf16.mxu0 %v4550
    %6900 = vmatpush1.bf16.msra.mxu0 %v4549
    %6901 = vmatprep.subr.bf16.mxu0 %v4558
    %6902 = vmatpush1.bf16.msra.mxu0 %v4557
    %6903 = vmatprep.subr.bf16.mxu0 %v4566
    %6904 = vmatpush1.bf16.msra.mxu0 %v4565
    %6905 = vmatprep.subr.bf16.mxu0 %v4574
    %6906 = vmatpush1.bf16.msra.mxu0 %v4573
    %6907 = vmatprep.subr.bf16.mxu0 %v4582
    %6908 = vmatpush1.bf16.msra.mxu0 %v4581
    %6909 = vmatprep.subr.bf16.mxu0 %v4590
    %6910 = vmatpush1.bf16.msra.mxu0 %v4589
    %6911 = vmatprep.subr.bf16.mxu0 %v4598
    %6912 = vmatpush1.bf16.msra.mxu0 %v4597
    %6913 = vmatprep.subr.bf16.mxu0 %v4606
    %6914 = vmatpush1.bf16.msra.mxu0 %v4605
    %6915 = vmatprep.subr.bf16.mxu0 %v4614
    %6916 = vmatpush1.bf16.msra.mxu0 %v4613
    %6917 = vmatprep.subr.bf16.mxu0 %v4622
    %6918 = vmatpush1.bf16.msra.mxu0 %v4621
    %6919 = vmatprep.subr.bf16.mxu0 %v4630
    %6920 = vmatpush1.bf16.msra.mxu0 %v4629
    %6921 = vmatprep.subr.bf16.mxu0 %v4638
    %6922 = vmatpush1.bf16.msra.mxu0 %v4637
    %6923 = vmatprep.mubr.bf16.mxu0 %v362
    %6924 = vmatmul.mubr.bf16.gmra.mrb[0].mxu0 %v361
    %v6925 = vpop.f32.mrb[0].mxu0
    %v6926 = vadd.f32 %v1414, %v6925
    %v6927 = vpop.f32.mrb[0].mxu0
    %v6928 = vadd.f32 %v1418, %v6927
    %v6929 = vpop.f32.mrb[0].mxu0
    %v6930 = vpop.f32.mrb[0].mxu0
    %6931 = vdwg.mxu0
    %6932 = vmatprep.subr.bf16.mxu0 %v4646
    %6933 = vmatpush1.bf16.msra.mxu0 %v4645
    %6934 = vmatprep.subr.bf16.mxu0 %v4654
    %6935 = vmatpush1.bf16.msra.mxu0 %v4653
    %6936 = vmatprep.subr.bf16.mxu0 %v4662
    %6937 = vmatpush1.bf16.msra.mxu0 %v4661
    %6938 = vmatprep.subr.bf16.mxu0 %v4670
    %6939 = vmatpush1.bf16.msra.mxu0 %v4669
    %6940 = vmatprep.subr.bf16.mxu0 %v4678
    %6941 = vmatpush1.bf16.msra.mxu0 %v4677
    %6942 = vmatprep.subr.bf16.mxu0 %v4686
    %6943 = vmatpush1.bf16.msra.mxu0 %v4685
    %6944 = vmatprep.subr.bf16.mxu0 %v4694
    %6945 = vmatpush1.bf16.msra.mxu0 %v4693
    %6946 = vmatprep.subr.bf16.mxu0 %v4702
    %6947 = vmatpush1.bf16.msra.mxu0 %v4701
    %6948 = vmatprep.subr.bf16.mxu0 %v4710
    %6949 = vmatpush1.bf16.msra.mxu0 %v4709
    %6950 = vmatprep.subr.bf16.mxu0 %v4718
    %6951 = vmatpush1.bf16.msra.mxu0 %v4717
    %6952 = vmatprep.subr.bf16.mxu0 %v4726
    %6953 = vmatpush1.bf16.msra.mxu0 %v4725
    %6954 = vmatprep.subr.bf16.mxu0 %v4734
    %6955 = vmatpush1.bf16.msra.mxu0 %v4733
    %6956 = vmatprep.subr.bf16.mxu0 %v4742
    %6957 = vmatpush1.bf16.msra.mxu0 %v4741
    %6958 = vmatprep.subr.bf16.mxu0 %v4750
    %6959 = vmatpush1.bf16.msra.mxu0 %v4749
    %6960 = vmatprep.subr.bf16.mxu0 %v4758
    %6961 = vmatpush1.bf16.msra.mxu0 %v4757
    %6962 = vmatprep.subr.bf16.mxu0 %v4766
    %6963 = vmatpush1.bf16.msra.mxu0 %v4765
    %6964 = vmatprep.mubr.bf16.mxu0 %v364
    %6965 = vmatmul.mubr.bf16.gmra.mrb[0].mxu0 %v363
    %v6966 = vpop.f32.mrb[0].mxu0
    %v6967 = vadd.f32 %v6926, %v6966
    %v6968 = vpop.f32.mrb[0].mxu0
    %v6969 = vadd.f32 %v6928, %v6968
    %v6970 = vpop.f32.mrb[0].mxu0
    %v6971 = vpop.f32.mrb[0].mxu0
    %6972 = vdwg.mxu0
    %6973 = vmatprep.subr.bf16.mxu0 %v4774
    %6974 = vmatpush1.bf16.msra.mxu0 %v4773
    %6975 = vmatprep.subr.bf16.mxu0 %v4782
    %6976 = vmatpush1.bf16.msra.mxu0 %v4781
    %6977 = vmatprep.subr.bf16.mxu0 %v4790
    %6978 = vmatpush1.bf16.msra.mxu0 %v4789
    %6979 = vmatprep.subr.bf16.mxu0 %v4798
    %6980 = vmatpush1.bf16.msra.mxu0 %v4797
    %6981 = vmatprep.subr.bf16.mxu0 %v4806
    %6982 = vmatpush1.bf16.msra.mxu0 %v4805
    %6983 = vmatprep.subr.bf16.mxu0 %v4814
    %6984 = vmatpush1.bf16.msra.mxu0 %v4813
    %6985 = vmatprep.subr.bf16.mxu0 %v4822
    %6986 = vmatpush1.bf16.msra.mxu0 %v4821
    %6987 = vmatprep.subr.bf16.mxu0 %v4830
    %6988 = vmatpush1.bf16.msra.mxu0 %v4829
    %6989 = vmatprep.subr.bf16.mxu0 %v4838
    %6990 = vmatpush1.bf16.msra.mxu0 %v4837
    %6991 = vmatprep.subr.bf16.mxu0 %v4846
    %6992 = vmatpush1.bf16.msra.mxu0 %v4845
    %6993 = vmatprep.subr.bf16.mxu0 %v4854
    %6994 = vmatpush1.bf16.msra.mxu0 %v4853
    %6995 = vmatprep.subr.bf16.mxu0 %v4862
    %6996 = vmatpush1.bf16.msra.mxu0 %v4861
    %6997 = vmatprep.subr.bf16.mxu0 %v4870
    %6998 = vmatpush1.bf16.msra.mxu0 %v4869
    %6999 = vmatprep.subr.bf16.mxu0 %v4878
    %7000 = vmatpush1.bf16.msra.mxu0 %v4877
    %7001 = vmatprep.subr.bf16.mxu0 %v4886
    %7002 = vmatpush1.bf16.msra.mxu0 %v4885
    %7003 = vmatprep.subr.bf16.mxu0 %v4894
    %7004 = vmatpush1.bf16.msra.mxu0 %v4893
    %7005 = vmatprep.mubr.bf16.mxu0 %v366
    %7006 = vmatmul.mubr.bf16.gmra.mrb[0].mxu0 %v365
    %v7007 = vpop.f32.mrb[0].mxu0
    %v7008 = vadd.f32 %v6967, %v7007
    %v7009 = vpop.f32.mrb[0].mxu0
    %v7010 = vadd.f32 %v6969, %v7009
    %v7011 = vpop.f32.mrb[0].mxu0
    %v7012 = vpop.f32.mrb[0].mxu0
    %7013 = vdwg.mxu0
    %7014 = vmatprep.subr.bf16.mxu0 %v4902
    %7015 = vmatpush1.bf16.msra.mxu0 %v4901
    %7016 = vmatprep.subr.bf16.mxu0 %v4910
    %7017 = vmatpush1.bf16.msra.mxu0 %v4909
    %7018 = vmatprep.subr.bf16.mxu0 %v4918
    %7019 = vmatpush1.bf16.msra.mxu0 %v4917
    %7020 = vmatprep.subr.bf16.mxu0 %v4926
    %7021 = vmatpush1.bf16.msra.mxu0 %v4925
    %7022 = vmatprep.subr.bf16.mxu0 %v4934
    %7023 = vmatpush1.bf16.msra.mxu0 %v4933
    %7024 = vmatprep.subr.bf16.mxu0 %v4942
    %7025 = vmatpush1.bf16.msra.mxu0 %v4941
    %7026 = vmatprep.subr.bf16.mxu0 %v4950
    %7027 = vmatpush1.bf16.msra.mxu0 %v4949
    %7028 = vmatprep.subr.bf16.mxu0 %v4958
    %7029 = vmatpush1.bf16.msra.mxu0 %v4957
    %7030 = vmatprep.subr.bf16.mxu0 %v4966
    %7031 = vmatpush1.bf16.msra.mxu0 %v4965
    %7032 = vmatprep.subr.bf16.mxu0 %v4974
    %7033 = vmatpush1.bf16.msra.mxu0 %v4973
    %7034 = vmatprep.subr.bf16.mxu0 %v4982
    %7035 = vmatpush1.bf16.msra.mxu0 %v4981
    %7036 = vmatprep.subr.bf16.mxu0 %v4990
    %7037 = vmatpush1.bf16.msra.mxu0 %v4989
    %7038 = vmatprep.subr.bf16.mxu0 %v4998
    %7039 = vmatpush1.bf16.msra.mxu0 %v4997
    %7040 = vmatprep.subr.bf16.mxu0 %v5006
    %7041 = vmatpush1.bf16.msra.mxu0 %v5005
    %7042 = vmatprep.subr.bf16.mxu0 %v5014
    %7043 = vmatpush1.bf16.msra.mxu0 %v5013
    %7044 = vmatprep.subr.bf16.mxu0 %v5022
    %7045 = vmatpush1.bf16.msra.mxu0 %v5021
    %7046 = vmatprep.mubr.bf16.mxu0 %v368
    %7047 = vmatmul.mubr.bf16.gmra.mrb[0].mxu0 %v367
    %v7048 = vpop.f32.mrb[0].mxu0
    %v7049 = vadd.f32 %v7008, %v7048
    %v7050 = vpop.f32.mrb[0].mxu0
    %v7051 = vadd.f32 %v7010, %v7050
    %v7052 = vpop.f32.mrb[0].mxu0
    %v7053 = vpop.f32.mrb[0].mxu0
    %7054 = vdwg.mxu0
    %7055 = vmatprep.subr.bf16.mxu0 %v5030
    %7056 = vmatpush1.bf16.msra.mxu0 %v5029
    %7057 = vmatprep.subr.bf16.mxu0 %v5038
    %7058 = vmatpush1.bf16.msra.mxu0 %v5037
    %7059 = vmatprep.subr.bf16.mxu0 %v5046
    %7060 = vmatpush1.bf16.msra.mxu0 %v5045
    %7061 = vmatprep.subr.bf16.mxu0 %v5054
    %7062 = vmatpush1.bf16.msra.mxu0 %v5053
    %7063 = vmatprep.subr.bf16.mxu0 %v5062
    %7064 = vmatpush1.bf16.msra.mxu0 %v5061
    %7065 = vmatprep.subr.bf16.mxu0 %v5070
    %7066 = vmatpush1.bf16.msra.mxu0 %v5069
    %7067 = vmatprep.subr.bf16.mxu0 %v5078
    %7068 = vmatpush1.bf16.msra.mxu0 %v5077
    %7069 = vmatprep.subr.bf16.mxu0 %v5086
    %7070 = vmatpush1.bf16.msra.mxu0 %v5085
    %7071 = vmatprep.subr.bf16.mxu0 %v5094
    %7072 = vmatpush1.bf16.msra.mxu0 %v5093
    %7073 = vmatprep.subr.bf16.mxu0 %v5102
    %7074 = vmatpush1.bf16.msra.mxu0 %v5101
    %7075 = vmatprep.subr.bf16.mxu0 %v5110
    %7076 = vmatpush1.bf16.msra.mxu0 %v5109
    %7077 = vmatprep.subr.bf16.mxu0 %v5118
    %7078 = vmatpush1.bf16.msra.mxu0 %v5117
    %7079 = vmatprep.subr.bf16.mxu0 %v5126
    %7080 = vmatpush1.bf16.msra.mxu0 %v5125
    %7081 = vmatprep.subr.bf16.mxu0 %v5134
    %7082 = vmatpush1.bf16.msra.mxu0 %v5133
    %7083 = vmatprep.subr.bf16.mxu0 %v5142
    %7084 = vmatpush1.bf16.msra.mxu0 %v5141
    %7085 = vmatprep.subr.bf16.mxu0 %v5150
    %7086 = vmatpush1.bf16.msra.mxu0 %v5149
    %7087 = vmatprep.mubr.bf16.mxu0 %v370
    %7088 = vmatmul.mubr.bf16.gmra.mrb[0].mxu0 %v369
    %v7089 = vpop.f32.mrb[0].mxu0
    %v7090 = vadd.f32 %v7049, %v7089
    %v7091 = vpop.f32.mrb[0].mxu0
    %v7092 = vadd.f32 %v7051, %v7091
    %v7093 = vpop.f32.mrb[0].mxu0
    %v7094 = vpop.f32.mrb[0].mxu0
    %7095 = vdwg.mxu0
    %7096 = vmatprep.subr.bf16.mxu0 %v5158
    %7097 = vmatpush1.bf16.msra.mxu0 %v5157
    %7098 = vmatprep.subr.bf16.mxu0 %v5166
    %7099 = vmatpush1.bf16.msra.mxu0 %v5165
    %7100 = vmatprep.subr.bf16.mxu0 %v5174
    %7101 = vmatpush1.bf16.msra.mxu0 %v5173
    %7102 = vmatprep.subr.bf16.mxu0 %v5182
    %7103 = vmatpush1.bf16.msra.mxu0 %v5181
    %7104 = vmatprep.subr.bf16.mxu0 %v5190
    %7105 = vmatpush1.bf16.msra.mxu0 %v5189
    %7106 = vmatprep.subr.bf16.mxu0 %v5198
    %7107 = vmatpush1.bf16.msra.mxu0 %v5197
    %7108 = vmatprep.subr.bf16.mxu0 %v5206
    %7109 = vmatpush1.bf16.msra.mxu0 %v5205
    %7110 = vmatprep.subr.bf16.mxu0 %v5214
    %7111 = vmatpush1.bf16.msra.mxu0 %v5213
    %7112 = vmatprep.subr.bf16.mxu0 %v5222
    %7113 = vmatpush1.bf16.msra.mxu0 %v5221
    %7114 = vmatprep.subr.bf16.mxu0 %v5230
    %7115 = vmatpush1.bf16.msra.mxu0 %v5229
    %7116 = vmatprep.subr.bf16.mxu0 %v5238
    %7117 = vmatpush1.bf16.msra.mxu0 %v5237
    %7118 = vmatprep.subr.bf16.mxu0 %v5246
    %7119 = vmatpush1.bf16.msra.mxu0 %v5245
    %7120 = vmatprep.subr.bf16.mxu0 %v5254
    %7121 = vmatpush1.bf16.msra.mxu0 %v5253
    %7122 = vmatprep.subr.bf16.mxu0 %v5262
    %7123 = vmatpush1.bf16.msra.mxu0 %v5261
    %7124 = vmatprep.subr.bf16.mxu0 %v5270
    %7125 = vmatpush1.bf16.msra.mxu0 %v5269
    %7126 = vmatprep.subr.bf16.mxu0 %v5278
    %7127 = vmatpush1.bf16.msra.mxu0 %v5277
    %7128 = vmatprep.mubr.bf16.mxu0 %v372
    %7129 = vmatmul.mubr.bf16.gmra.mrb[0].mxu0 %v371
    %v7130 = vpop.f32.mrb[0].mxu0
    %v7131 = vadd.f32 %v7090, %v7130
    %v7132 = vpop.f32.mrb[0].mxu0
    %v7133 = vadd.f32 %v7092, %v7132
    %v7134 = vpop.f32.mrb[0].mxu0
    %v7135 = vpop.f32.mrb[0].mxu0
    %7136 = vdwg.mxu0
    %7137 = vmatprep.subr.bf16.mxu0 %v5286
    %7138 = vmatpush1.bf16.msra.mxu0 %v5285
    %7139 = vmatprep.subr.bf16.mxu0 %v5294
    %7140 = vmatpush1.bf16.msra.mxu0 %v5293
    %7141 = vmatprep.subr.bf16.mxu0 %v5302
    %7142 = vmatpush1.bf16.msra.mxu0 %v5301
    %7143 = vmatprep.subr.bf16.mxu0 %v5310
    %7144 = vmatpush1.bf16.msra.mxu0 %v5309
    %7145 = vmatprep.subr.bf16.mxu0 %v5318
    %7146 = vmatpush1.bf16.msra.mxu0 %v5317
    %7147 = vmatprep.subr.bf16.mxu0 %v5326
    %7148 = vmatpush1.bf16.msra.mxu0 %v5325
    %7149 = vmatprep.subr.bf16.mxu0 %v5334
    %7150 = vmatpush1.bf16.msra.mxu0 %v5333
    %7151 = vmatprep.subr.bf16.mxu0 %v5342
    %7152 = vmatpush1.bf16.msra.mxu0 %v5341
    %7153 = vmatprep.subr.bf16.mxu0 %v5350
    %7154 = vmatpush1.bf16.msra.mxu0 %v5349
    %7155 = vmatprep.subr.bf16.mxu0 %v5358
    %7156 = vmatpush1.bf16.msra.mxu0 %v5357
    %7157 = vmatprep.subr.bf16.mxu0 %v5366
    %7158 = vmatpush1.bf16.msra.mxu0 %v5365
    %7159 = vmatprep.subr.bf16.mxu0 %v5374
    %7160 = vmatpush1.bf16.msra.mxu0 %v5373
    %7161 = vmatprep.subr.bf16.mxu0 %v5382
    %7162 = vmatpush1.bf16.msra.mxu0 %v5381
    %7163 = vmatprep.subr.bf16.mxu0 %v5390
    %7164 = vmatpush1.bf16.msra.mxu0 %v5389
    %7165 = vmatprep.subr.bf16.mxu0 %v5398
    %7166 = vmatpush1.bf16.msra.mxu0 %v5397
    %7167 = vmatprep.subr.bf16.mxu0 %v5406
    %7168 = vmatpush1.bf16.msra.mxu0 %v5405
    %7169 = vmatprep.mubr.bf16.mxu0 %v374
    %7170 = vmatmul.mubr.bf16.gmra.mrb[0].mxu0 %v373
    %v7171 = vpop.f32.mrb[0].mxu0
    %v7172 = vadd.f32 %v7131, %v7171
    %v7173 = vpop.f32.mrb[0].mxu0
    %v7174 = vadd.f32 %v7133, %v7173
    %v7175 = vpop.f32.mrb[0].mxu0
    %v7176 = vpop.f32.mrb[0].mxu0
    %7177 = vdwg.mxu0
    %7178 = vmatprep.subr.bf16.mxu0 %v5414
    %7179 = vmatpush1.bf16.msra.mxu0 %v5413
    %7180 = vmatprep.subr.bf16.mxu0 %v5422
    %7181 = vmatpush1.bf16.msra.mxu0 %v5421
    %7182 = vmatprep.subr.bf16.mxu0 %v5430
    %7183 = vmatpush1.bf16.msra.mxu0 %v5429
    %7184 = vmatprep.subr.bf16.mxu0 %v5438
    %7185 = vmatpush1.bf16.msra.mxu0 %v5437
    %7186 = vmatprep.subr.bf16.mxu0 %v5446
    %7187 = vmatpush1.bf16.msra.mxu0 %v5445
    %7188 = vmatprep.subr.bf16.mxu0 %v5454
    %7189 = vmatpush1.bf16.msra.mxu0 %v5453
    %7190 = vmatprep.subr.bf16.mxu0 %v5462
    %7191 = vmatpush1.bf16.msra.mxu0 %v5461
    %7192 = vmatprep.subr.bf16.mxu0 %v5470
    %7193 = vmatpush1.bf16.msra.mxu0 %v5469
    %7194 = vmatprep.subr.bf16.mxu0 %v5478
    %7195 = vmatpush1.bf16.msra.mxu0 %v5477
    %7196 = vmatprep.subr.bf16.mxu0 %v5486
    %7197 = vmatpush1.bf16.msra.mxu0 %v5485
    %7198 = vmatprep.subr.bf16.mxu0 %v5494
    %7199 = vmatpush1.bf16.msra.mxu0 %v5493
    %7200 = vmatprep.subr.bf16.mxu0 %v5502
    %7201 = vmatpush1.bf16.msra.mxu0 %v5501
    %7202 = vmatprep.subr.bf16.mxu0 %v5510
    %7203 = vmatpush1.bf16.msra.mxu0 %v5509
    %7204 = vmatprep.subr.bf16.mxu0 %v5518
    %7205 = vmatpush1.bf16.msra.mxu0 %v5517
    %7206 = vmatprep.subr.bf16.mxu0 %v5526
    %7207 = vmatpush1.bf16.msra.mxu0 %v5525
    %7208 = vmatprep.subr.bf16.mxu0 %v5534
    %7209 = vmatpush1.bf16.msra.mxu0 %v5533
    %7210 = vmatprep.mubr.bf16.mxu0 %v376
    %7211 = vmatmul.mubr.bf16.gmra.mrb[0].mxu0 %v375
    %v7212 = vpop.f32.mrb[0].mxu0
    %v7213 = vadd.f32 %v7172, %v7212
    %v7214 = vpop.f32.mrb[0].mxu0
    %v7215 = vadd.f32 %v7174, %v7214
    %v7216 = vpop.f32.mrb[0].mxu0
    %v7217 = vpop.f32.mrb[0].mxu0
    %7218 = vdwg.mxu0
    %7219 = vmatprep.subr.bf16.mxu0 %v4520
    %7220 = vmatpush1.bf16.msra.mxu0 %v4519
    %7221 = vmatprep.subr.bf16.mxu0 %v4528
    %7222 = vmatpush1.bf16.msra.mxu0 %v4527
    %7223 = vmatprep.subr.bf16.mxu0 %v4536
    %7224 = vmatpush1.bf16.msra.mxu0 %v4535
    %7225 = vmatprep.subr.bf16.mxu0 %v4544
    %7226 = vmatpush1.bf16.msra.mxu0 %v4543
    %7227 = vmatprep.subr.bf16.mxu0 %v4552
    %7228 = vmatpush1.bf16.msra.mxu0 %v4551
    %7229 = vmatprep.subr.bf16.mxu0 %v4560
    %7230 = vmatpush1.bf16.msra.mxu0 %v4559
    %7231 = vmatprep.subr.bf16.mxu0 %v4568
    %7232 = vmatpush1.bf16.msra.mxu0 %v4567
    %7233 = vmatprep.subr.bf16.mxu0 %v4576
    %7234 = vmatpush1.bf16.msra.mxu0 %v4575
    %7235 = vmatprep.subr.bf16.mxu0 %v4584
    %7236 = vmatpush1.bf16.msra.mxu0 %v4583
    %7237 = vmatprep.subr.bf16.mxu0 %v4592
    %7238 = vmatpush1.bf16.msra.mxu0 %v4591
    %7239 = vmatprep.subr.bf16.mxu0 %v4600
    %7240 = vmatpush1.bf16.msra.mxu0 %v4599
    %7241 = vmatprep.subr.bf16.mxu0 %v4608
    %7242 = vmatpush1.bf16.msra.mxu0 %v4607
    %7243 = vmatprep.subr.bf16.mxu0 %v4616
    %7244 = vmatpush1.bf16.msra.mxu0 %v4615
    %7245 = vmatprep.subr.bf16.mxu0 %v4624
    %7246 = vmatpush1.bf16.msra.mxu0 %v4623
    %7247 = vmatprep.subr.bf16.mxu0 %v4632
    %7248 = vmatpush1.bf16.msra.mxu0 %v4631
    %7249 = vmatprep.subr.bf16.mxu0 %v4640
    %7250 = vmatpush1.bf16.msra.mxu0 %v4639
    %7251 = vmatprep.mubr.bf16.mxu0 %v362
    %7252 = vmatmul.mubr.bf16.gmra.mrb[0].mxu0 %v361
    %v7253 = vpop.f32.mrb[0].mxu0
    %v7254 = vadd.f32 %v1422, %v7253
    %v7255 = vpop.f32.mrb[0].mxu0
    %v7256 = vadd.f32 %v1426, %v7255
    %v7257 = vpop.f32.mrb[0].mxu0
    %v7258 = vpop.f32.mrb[0].mxu0
    %7259 = vdwg.mxu0
    %7260 = vmatprep.subr.bf16.mxu0 %v4648
    %7261 = vmatpush1.bf16.msra.mxu0 %v4647
    %7262 = vmatprep.subr.bf16.mxu0 %v4656
    %7263 = vmatpush1.bf16.msra.mxu0 %v4655
    %7264 = vmatprep.subr.bf16.mxu0 %v4664
    %7265 = vmatpush1.bf16.msra.mxu0 %v4663
    %7266 = vmatprep.subr.bf16.mxu0 %v4672
    %7267 = vmatpush1.bf16.msra.mxu0 %v4671
    %7268 = vmatprep.subr.bf16.mxu0 %v4680
    %7269 = vmatpush1.bf16.msra.mxu0 %v4679
    %7270 = vmatprep.subr.bf16.mxu0 %v4688
    %7271 = vmatpush1.bf16.msra.mxu0 %v4687
    %7272 = vmatprep.subr.bf16.mxu0 %v4696
    %7273 = vmatpush1.bf16.msra.mxu0 %v4695
    %7274 = vmatprep.subr.bf16.mxu0 %v4704
    %7275 = vmatpush1.bf16.msra.mxu0 %v4703
    %7276 = vmatprep.subr.bf16.mxu0 %v4712
    %7277 = vmatpush1.bf16.msra.mxu0 %v4711
    %7278 = vmatprep.subr.bf16.mxu0 %v4720
    %7279 = vmatpush1.bf16.msra.mxu0 %v4719
    %7280 = vmatprep.subr.bf16.mxu0 %v4728
    %7281 = vmatpush1.bf16.msra.mxu0 %v4727
    %7282 = vmatprep.subr.bf16.mxu0 %v4736
    %7283 = vmatpush1.bf16.msra.mxu0 %v4735
    %7284 = vmatprep.subr.bf16.mxu0 %v4744
    %7285 = vmatpush1.bf16.msra.mxu0 %v4743
    %7286 = vmatprep.subr.bf16.mxu0 %v4752
    %7287 = vmatpush1.bf16.msra.mxu0 %v4751
    %7288 = vmatprep.subr.bf16.mxu0 %v4760
    %7289 = vmatpush1.bf16.msra.mxu0 %v4759
    %7290 = vmatprep.subr.bf16.mxu0 %v4768
    %7291 = vmatpush1.bf16.msra.mxu0 %v4767
    %7292 = vmatprep.mubr.bf16.mxu0 %v364
    %7293 = vmatmul.mubr.bf16.gmra.mrb[0].mxu0 %v363
    %v7294 = vpop.f32.mrb[0].mxu0
    %v7295 = vadd.f32 %v7254, %v7294
    %v7296 = vpop.f32.mrb[0].mxu0
    %v7297 = vadd.f32 %v7256, %v7296
    %v7298 = vpop.f32.mrb[0].mxu0
    %v7299 = vpop.f32.mrb[0].mxu0
    %7300 = vdwg.mxu0
    %7301 = vmatprep.subr.bf16.mxu0 %v4776
    %7302 = vmatpush1.bf16.msra.mxu0 %v4775
    %7303 = vmatprep.subr.bf16.mxu0 %v4784
    %7304 = vmatpush1.bf16.msra.mxu0 %v4783
    %7305 = vmatprep.subr.bf16.mxu0 %v4792
    %7306 = vmatpush1.bf16.msra.mxu0 %v4791
    %7307 = vmatprep.subr.bf16.mxu0 %v4800
    %7308 = vmatpush1.bf16.msra.mxu0 %v4799
    %7309 = vmatprep.subr.bf16.mxu0 %v4808
    %7310 = vmatpush1.bf16.msra.mxu0 %v4807
    %7311 = vmatprep.subr.bf16.mxu0 %v4816
    %7312 = vmatpush1.bf16.msra.mxu0 %v4815
    %7313 = vmatprep.subr.bf16.mxu0 %v4824
    %7314 = vmatpush1.bf16.msra.mxu0 %v4823
    %7315 = vmatprep.subr.bf16.mxu0 %v4832
    %7316 = vmatpush1.bf16.msra.mxu0 %v4831
    %7317 = vmatprep.subr.bf16.mxu0 %v4840
    %7318 = vmatpush1.bf16.msra.mxu0 %v4839
    %7319 = vmatprep.subr.bf16.mxu0 %v4848
    %7320 = vmatpush1.bf16.msra.mxu0 %v4847
    %7321 = vmatprep.subr.bf16.mxu0 %v4856
    %7322 = vmatpush1.bf16.msra.mxu0 %v4855
    %7323 = vmatprep.subr.bf16.mxu0 %v4864
    %7324 = vmatpush1.bf16.msra.mxu0 %v4863
    %7325 = vmatprep.subr.bf16.mxu0 %v4872
    %7326 = vmatpush1.bf16.msra.mxu0 %v4871
    %7327 = vmatprep.subr.bf16.mxu0 %v4880
    %7328 = vmatpush1.bf16.msra.mxu0 %v4879
    %7329 = vmatprep.subr.bf16.mxu0 %v4888
    %7330 = vmatpush1.bf16.msra.mxu0 %v4887
    %7331 = vmatprep.subr.bf16.mxu0 %v4896
    %7332 = vmatpush1.bf16.msra.mxu0 %v4895
    %7333 = vmatprep.mubr.bf16.mxu0 %v366
    %7334 = vmatmul.mubr.bf16.gmra.mrb[0].mxu0 %v365
    %v7335 = vpop.f32.mrb[0].mxu0
    %v7336 = vadd.f32 %v7295, %v7335
    %v7337 = vpop.f32.mrb[0].mxu0
    %v7338 = vadd.f32 %v7297, %v7337
    %v7339 = vpop.f32.mrb[0].mxu0
    %v7340 = vpop.f32.mrb[0].mxu0
    %7341 = vdwg.mxu0
    %7342 = vmatprep.subr.bf16.mxu0 %v4904
    %7343 = vmatpush1.bf16.msra.mxu0 %v4903
    %7344 = vmatprep.subr.bf16.mxu0 %v4912
    %7345 = vmatpush1.bf16.msra.mxu0 %v4911
    %7346 = vmatprep.subr.bf16.mxu0 %v4920
    %7347 = vmatpush1.bf16.msra.mxu0 %v4919
    %7348 = vmatprep.subr.bf16.mxu0 %v4928
    %7349 = vmatpush1.bf16.msra.mxu0 %v4927
    %7350 = vmatprep.subr.bf16.mxu0 %v4936
    %7351 = vmatpush1.bf16.msra.mxu0 %v4935
    %7352 = vmatprep.subr.bf16.mxu0 %v4944
    %7353 = vmatpush1.bf16.msra.mxu0 %v4943
    %7354 = vmatprep.subr.bf16.mxu0 %v4952
    %7355 = vmatpush1.bf16.msra.mxu0 %v4951
    %7356 = vmatprep.subr.bf16.mxu0 %v4960
    %7357 = vmatpush1.bf16.msra.mxu0 %v4959
    %7358 = vmatprep.subr.bf16.mxu0 %v4968
    %7359 = vmatpush1.bf16.msra.mxu0 %v4967
    %7360 = vmatprep.subr.bf16.mxu0 %v4976
    %7361 = vmatpush1.bf16.msra.mxu0 %v4975
    %7362 = vmatprep.subr.bf16.mxu0 %v4984
    %7363 = vmatpush1.bf16.msra.mxu0 %v4983
    %7364 = vmatprep.subr.bf16.mxu0 %v4992
    %7365 = vmatpush1.bf16.msra.mxu0 %v4991
    %7366 = vmatprep.subr.bf16.mxu0 %v5000
    %7367 = vmatpush1.bf16.msra.mxu0 %v4999
    %7368 = vmatprep.subr.bf16.mxu0 %v5008
    %7369 = vmatpush1.bf16.msra.mxu0 %v5007
    %7370 = vmatprep.subr.bf16.mxu0 %v5016
    %7371 = vmatpush1.bf16.msra.mxu0 %v5015
    %7372 = vmatprep.subr.bf16.mxu0 %v5024
    %7373 = vmatpush1.bf16.msra.mxu0 %v5023
    %7374 = vmatprep.mubr.bf16.mxu0 %v368
    %7375 = vmatmul.mubr.bf16.gmra.mrb[0].mxu0 %v367
    %v7376 = vpop.f32.mrb[0].mxu0
    %v7377 = vadd.f32 %v7336, %v7376
    %v7378 = vpop.f32.mrb[0].mxu0
    %v7379 = vadd.f32 %v7338, %v7378
    %v7380 = vpop.f32.mrb[0].mxu0
    %v7381 = vpop.f32.mrb[0].mxu0
    %7382 = vdwg.mxu0
    %7383 = vmatprep.subr.bf16.mxu0 %v5032
    %7384 = vmatpush1.bf16.msra.mxu0 %v5031
    %7385 = vmatprep.subr.bf16.mxu0 %v5040
    %7386 = vmatpush1.bf16.msra.mxu0 %v5039
    %7387 = vmatprep.subr.bf16.mxu0 %v5048
    %7388 = vmatpush1.bf16.msra.mxu0 %v5047
    %7389 = vmatprep.subr.bf16.mxu0 %v5056
    %7390 = vmatpush1.bf16.msra.mxu0 %v5055
    %7391 = vmatprep.subr.bf16.mxu0 %v5064
    %7392 = vmatpush1.bf16.msra.mxu0 %v5063
    %7393 = vmatprep.subr.bf16.mxu0 %v5072
    %7394 = vmatpush1.bf16.msra.mxu0 %v5071
    %7395 = vmatprep.subr.bf16.mxu0 %v5080
    %7396 = vmatpush1.bf16.msra.mxu0 %v5079
    %7397 = vmatprep.subr.bf16.mxu0 %v5088
    %7398 = vmatpush1.bf16.msra.mxu0 %v5087
    %7399 = vmatprep.subr.bf16.mxu0 %v5096
    %7400 = vmatpush1.bf16.msra.mxu0 %v5095
    %7401 = vmatprep.subr.bf16.mxu0 %v5104
    %7402 = vmatpush1.bf16.msra.mxu0 %v5103
    %7403 = vmatprep.subr.bf16.mxu0 %v5112
    %7404 = vmatpush1.bf16.msra.mxu0 %v5111
    %7405 = vmatprep.subr.bf16.mxu0 %v5120
    %7406 = vmatpush1.bf16.msra.mxu0 %v5119
    %7407 = vmatprep.subr.bf16.mxu0 %v5128
    %7408 = vmatpush1.bf16.msra.mxu0 %v5127
    %7409 = vmatprep.subr.bf16.mxu0 %v5136
    %7410 = vmatpush1.bf16.msra.mxu0 %v5135
    %7411 = vmatprep.subr.bf16.mxu0 %v5144
    %7412 = vmatpush1.bf16.msra.mxu0 %v5143
    %7413 = vmatprep.subr.bf16.mxu0 %v5152
    %7414 = vmatpush1.bf16.msra.mxu0 %v5151
    %7415 = vmatprep.mubr.bf16.mxu0 %v370
    %7416 = vmatmul.mubr.bf16.gmra.mrb[0].mxu0 %v369
    %v7417 = vpop.f32.mrb[0].mxu0
    %v7418 = vadd.f32 %v7377, %v7417
    %v7419 = vpop.f32.mrb[0].mxu0
    %v7420 = vadd.f32 %v7379, %v7419
    %v7421 = vpop.f32.mrb[0].mxu0
    %v7422 = vpop.f32.mrb[0].mxu0
    %7423 = vdwg.mxu0
    %7424 = vmatprep.subr.bf16.mxu0 %v5160
    %7425 = vmatpush1.bf16.msra.mxu0 %v5159
    %7426 = vmatprep.subr.bf16.mxu0 %v5168
    %7427 = vmatpush1.bf16.msra.mxu0 %v5167
    %7428 = vmatprep.subr.bf16.mxu0 %v5176
    %7429 = vmatpush1.bf16.msra.mxu0 %v5175
    %7430 = vmatprep.subr.bf16.mxu0 %v5184
    %7431 = vmatpush1.bf16.msra.mxu0 %v5183
    %7432 = vmatprep.subr.bf16.mxu0 %v5192
    %7433 = vmatpush1.bf16.msra.mxu0 %v5191
    %7434 = vmatprep.subr.bf16.mxu0 %v5200
    %7435 = vmatpush1.bf16.msra.mxu0 %v5199
    %7436 = vmatprep.subr.bf16.mxu0 %v5208
    %7437 = vmatpush1.bf16.msra.mxu0 %v5207
    %7438 = vmatprep.subr.bf16.mxu0 %v5216
    %7439 = vmatpush1.bf16.msra.mxu0 %v5215
    %7440 = vmatprep.subr.bf16.mxu0 %v5224
    %7441 = vmatpush1.bf16.msra.mxu0 %v5223
    %7442 = vmatprep.subr.bf16.mxu0 %v5232
    %7443 = vmatpush1.bf16.msra.mxu0 %v5231
    %7444 = vmatprep.subr.bf16.mxu0 %v5240
    %7445 = vmatpush1.bf16.msra.mxu0 %v5239
    %7446 = vmatprep.subr.bf16.mxu0 %v5248
    %7447 = vmatpush1.bf16.msra.mxu0 %v5247
    %7448 = vmatprep.subr.bf16.mxu0 %v5256
    %7449 = vmatpush1.bf16.msra.mxu0 %v5255
    %7450 = vmatprep.subr.bf16.mxu0 %v5264
    %7451 = vmatpush1.bf16.msra.mxu0 %v5263
    %7452 = vmatprep.subr.bf16.mxu0 %v5272
    %7453 = vmatpush1.bf16.msra.mxu0 %v5271
    %7454 = vmatprep.subr.bf16.mxu0 %v5280
    %7455 = vmatpush1.bf16.msra.mxu0 %v5279
    %7456 = vmatprep.mubr.bf16.mxu0 %v372
    %7457 = vmatmul.mubr.bf16.gmra.mrb[0].mxu0 %v371
    %v7458 = vpop.f32.mrb[0].mxu0
    %v7459 = vadd.f32 %v7418, %v7458
    %v7460 = vpop.f32.mrb[0].mxu0
    %v7461 = vadd.f32 %v7420, %v7460
    %v7462 = vpop.f32.mrb[0].mxu0
    %v7463 = vpop.f32.mrb[0].mxu0
    %7464 = vdwg.mxu0
    %7465 = vmatprep.subr.bf16.mxu0 %v5288
    %7466 = vmatpush1.bf16.msra.mxu0 %v5287
    %7467 = vmatprep.subr.bf16.mxu0 %v5296
    %7468 = vmatpush1.bf16.msra.mxu0 %v5295
    %7469 = vmatprep.subr.bf16.mxu0 %v5304
    %7470 = vmatpush1.bf16.msra.mxu0 %v5303
    %7471 = vmatprep.subr.bf16.mxu0 %v5312
    %7472 = vmatpush1.bf16.msra.mxu0 %v5311
    %7473 = vmatprep.subr.bf16.mxu0 %v5320
    %7474 = vmatpush1.bf16.msra.mxu0 %v5319
    %7475 = vmatprep.subr.bf16.mxu0 %v5328
    %7476 = vmatpush1.bf16.msra.mxu0 %v5327
    %7477 = vmatprep.subr.bf16.mxu0 %v5336
    %7478 = vmatpush1.bf16.msra.mxu0 %v5335
    %7479 = vmatprep.subr.bf16.mxu0 %v5344
    %7480 = vmatpush1.bf16.msra.mxu0 %v5343
    %7481 = vmatprep.subr.bf16.mxu0 %v5352
    %7482 = vmatpush1.bf16.msra.mxu0 %v5351
    %7483 = vmatprep.subr.bf16.mxu0 %v5360
    %7484 = vmatpush1.bf16.msra.mxu0 %v5359
    %7485 = vmatprep.subr.bf16.mxu0 %v5368
    %7486 = vmatpush1.bf16.msra.mxu0 %v5367
    %7487 = vmatprep.subr.bf16.mxu0 %v5376
    %7488 = vmatpush1.bf16.msra.mxu0 %v5375
    %7489 = vmatprep.subr.bf16.mxu0 %v5384
    %7490 = vmatpush1.bf16.msra.mxu0 %v5383
    %7491 = vmatprep.subr.bf16.mxu0 %v5392
    %7492 = vmatpush1.bf16.msra.mxu0 %v5391
    %7493 = vmatprep.subr.bf16.mxu0 %v5400
    %7494 = vmatpush1.bf16.msra.mxu0 %v5399
    %7495 = vmatprep.subr.bf16.mxu0 %v5408
    %7496 = vmatpush1.bf16.msra.mxu0 %v5407
    %7497 = vmatprep.mubr.bf16.mxu0 %v374
    %7498 = vmatmul.mubr.bf16.gmra.mrb[0].mxu0 %v373
    %v7499 = vpop.f32.mrb[0].mxu0
    %v7500 = vadd.f32 %v7459, %v7499
    %v7501 = vpop.f32.mrb[0].mxu0
    %v7502 = vadd.f32 %v7461, %v7501
    %v7503 = vpop.f32.mrb[0].mxu0
    %v7504 = vpop.f32.mrb[0].mxu0
    %7505 = vdwg.mxu0
    %7506 = vmatprep.subr.bf16.mxu0 %v5416
    %7507 = vmatpush1.bf16.msra.mxu0 %v5415
    %7508 = vmatprep.subr.bf16.mxu0 %v5424
    %7509 = vmatpush1.bf16.msra.mxu0 %v5423
    %7510 = vmatprep.subr.bf16.mxu0 %v5432
    %7511 = vmatpush1.bf16.msra.mxu0 %v5431
    %7512 = vmatprep.subr.bf16.mxu0 %v5440
    %7513 = vmatpush1.bf16.msra.mxu0 %v5439
    %7514 = vmatprep.subr.bf16.mxu0 %v5448
    %7515 = vmatpush1.bf16.msra.mxu0 %v5447
    %7516 = vmatprep.subr.bf16.mxu0 %v5456
    %7517 = vmatpush1.bf16.msra.mxu0 %v5455
    %7518 = vmatprep.subr.bf16.mxu0 %v5464
    %7519 = vmatpush1.bf16.msra.mxu0 %v5463
    %7520 = vmatprep.subr.bf16.mxu0 %v5472
    %7521 = vmatpush1.bf16.msra.mxu0 %v5471
    %7522 = vmatprep.subr.bf16.mxu0 %v5480
    %7523 = vmatpush1.bf16.msra.mxu0 %v5479
    %7524 = vmatprep.subr.bf16.mxu0 %v5488
    %7525 = vmatpush1.bf16.msra.mxu0 %v5487
    %7526 = vmatprep.subr.bf16.mxu0 %v5496
    %7527 = vmatpush1.bf16.msra.mxu0 %v5495
    %7528 = vmatprep.subr.bf16.mxu0 %v5504
    %7529 = vmatpush1.bf16.msra.mxu0 %v5503
    %7530 = vmatprep.subr.bf16.mxu0 %v5512
    %7531 = vmatpush1.bf16.msra.mxu0 %v5511
    %7532 = vmatprep.subr.bf16.mxu0 %v5520
    %7533 = vmatpush1.bf16.msra.mxu0 %v5519
    %7534 = vmatprep.subr.bf16.mxu0 %v5528
    %7535 = vmatpush1.bf16.msra.mxu0 %v5527
    %7536 = vmatprep.subr.bf16.mxu0 %v5536
    %7537 = vmatpush1.bf16.msra.mxu0 %v5535
    %7538 = vmatprep.mubr.bf16.mxu0 %v376
    %7539 = vmatmul.mubr.bf16.gmra.mrb[0].mxu0 %v375
    %v7540 = vpop.f32.mrb[0].mxu0
    %v7541 = vadd.f32 %v7500, %v7540
    %v7542 = vpop.f32.mrb[0].mxu0
    %v7543 = vadd.f32 %v7502, %v7542
    %v7544 = vpop.f32.mrb[0].mxu0
    %v7545 = vpop.f32.mrb[0].mxu0
    %7546 = vdwg.mxu0
    %7547 = vmatprep.subr.bf16.mxu0 %v4522
    %7548 = vmatpush1.bf16.msra.mxu0 %v4521
    %7549 = vmatprep.subr.bf16.mxu0 %v4530
    %7550 = vmatpush1.bf16.msra.mxu0 %v4529
    %7551 = vmatprep.subr.bf16.mxu0 %v4538
    %7552 = vmatpush1.bf16.msra.mxu0 %v4537
    %7553 = vmatprep.subr.bf16.mxu0 %v4546
    %7554 = vmatpush1.bf16.msra.mxu0 %v4545
    %7555 = vmatprep.subr.bf16.mxu0 %v4554
    %7556 = vmatpush1.bf16.msra.mxu0 %v4553
    %7557 = vmatprep.subr.bf16.mxu0 %v4562
    %7558 = vmatpush1.bf16.msra.mxu0 %v4561
    %7559 = vmatprep.subr.bf16.mxu0 %v4570
    %7560 = vmatpush1.bf16.msra.mxu0 %v4569
    %7561 = vmatprep.subr.bf16.mxu0 %v4578
    %7562 = vmatpush1.bf16.msra.mxu0 %v4577
    %7563 = vmatprep.subr.bf16.mxu0 %v4586
    %7564 = vmatpush1.bf16.msra.mxu0 %v4585
    %7565 = vmatprep.subr.bf16.mxu0 %v4594
    %7566 = vmatpush1.bf16.msra.mxu0 %v4593
    %7567 = vmatprep.subr.bf16.mxu0 %v4602
    %7568 = vmatpush1.bf16.msra.mxu0 %v4601
    %7569 = vmatprep.subr.bf16.mxu0 %v4610
    %7570 = vmatpush1.bf16.msra.mxu0 %v4609
    %7571 = vmatprep.subr.bf16.mxu0 %v4618
    %7572 = vmatpush1.bf16.msra.mxu0 %v4617
    %7573 = vmatprep.subr.bf16.mxu0 %v4626
    %7574 = vmatpush1.bf16.msra.mxu0 %v4625
    %7575 = vmatprep.subr.bf16.mxu0 %v4634
    %7576 = vmatpush1.bf16.msra.mxu0 %v4633
    %7577 = vmatprep.subr.bf16.mxu0 %v4642
    %7578 = vmatpush1.bf16.msra.mxu0 %v4641
    %7579 = vmatprep.mubr.bf16.mxu0 %v362
    %7580 = vmatmul.mubr.bf16.gmra.mrb[0].mxu0 %v361
    %v7581 = vpop.f32.mrb[0].mxu0
    %v7582 = vadd.f32 %v1430, %v7581
    %v7583 = vpop.f32.mrb[0].mxu0
    %v7584 = vadd.f32 %v1434, %v7583
    %v7585 = vpop.f32.mrb[0].mxu0
    %v7586 = vpop.f32.mrb[0].mxu0
    %7587 = vdwg.mxu0
    %7588 = vmatprep.subr.bf16.mxu0 %v4650
    %7589 = vmatpush1.bf16.msra.mxu0 %v4649
    %7590 = vmatprep.subr.bf16.mxu0 %v4658
    %7591 = vmatpush1.bf16.msra.mxu0 %v4657
    %7592 = vmatprep.subr.bf16.mxu0 %v4666
    %7593 = vmatpush1.bf16.msra.mxu0 %v4665
    %7594 = vmatprep.subr.bf16.mxu0 %v4674
    %7595 = vmatpush1.bf16.msra.mxu0 %v4673
    %7596 = vmatprep.subr.bf16.mxu0 %v4682
    %7597 = vmatpush1.bf16.msra.mxu0 %v4681
    %7598 = vmatprep.subr.bf16.mxu0 %v4690
    %7599 = vmatpush1.bf16.msra.mxu0 %v4689
    %7600 = vmatprep.subr.bf16.mxu0 %v4698
    %7601 = vmatpush1.bf16.msra.mxu0 %v4697
    %7602 = vmatprep.subr.bf16.mxu0 %v4706
    %7603 = vmatpush1.bf16.msra.mxu0 %v4705
    %7604 = vmatprep.subr.bf16.mxu0 %v4714
    %7605 = vmatpush1.bf16.msra.mxu0 %v4713
    %7606 = vmatprep.subr.bf16.mxu0 %v4722
    %7607 = vmatpush1.bf16.msra.mxu0 %v4721
    %7608 = vmatprep.subr.bf16.mxu0 %v4730
    %7609 = vmatpush1.bf16.msra.mxu0 %v4729
    %7610 = vmatprep.subr.bf16.mxu0 %v4738
    %7611 = vmatpush1.bf16.msra.mxu0 %v4737
    %7612 = vmatprep.subr.bf16.mxu0 %v4746
    %7613 = vmatpush1.bf16.msra.mxu0 %v4745
    %7614 = vmatprep.subr.bf16.mxu0 %v4754
    %7615 = vmatpush1.bf16.msra.mxu0 %v4753
    %7616 = vmatprep.subr.bf16.mxu0 %v4762
    %7617 = vmatpush1.bf16.msra.mxu0 %v4761
    %7618 = vmatprep.subr.bf16.mxu0 %v4770
    %7619 = vmatpush1.bf16.msra.mxu0 %v4769
    %7620 = vmatprep.mubr.bf16.mxu0 %v364
    %7621 = vmatmul.mubr.bf16.gmra.mrb[0].mxu0 %v363
    %v7622 = vpop.f32.mrb[0].mxu0
    %v7623 = vadd.f32 %v7582, %v7622
    %v7624 = vpop.f32.mrb[0].mxu0
    %v7625 = vadd.f32 %v7584, %v7624
    %v7626 = vpop.f32.mrb[0].mxu0
    %v7627 = vpop.f32.mrb[0].mxu0
    %7628 = vdwg.mxu0
    %7629 = vmatprep.subr.bf16.mxu0 %v4778
    %7630 = vmatpush1.bf16.msra.mxu0 %v4777
    %7631 = vmatprep.subr.bf16.mxu0 %v4786
    %7632 = vmatpush1.bf16.msra.mxu0 %v4785
    %7633 = vmatprep.subr.bf16.mxu0 %v4794
    %7634 = vmatpush1.bf16.msra.mxu0 %v4793
    %7635 = vmatprep.subr.bf16.mxu0 %v4802
    %7636 = vmatpush1.bf16.msra.mxu0 %v4801
    %7637 = vmatprep.subr.bf16.mxu0 %v4810
    %7638 = vmatpush1.bf16.msra.mxu0 %v4809
    %7639 = vmatprep.subr.bf16.mxu0 %v4818
    %7640 = vmatpush1.bf16.msra.mxu0 %v4817
    %7641 = vmatprep.subr.bf16.mxu0 %v4826
    %7642 = vmatpush1.bf16.msra.mxu0 %v4825
    %7643 = vmatprep.subr.bf16.mxu0 %v4834
    %7644 = vmatpush1.bf16.msra.mxu0 %v4833
    %7645 = vmatprep.subr.bf16.mxu0 %v4842
    %7646 = vmatpush1.bf16.msra.mxu0 %v4841
    %7647 = vmatprep.subr.bf16.mxu0 %v4850
    %7648 = vmatpush1.bf16.msra.mxu0 %v4849
    %7649 = vmatprep.subr.bf16.mxu0 %v4858
    %7650 = vmatpush1.bf16.msra.mxu0 %v4857
    %7651 = vmatprep.subr.bf16.mxu0 %v4866
    %7652 = vmatpush1.bf16.msra.mxu0 %v4865
    %7653 = vmatprep.subr.bf16.mxu0 %v4874
    %7654 = vmatpush1.bf16.msra.mxu0 %v4873
    %7655 = vmatprep.subr.bf16.mxu0 %v4882
    %7656 = vmatpush1.bf16.msra.mxu0 %v4881
    %7657 = vmatprep.subr.bf16.mxu0 %v4890
    %7658 = vmatpush1.bf16.msra.mxu0 %v4889
    %7659 = vmatprep.subr.bf16.mxu0 %v4898
    %7660 = vmatpush1.bf16.msra.mxu0 %v4897
    %7661 = vmatprep.mubr.bf16.mxu0 %v366
    %7662 = vmatmul.mubr.bf16.gmra.mrb[0].mxu0 %v365
    %v7663 = vpop.f32.mrb[0].mxu0
    %v7664 = vadd.f32 %v7623, %v7663
    %v7665 = vpop.f32.mrb[0].mxu0
    %v7666 = vadd.f32 %v7625, %v7665
    %v7667 = vpop.f32.mrb[0].mxu0
    %v7668 = vpop.f32.mrb[0].mxu0
    %7669 = vdwg.mxu0
    %7670 = vmatprep.subr.bf16.mxu0 %v4906
    %7671 = vmatpush1.bf16.msra.mxu0 %v4905
    %7672 = vmatprep.subr.bf16.mxu0 %v4914
    %7673 = vmatpush1.bf16.msra.mxu0 %v4913
    %7674 = vmatprep.subr.bf16.mxu0 %v4922
    %7675 = vmatpush1.bf16.msra.mxu0 %v4921
    %7676 = vmatprep.subr.bf16.mxu0 %v4930
    %7677 = vmatpush1.bf16.msra.mxu0 %v4929
    %7678 = vmatprep.subr.bf16.mxu0 %v4938
    %7679 = vmatpush1.bf16.msra.mxu0 %v4937
    %7680 = vmatprep.subr.bf16.mxu0 %v4946
    %7681 = vmatpush1.bf16.msra.mxu0 %v4945
    %7682 = vmatprep.subr.bf16.mxu0 %v4954
    %7683 = vmatpush1.bf16.msra.mxu0 %v4953
    %7684 = vmatprep.subr.bf16.mxu0 %v4962
    %7685 = vmatpush1.bf16.msra.mxu0 %v4961
    %7686 = vmatprep.subr.bf16.mxu0 %v4970
    %7687 = vmatpush1.bf16.msra.mxu0 %v4969
    %7688 = vmatprep.subr.bf16.mxu0 %v4978
    %7689 = vmatpush1.bf16.msra.mxu0 %v4977
    %7690 = vmatprep.subr.bf16.mxu0 %v4986
    %7691 = vmatpush1.bf16.msra.mxu0 %v4985
    %7692 = vmatprep.subr.bf16.mxu0 %v4994
    %7693 = vmatpush1.bf16.msra.mxu0 %v4993
    %7694 = vmatprep.subr.bf16.mxu0 %v5002
    %7695 = vmatpush1.bf16.msra.mxu0 %v5001
    %7696 = vmatprep.subr.bf16.mxu0 %v5010
    %7697 = vmatpush1.bf16.msra.mxu0 %v5009
    %7698 = vmatprep.subr.bf16.mxu0 %v5018
    %7699 = vmatpush1.bf16.msra.mxu0 %v5017
    %7700 = vmatprep.subr.bf16.mxu0 %v5026
    %7701 = vmatpush1.bf16.msra.mxu0 %v5025
    %7702 = vmatprep.mubr.bf16.mxu0 %v368
    %7703 = vmatmul.mubr.bf16.gmra.mrb[0].mxu0 %v367
    %v7704 = vpop.f32.mrb[0].mxu0
    %v7705 = vadd.f32 %v7664, %v7704
    %v7706 = vpop.f32.mrb[0].mxu0
    %v7707 = vadd.f32 %v7666, %v7706
    %v7708 = vpop.f32.mrb[0].mxu0
    %v7709 = vpop.f32.mrb[0].mxu0
    %7710 = vdwg.mxu0
    %7711 = vmatprep.subr.bf16.mxu0 %v5034
    %7712 = vmatpush1.bf16.msra.mxu0 %v5033
    %7713 = vmatprep.subr.bf16.mxu0 %v5042
    %7714 = vmatpush1.bf16.msra.mxu0 %v5041
    %7715 = vmatprep.subr.bf16.mxu0 %v5050
    %7716 = vmatpush1.bf16.msra.mxu0 %v5049
    %7717 = vmatprep.subr.bf16.mxu0 %v5058
    %7718 = vmatpush1.bf16.msra.mxu0 %v5057
    %7719 = vmatprep.subr.bf16.mxu0 %v5066
    %7720 = vmatpush1.bf16.msra.mxu0 %v5065
    %7721 = vmatprep.subr.bf16.mxu0 %v5074
    %7722 = vmatpush1.bf16.msra.mxu0 %v5073
    %7723 = vmatprep.subr.bf16.mxu0 %v5082
    %7724 = vmatpush1.bf16.msra.mxu0 %v5081
    %7725 = vmatprep.subr.bf16.mxu0 %v5090
    %7726 = vmatpush1.bf16.msra.mxu0 %v5089
    %7727 = vmatprep.subr.bf16.mxu0 %v5098
    %7728 = vmatpush1.bf16.msra.mxu0 %v5097
    %7729 = vmatprep.subr.bf16.mxu0 %v5106
    %7730 = vmatpush1.bf16.msra.mxu0 %v5105
    %7731 = vmatprep.subr.bf16.mxu0 %v5114
    %7732 = vmatpush1.bf16.msra.mxu0 %v5113
    %7733 = vmatprep.subr.bf16.mxu0 %v5122
    %7734 = vmatpush1.bf16.msra.mxu0 %v5121
    %7735 = vmatprep.subr.bf16.mxu0 %v5130
    %7736 = vmatpush1.bf16.msra.mxu0 %v5129
    %7737 = vmatprep.subr.bf16.mxu0 %v5138
    %7738 = vmatpush1.bf16.msra.mxu0 %v5137
    %7739 = vmatprep.subr.bf16.mxu0 %v5146
    %7740 = vmatpush1.bf16.msra.mxu0 %v5145
    %7741 = vmatprep.subr.bf16.mxu0 %v5154
    %7742 = vmatpush1.bf16.msra.mxu0 %v5153
    %7743 = vmatprep.mubr.bf16.mxu0 %v370
    %7744 = vmatmul.mubr.bf16.gmra.mrb[0].mxu0 %v369
    %v7745 = vpop.f32.mrb[0].mxu0
    %v7746 = vadd.f32 %v7705, %v7745
    %v7747 = vpop.f32.mrb[0].mxu0
    %v7748 = vadd.f32 %v7707, %v7747
    %v7749 = vpop.f32.mrb[0].mxu0
    %v7750 = vpop.f32.mrb[0].mxu0
    %7751 = vdwg.mxu0
    %7752 = vmatprep.subr.bf16.mxu0 %v5162
    %7753 = vmatpush1.bf16.msra.mxu0 %v5161
    %7754 = vmatprep.subr.bf16.mxu0 %v5170
    %7755 = vmatpush1.bf16.msra.mxu0 %v5169
    %7756 = vmatprep.subr.bf16.mxu0 %v5178
    %7757 = vmatpush1.bf16.msra.mxu0 %v5177
    %7758 = vmatprep.subr.bf16.mxu0 %v5186
    %7759 = vmatpush1.bf16.msra.mxu0 %v5185
    %7760 = vmatprep.subr.bf16.mxu0 %v5194
    %7761 = vmatpush1.bf16.msra.mxu0 %v5193
    %7762 = vmatprep.subr.bf16.mxu0 %v5202
    %7763 = vmatpush1.bf16.msra.mxu0 %v5201
    %7764 = vmatprep.subr.bf16.mxu0 %v5210
    %7765 = vmatpush1.bf16.msra.mxu0 %v5209
    %7766 = vmatprep.subr.bf16.mxu0 %v5218
    %7767 = vmatpush1.bf16.msra.mxu0 %v5217
    %7768 = vmatprep.subr.bf16.mxu0 %v5226
    %7769 = vmatpush1.bf16.msra.mxu0 %v5225
    %7770 = vmatprep.subr.bf16.mxu0 %v5234
    %7771 = vmatpush1.bf16.msra.mxu0 %v5233
    %7772 = vmatprep.subr.bf16.mxu0 %v5242
    %7773 = vmatpush1.bf16.msra.mxu0 %v5241
    %7774 = vmatprep.subr.bf16.mxu0 %v5250
    %7775 = vmatpush1.bf16.msra.mxu0 %v5249
    %7776 = vmatprep.subr.bf16.mxu0 %v5258
    %7777 = vmatpush1.bf16.msra.mxu0 %v5257
    %7778 = vmatprep.subr.bf16.mxu0 %v5266
    %7779 = vmatpush1.bf16.msra.mxu0 %v5265
    %7780 = vmatprep.subr.bf16.mxu0 %v5274
    %7781 = vmatpush1.bf16.msra.mxu0 %v5273
    %7782 = vmatprep.subr.bf16.mxu0 %v5282
    %7783 = vmatpush1.bf16.msra.mxu0 %v5281
    %7784 = vmatprep.mubr.bf16.mxu0 %v372
    %7785 = vmatmul.mubr.bf16.gmra.mrb[0].mxu0 %v371
    %v7786 = vpop.f32.mrb[0].mxu0
    %v7787 = vadd.f32 %v7746, %v7786
    %v7788 = vpop.f32.mrb[0].mxu0
    %v7789 = vadd.f32 %v7748, %v7788
    %v7790 = vpop.f32.mrb[0].mxu0
    %v7791 = vpop.f32.mrb[0].mxu0
    %7792 = vdwg.mxu0
    %7793 = vmatprep.subr.bf16.mxu0 %v5290
    %7794 = vmatpush1.bf16.msra.mxu0 %v5289
    %7795 = vmatprep.subr.bf16.mxu0 %v5298
    %7796 = vmatpush1.bf16.msra.mxu0 %v5297
    %7797 = vmatprep.subr.bf16.mxu0 %v5306
    %7798 = vmatpush1.bf16.msra.mxu0 %v5305
    %7799 = vmatprep.subr.bf16.mxu0 %v5314
    %7800 = vmatpush1.bf16.msra.mxu0 %v5313
    %7801 = vmatprep.subr.bf16.mxu0 %v5322
    %7802 = vmatpush1.bf16.msra.mxu0 %v5321
    %7803 = vmatprep.subr.bf16.mxu0 %v5330
    %7804 = vmatpush1.bf16.msra.mxu0 %v5329
    %7805 = vmatprep.subr.bf16.mxu0 %v5338
    %7806 = vmatpush1.bf16.msra.mxu0 %v5337
    %7807 = vmatprep.subr.bf16.mxu0 %v5346
    %7808 = vmatpush1.bf16.msra.mxu0 %v5345
    %7809 = vmatprep.subr.bf16.mxu0 %v5354
    %7810 = vmatpush1.bf16.msra.mxu0 %v5353
    %7811 = vmatprep.subr.bf16.mxu0 %v5362
    %7812 = vmatpush1.bf16.msra.mxu0 %v5361
    %7813 = vmatprep.subr.bf16.mxu0 %v5370
    %7814 = vmatpush1.bf16.msra.mxu0 %v5369
    %7815 = vmatprep.subr.bf16.mxu0 %v5378
    %7816 = vmatpush1.bf16.msra.mxu0 %v5377
    %7817 = vmatprep.subr.bf16.mxu0 %v5386
    %7818 = vmatpush1.bf16.msra.mxu0 %v5385
    %7819 = vmatprep.subr.bf16.mxu0 %v5394
    %7820 = vmatpush1.bf16.msra.mxu0 %v5393
    %7821 = vmatprep.subr.bf16.mxu0 %v5402
    %7822 = vmatpush1.bf16.msra.mxu0 %v5401
    %7823 = vmatprep.subr.bf16.mxu0 %v5410
    %7824 = vmatpush1.bf16.msra.mxu0 %v5409
    %7825 = vmatprep.mubr.bf16.mxu0 %v374
    %7826 = vmatmul.mubr.bf16.gmra.mrb[0].mxu0 %v373
    %v7827 = vpop.f32.mrb[0].mxu0
    %v7828 = vadd.f32 %v7787, %v7827
    %v7829 = vpop.f32.mrb[0].mxu0
    %v7830 = vadd.f32 %v7789, %v7829
    %v7831 = vpop.f32.mrb[0].mxu0
    %v7832 = vpop.f32.mrb[0].mxu0
    %7833 = vdwg.mxu0
    %7834 = vmatprep.subr.bf16.mxu0 %v5418
    %7835 = vmatpush1.bf16.msra.mxu0 %v5417
    %7836 = vmatprep.subr.bf16.mxu0 %v5426
    %7837 = vmatpush1.bf16.msra.mxu0 %v5425
    %7838 = vmatprep.subr.bf16.mxu0 %v5434
    %7839 = vmatpush1.bf16.msra.mxu0 %v5433
    %7840 = vmatprep.subr.bf16.mxu0 %v5442
    %7841 = vmatpush1.bf16.msra.mxu0 %v5441
    %7842 = vmatprep.subr.bf16.mxu0 %v5450
    %7843 = vmatpush1.bf16.msra.mxu0 %v5449
    %7844 = vmatprep.subr.bf16.mxu0 %v5458
    %7845 = vmatpush1.bf16.msra.mxu0 %v5457
    %7846 = vmatprep.subr.bf16.mxu0 %v5466
    %7847 = vmatpush1.bf16.msra.mxu0 %v5465
    %7848 = vmatprep.subr.bf16.mxu0 %v5474
    %7849 = vmatpush1.bf16.msra.mxu0 %v5473
    %7850 = vmatprep.subr.bf16.mxu0 %v5482
    %7851 = vmatpush1.bf16.msra.mxu0 %v5481
    %7852 = vmatprep.subr.bf16.mxu0 %v5490
    %7853 = vmatpush1.bf16.msra.mxu0 %v5489
    %7854 = vmatprep.subr.bf16.mxu0 %v5498
    %7855 = vmatpush1.bf16.msra.mxu0 %v5497
    %7856 = vmatprep.subr.bf16.mxu0 %v5506
    %7857 = vmatpush1.bf16.msra.mxu0 %v5505
    %7858 = vmatprep.subr.bf16.mxu0 %v5514
    %7859 = vmatpush1.bf16.msra.mxu0 %v5513
    %7860 = vmatprep.subr.bf16.mxu0 %v5522
    %7861 = vmatpush1.bf16.msra.mxu0 %v5521
    %7862 = vmatprep.subr.bf16.mxu0 %v5530
    %7863 = vmatpush1.bf16.msra.mxu0 %v5529
    %7864 = vmatprep.subr.bf16.mxu0 %v5538
    %7865 = vmatpush1.bf16.msra.mxu0 %v5537
    %7866 = vmatprep.mubr.bf16.mxu0 %v376
    %7867 = vmatmul.mubr.bf16.gmra.mrb[0].mxu0 %v375
    %v7868 = vpop.f32.mrb[0].mxu0
    %v7869 = vadd.f32 %v7828, %v7868
    %v7870 = vpop.f32.mrb[0].mxu0
    %v7871 = vadd.f32 %v7830, %v7870
    %v7872 = vpop.f32.mrb[0].mxu0
    %v7873 = vpop.f32.mrb[0].mxu0
    %7874 = vdwg.mxu0
    %v7883 = vcombine.low %v6885, %v6887
    %v7884 = vcombine.low %v7213, %v7215
    %v7886 = vunpack.c.l.s4 1983009808
    %v7887 = vunpack.c.0.s8 %v7886
    %v7888 = vlaneseq
    %v7889 = vshrl.u32 %v7888, 7
    %v7890 = vsub.s32 %v7887, %v7889
    %v7891 = vrot.slane %v7883, %v7890
    %v7893 = vunpack.c.l.s4 1983009808
    %v7894 = vunpack.c.0.s8 %v7893
    %v7895 = vlaneseq
    %v7896 = vshrl.u32 %v7895, 7
    %v7897 = vsub.s32 %v7894, %v7896
    %v7898 = vrot.slane %v7884, %v7897
    %v7899 = vcombine.low %v7891, %v7898
    %v7900 = vcombine.low %v7541, %v7543
    %v7901 = vcombine.low %v7869, %v7871
    %v7903 = vunpack.c.l.s4 1983009808
    %v7904 = vunpack.c.0.s8 %v7903
    %v7905 = vlaneseq
    %v7906 = vshrl.u32 %v7905, 7
    %v7907 = vsub.s32 %v7904, %v7906
    %v7908 = vrot.slane %v7900, %v7907
    %v7910 = vunpack.c.l.s4 1983009808
    %v7911 = vunpack.c.0.s8 %v7910
    %v7912 = vlaneseq
    %v7913 = vshrl.u32 %v7912, 7
    %v7914 = vsub.s32 %v7911, %v7913
    %v7915 = vrot.slane %v7901, %v7914
    %v7916 = vcombine.low %v7908, %v7915
    %7919 = vst [vmem:[#allocation7] sm:$0xff] %v7899
    %7920 = vst [vmem:[#allocation7 + $0x8] sm:$0xff] %v7916
    // Predicated region
    $region26: #{crop_resize_branch.1} parent=1 // pred_check
      _
    $region27: #{crop_resize_branch.1} parent=1 // pred_check_branch
      %7922 = sbr.rel (0) target = $region29
    $region28: #{crop_resize_branch.1} parent=1 // pred_region
      %s7924 = ssub.s32 256, 256
      %7925 = vsyncadd [#allocation4], %s7924
      %s7927 = sshll.u32 [#allocation7], 4
      %s7928 = int_to_ptr.vmem [resolvable:$true] %s7927
      %7930 = dma.vmem_to_hbm [thread:$0]  %s7928, 256, %s4, [#allocation4]
    $region29: #{crop_resize_branch.1} parent=1 // pred_fallthru
      _
    // Predicated region
    $region30: #{crop_resize_branch.1} parent=1 // pred_check
      _
    $region31: #{crop_resize_branch.1} parent=1 // pred_check_branch
      %7932 = sbr.rel (0) target = $region33
    $region32: #{crop_resize_branch.1} parent=1 // pred_region
      %7933 = dma.done [#allocation4], 256
    $region33: #{crop_resize_branch.1} parent=1 // pred_fallthru
      _
    %7934 = vsyncpa [#allocation3], 1
    %7935 = vsyncpa [#allocation6], 1
    %7936 = vsyncpa [#allocation4], 1

</llo_original>
